<compile_context>
chip_gen: v5e
topology: v5e:2x2
jax: 0.10.0
libtpu: 0.0.40
codegen_flags: <defaults>
</compile_context>

<pallas_src>
import jax
import jax.numpy as jnp
from jax.experimental import pallas as pl
from jax.experimental.pallas import tpu as pltpu

# ---- model hyper-parameters (small, consistent with the module defaults) ----
DIM = 32                  # dim
NUM_HEADS = 4             # num_heads
HEAD_DIM = DIM // NUM_HEADS          # 8
MLP_HIDDEN = int(DIM * 4.0)          # mlp_ratio = 4.0 -> 128
NUM_TOKENS = 64           # patch tokens (num_tokens)
NUM_COMPRESSED = 16       # num_compressed_tokens
BATCH = 2
EPS = 1e-5                # torch.nn.LayerNorm default eps
SCALE = HEAD_DIM ** -0.5
DTYPE = jnp.float32
MXU_DTYPE = jnp.bfloat16  # matmul-operand dtype (f32 accumulation on the MXU)


# ----------------------------- in-kernel helpers -----------------------------
def _layernorm(x, gamma, beta):
    # x: (rows, C); gamma/beta: (1, C); biased variance (torch semantics), f32
    mean = jnp.mean(x, axis=-1, keepdims=True)
    var = jnp.mean((x - mean) ** 2, axis=-1, keepdims=True)
    return (x - mean) * jax.lax.rsqrt(var + EPS) * gamma + beta


def _gelu_exact(x):
    # exact (erf-based) GELU, matching torch.nn.GELU default
    return 0.5 * x * (1.0 + jax.lax.erf(x * 0.7071067811865475))


def _mm(a, b):
    # 2-D matmul: bf16 operands, f32 accumulation
    return jnp.dot(a.astype(MXU_DTYPE), b.astype(MXU_DTYPE),
                   preferred_element_type=jnp.float32)


def _bmm(eq, a, b):
    # 3-D batched matmul: bf16 operands, f32 accumulation
    return jnp.einsum(eq, a.astype(MXU_DTYPE), b.astype(MXU_DTYPE),
                      preferred_element_type=jnp.float32)


def _cross_block(ctx, qry, prm):
    """One CompBlock on in-VMEM values.

    ctx: (B, Nc, C) context -> keys/values; qry: (B, M, C) queries.
    """
    (n1g, n1b, wq_h, wk_h, wv_h, wproj_h, bproj,
     n2g, n2b, w1, b1, w2, b2) = prm
    B, Nc, C = ctx.shape
    M = qry.shape[1]
    H, D = NUM_HEADS, HEAD_DIM
    G = B * H

    # norm1 on the context, flattened over batch for full-tile VPU work
    xn = _layernorm(ctx.reshape(B * Nc, C), n1g, n1b).reshape(B, Nc, C)

    # head-batched projections: batch dim g = B*H, weights pre-split per head
    # (only leading-dim broadcasts/reshapes — no lane sub-slices, no transposes)
    def head_proj(x, w):
        T = x.shape[1]
        xg = jnp.broadcast_to(x[:, None], (B, H, T, C)).reshape(G, T, C)
        wg = jnp.broadcast_to(w[None], (B, H, C, D)).reshape(G, C, D)
        return _bmm('gtc,gcd->gtd', xg, wg)            # (G, T, D)

    qh = head_proj(qry, wq_h)                          # (G, M, D)
    kh = head_proj(xn, wk_h)                           # (G, Nc, D)
    vh = head_proj(xn, wv_h)                           # (G, Nc, D)

    # scaled dot-product attention, softmax in f32
    s = _bmm('gmd,gnd->gmn', qh, kh) * SCALE           # (G, M, Nc)
    s = s - jnp.max(s, axis=-1, keepdims=True)
    p = jnp.exp(s)
    p = p * pl.reciprocal(jnp.sum(p, axis=-1, keepdims=True), approx=True)
    o = _bmm('gmn,gnd->gmd', p, vh)                    # (G, M, D)

    # per-head output projection + reduce over heads (replaces lane-concat)
    wpg = jnp.broadcast_to(wproj_h[None], (B, H, D, C)).reshape(G, D, C)
    oc = _bmm('gmd,gdc->gmc', o, wpg).reshape(B, H, M, C)
    attn = oc[:, 0]
    for h in range(1, H):
        attn = attn + oc[:, h]
    attn = attn.reshape(B * M, C) + bproj              # (B*M, C)

    # residual 1 (LayerScale is identity: init_values=None)
    y = qry.reshape(B * M, C) + attn

    # MLP (norm2 -> fc1 -> GELU -> fc2) with residual 2, flattened over batch
    yn = _layernorm(y, n2g, n2b)
    h1 = _gelu_exact(_mm(yn, w1) + b1)                 # (B*M, 128)
    h2 = _mm(h1, w2) + b2                              # (B*M, C)
    return (y + h2).reshape(B, M, C)


# ------------------------------ fused kernel ----------------------------------
def compressor_kernel(x_ref, q_ref, ng_ref, nb_ref, *refs):
    o_ref = refs[-1]
    p1 = tuple(r[...] for r in refs[0:13])     # CompBlock 1 params
    p2 = tuple(r[...] for r in refs[13:26])    # CompBlock 2 params

    x = x_ref[...]                             # (B, 1+N, C)
    B, Np1, C = x.shape
    N = Np1 - 1
    M = NUM_COMPRESSED

    cls_tok = x[:, 0:1, :]                     # (B, 1, C) passthrough
    patches = x[:, 1:, :]                      # (B, N, C)

    # outer LayerNorm on the patch tokens (flattened over batch)
    xn = _layernorm(patches.reshape(B * N, C),
                    ng_ref[...], nb_ref[...]).reshape(B, N, C)

    # shared learned queries broadcast over batch (in VMEM, no HBM duplication)
    qry = jnp.broadcast_to(q_ref[...], (B, M, C))

    ct = _cross_block(xn, qry, p1)                       # (B, M, C)
    ctx2 = jnp.concatenate([xn, ct], axis=1)             # (B, N+M, C), in VMEM
    ct2 = _cross_block(ctx2, ct, p2)                     # (B, M, C)

    o_ref[...] = jnp.concatenate([cls_tok, ct2], axis=1).astype(o_ref.dtype)


# ----------------------------- parameter plumbing -----------------------------
def _prep_block(p):
    """Wrapper-side layout prep: split W_q/W_kv/W_proj per head, cast to bf16."""
    C, H, D = DIM, NUM_HEADS, HEAD_DIM
    wq_h = p["wq"].reshape(C, H, D).transpose(1, 0, 2)          # (H, C, D)
    wk_h = p["wkv"][:, :C].reshape(C, H, D).transpose(1, 0, 2)  # (H, C, D)
    wv_h = p["wkv"][:, C:].reshape(C, H, D).transpose(1, 0, 2)  # (H, C, D)
    wproj_h = p["wproj"].reshape(H, D, C)                       # (H, D, C)
    c = lambda a: a.astype(MXU_DTYPE)
    return (p["n1g"], p["n1b"],
            c(wq_h), c(wk_h), c(wv_h), c(wproj_h), p["bproj"],
            p["n2g"], p["n2b"],
            c(p["w1"]), p["b1"], c(p["w2"]), p["b2"])


def compressor_forward(x, params):
    # x: (B, 1 + NUM_TOKENS, C); num_register_tokens = 0
    B, Np1, C = x.shape
    args = (x, params["queries"], params["norm_g"], params["norm_b"],
            *_prep_block(params["block1"]), *_prep_block(params["block2"]))
    vmem = pl.BlockSpec(memory_space=pltpu.MemorySpace.VMEM)
    return pl.pallas_call(
        compressor_kernel,
        out_shape=jax.ShapeDtypeStruct((B, 1 + NUM_COMPRESSED, C), x.dtype),
        in_specs=[vmem] * len(args),
        out_specs=vmem,
    )(*args)


# ----------------------------- parameter creation -----------------------------
def init_block_params(key):
    ks = jax.random.split(key, 6)
    C, H = DIM, MLP_HIDDEN
    return {
        "n1g": jnp.ones((1, C), DTYPE),
        "n1b": jnp.zeros((1, C), DTYPE),
        "wq": 0.02 * jax.random.normal(ks[0], (C, C), DTYPE),
        "wkv": 0.02 * jax.random.normal(ks[1], (C, 2 * C), DTYPE),
        "wproj": 0.02 * jax.random.normal(ks[2], (C, C), DTYPE),
        "bproj": jnp.zeros((1, C), DTYPE),
        "n2g": jnp.ones((1, C), DTYPE),
        "n2b": jnp.zeros((1, C), DTYPE),
        "w1": 0.02 * jax.random.normal(ks[3], (C, H), DTYPE),
        "b1": jnp.zeros((1, H), DTYPE),
        "w2": 0.02 * jax.random.normal(ks[4], (H, C), DTYPE),
        "b2": jnp.zeros((1, C), DTYPE),
    }


def init_params(key):
    k_q, k_b1, k_b2 = jax.random.split(key, 3)
    return {
        "norm_g": jnp.ones((1, DIM), DTYPE),
        "norm_b": jnp.zeros((1, DIM), DTYPE),
        "queries": jax.random.normal(k_q, (1, NUM_COMPRESSED, DIM), DTYPE),
        "block1": init_block_params(k_b1),
        "block2": init_block_params(k_b2),
    }


if __name__ == "__main__":
    key = jax.random.PRNGKey(0)
    k_x, k_p = jax.random.split(key)
    x = jax.random.normal(k_x, (BATCH, 1 + NUM_TOKENS, DIM), DTYPE)
    params = init_params(k_p)

    out = jax.jit(compressor_forward)(x, params)
    out = jax.block_until_ready(out)
    assert out.shape == (BATCH, 1 + NUM_COMPRESSED, DIM), out.shape
    assert jnp.all(jnp.isfinite(out))
    print("KERNEL_OK")
</pallas_src>

<mosaic_0001>
module attributes {stable_mosaic.version = 11 : i64} {
  func.func @compressor_kernel(%arg0: memref<2x65x32xf32, #tpu.memory_space<vmem>>, %arg1: memref<1x16x32xf32, #tpu.memory_space<vmem>>, %arg2: memref<1x32xf32, #tpu.memory_space<vmem>>, %arg3: memref<1x32xf32, #tpu.memory_space<vmem>>, %arg4: memref<1x32xf32, #tpu.memory_space<vmem>>, %arg5: memref<1x32xf32, #tpu.memory_space<vmem>>, %arg6: memref<4x32x8xbf16, #tpu.memory_space<vmem>>, %arg7: memref<4x32x8xbf16, #tpu.memory_space<vmem>>, %arg8: memref<4x32x8xbf16, #tpu.memory_space<vmem>>, %arg9: memref<4x8x32xbf16, #tpu.memory_space<vmem>>, %arg10: memref<1x32xf32, #tpu.memory_space<vmem>>, %arg11: memref<1x32xf32, #tpu.memory_space<vmem>>, %arg12: memref<1x32xf32, #tpu.memory_space<vmem>>, %arg13: memref<32x128xbf16, #tpu.memory_space<vmem>>, %arg14: memref<1x128xf32, #tpu.memory_space<vmem>>, %arg15: memref<128x32xbf16, #tpu.memory_space<vmem>>, %arg16: memref<1x32xf32, #tpu.memory_space<vmem>>, %arg17: memref<1x32xf32, #tpu.memory_space<vmem>>, %arg18: memref<1x32xf32, #tpu.memory_space<vmem>>, %arg19: memref<4x32x8xbf16, #tpu.memory_space<vmem>>, %arg20: memref<4x32x8xbf16, #tpu.memory_space<vmem>>, %arg21: memref<4x32x8xbf16, #tpu.memory_space<vmem>>, %arg22: memref<4x8x32xbf16, #tpu.memory_space<vmem>>, %arg23: memref<1x32xf32, #tpu.memory_space<vmem>>, %arg24: memref<1x32xf32, #tpu.memory_space<vmem>>, %arg25: memref<1x32xf32, #tpu.memory_space<vmem>>, %arg26: memref<32x128xbf16, #tpu.memory_space<vmem>>, %arg27: memref<1x128xf32, #tpu.memory_space<vmem>>, %arg28: memref<128x32xbf16, #tpu.memory_space<vmem>>, %arg29: memref<1x32xf32, #tpu.memory_space<vmem>>, %arg30: memref<2x17x32xf32, #tpu.memory_space<vmem>>) attributes {dimension_semantics = [], scalar_prefetch = 0 : i64, scratch_operands = 0 : i64, tpu.core_type = #tpu.core_type<tc>} {
    %c0 = arith.constant 0 : index
    %c0_0 = arith.constant 0 : index
    %0 = vector.load %arg4[%c0, %c0_0] : memref<1x32xf32, #tpu.memory_space<vmem>>, vector<1x32xf32>
    %c0_1 = arith.constant 0 : index
    %c0_2 = arith.constant 0 : index
    %1 = vector.load %arg5[%c0_1, %c0_2] : memref<1x32xf32, #tpu.memory_space<vmem>>, vector<1x32xf32>
    %c0_3 = arith.constant 0 : index
    %c0_4 = arith.constant 0 : index
    %c0_5 = arith.constant 0 : index
    %2 = vector.load %arg6[%c0_3, %c0_4, %c0_5] : memref<4x32x8xbf16, #tpu.memory_space<vmem>>, vector<4x32x8xbf16>
    %c0_6 = arith.constant 0 : index
    %c0_7 = arith.constant 0 : index
    %c0_8 = arith.constant 0 : index
    %3 = vector.load %arg7[%c0_6, %c0_7, %c0_8] : memref<4x32x8xbf16, #tpu.memory_space<vmem>>, vector<4x32x8xbf16>
    %c0_9 = arith.constant 0 : index
    %c0_10 = arith.constant 0 : index
    %c0_11 = arith.constant 0 : index
    %4 = vector.load %arg8[%c0_9, %c0_10, %c0_11] : memref<4x32x8xbf16, #tpu.memory_space<vmem>>, vector<4x32x8xbf16>
    %c0_12 = arith.constant 0 : index
    %c0_13 = arith.constant 0 : index
    %c0_14 = arith.constant 0 : index
    %5 = vector.load %arg9[%c0_12, %c0_13, %c0_14] : memref<4x8x32xbf16, #tpu.memory_space<vmem>>, vector<4x8x32xbf16>
    %c0_15 = arith.constant 0 : index
    %c0_16 = arith.constant 0 : index
    %6 = vector.load %arg10[%c0_15, %c0_16] : memref<1x32xf32, #tpu.memory_space<vmem>>, vector<1x32xf32>
    %c0_17 = arith.constant 0 : index
    %c0_18 = arith.constant 0 : index
    %7 = vector.load %arg11[%c0_17, %c0_18] : memref<1x32xf32, #tpu.memory_space<vmem>>, vector<1x32xf32>
    %c0_19 = arith.constant 0 : index
    %c0_20 = arith.constant 0 : index
    %8 = vector.load %arg12[%c0_19, %c0_20] : memref<1x32xf32, #tpu.memory_space<vmem>>, vector<1x32xf32>
    %c0_21 = arith.constant 0 : index
    %c0_22 = arith.constant 0 : index
    %9 = vector.load %arg13[%c0_21, %c0_22] : memref<32x128xbf16, #tpu.memory_space<vmem>>, vector<32x128xbf16>
    %c0_23 = arith.constant 0 : index
    %c0_24 = arith.constant 0 : index
    %10 = vector.load %arg14[%c0_23, %c0_24] : memref<1x128xf32, #tpu.memory_space<vmem>>, vector<1x128xf32>
    %c0_25 = arith.constant 0 : index
    %c0_26 = arith.constant 0 : index
    %11 = vector.load %arg15[%c0_25, %c0_26] : memref<128x32xbf16, #tpu.memory_space<vmem>>, vector<128x32xbf16>
    %c0_27 = arith.constant 0 : index
    %c0_28 = arith.constant 0 : index
    %12 = vector.load %arg16[%c0_27, %c0_28] : memref<1x32xf32, #tpu.memory_space<vmem>>, vector<1x32xf32>
    %c0_29 = arith.constant 0 : index
    %c0_30 = arith.constant 0 : index
    %13 = vector.load %arg17[%c0_29, %c0_30] : memref<1x32xf32, #tpu.memory_space<vmem>>, vector<1x32xf32>
    %c0_31 = arith.constant 0 : index
    %c0_32 = arith.constant 0 : index
    %14 = vector.load %arg18[%c0_31, %c0_32] : memref<1x32xf32, #tpu.memory_space<vmem>>, vector<1x32xf32>
    %c0_33 = arith.constant 0 : index
    %c0_34 = arith.constant 0 : index
    %c0_35 = arith.constant 0 : index
    %15 = vector.load %arg19[%c0_33, %c0_34, %c0_35] : memref<4x32x8xbf16, #tpu.memory_space<vmem>>, vector<4x32x8xbf16>
    %c0_36 = arith.constant 0 : index
    %c0_37 = arith.constant 0 : index
    %c0_38 = arith.constant 0 : index
    %16 = vector.load %arg20[%c0_36, %c0_37, %c0_38] : memref<4x32x8xbf16, #tpu.memory_space<vmem>>, vector<4x32x8xbf16>
    %c0_39 = arith.constant 0 : index
    %c0_40 = arith.constant 0 : index
    %c0_41 = arith.constant 0 : index
    %17 = vector.load %arg21[%c0_39, %c0_40, %c0_41] : memref<4x32x8xbf16, #tpu.memory_space<vmem>>, vector<4x32x8xbf16>
    %c0_42 = arith.constant 0 : index
    %c0_43 = arith.constant 0 : index
    %c0_44 = arith.constant 0 : index
    %18 = vector.load %arg22[%c0_42, %c0_43, %c0_44] : memref<4x8x32xbf16, #tpu.memory_space<vmem>>, vector<4x8x32xbf16>
    %c0_45 = arith.constant 0 : index
    %c0_46 = arith.constant 0 : index
    %19 = vector.load %arg23[%c0_45, %c0_46] : memref<1x32xf32, #tpu.memory_space<vmem>>, vector<1x32xf32>
    %c0_47 = arith.constant 0 : index
    %c0_48 = arith.constant 0 : index
    %20 = vector.load %arg24[%c0_47, %c0_48] : memref<1x32xf32, #tpu.memory_space<vmem>>, vector<1x32xf32>
    %c0_49 = arith.constant 0 : index
    %c0_50 = arith.constant 0 : index
    %21 = vector.load %arg25[%c0_49, %c0_50] : memref<1x32xf32, #tpu.memory_space<vmem>>, vector<1x32xf32>
    %c0_51 = arith.constant 0 : index
    %c0_52 = arith.constant 0 : index
    %22 = vector.load %arg26[%c0_51, %c0_52] : memref<32x128xbf16, #tpu.memory_space<vmem>>, vector<32x128xbf16>
    %c0_53 = arith.constant 0 : index
    %c0_54 = arith.constant 0 : index
    %23 = vector.load %arg27[%c0_53, %c0_54] : memref<1x128xf32, #tpu.memory_space<vmem>>, vector<1x128xf32>
    %c0_55 = arith.constant 0 : index
    %c0_56 = arith.constant 0 : index
    %24 = vector.load %arg28[%c0_55, %c0_56] : memref<128x32xbf16, #tpu.memory_space<vmem>>, vector<128x32xbf16>
    %c0_57 = arith.constant 0 : index
    %c0_58 = arith.constant 0 : index
    %25 = vector.load %arg29[%c0_57, %c0_58] : memref<1x32xf32, #tpu.memory_space<vmem>>, vector<1x32xf32>
    %c0_59 = arith.constant 0 : index
    %c0_60 = arith.constant 0 : index
    %c0_61 = arith.constant 0 : index
    %26 = vector.load %arg0[%c0_59, %c0_60, %c0_61] : memref<2x65x32xf32, #tpu.memory_space<vmem>>, vector<2x65x32xf32>
    %27 = vector.extract_strided_slice %26 {offsets = [0, 0, 0], sizes = [2, 1, 32], strides = [1, 1, 1]} : vector<2x65x32xf32> to vector<2x1x32xf32>
    %28 = vector.extract_strided_slice %26 {offsets = [0, 1, 0], sizes = [2, 64, 32], strides = [1, 1, 1]} : vector<2x65x32xf32> to vector<2x64x32xf32>
    %29 = vector.shape_cast %28 : vector<2x64x32xf32> to vector<128x32xf32>
    %c0_62 = arith.constant 0 : index
    %c0_63 = arith.constant 0 : index
    %30 = vector.load %arg2[%c0_62, %c0_63] : memref<1x32xf32, #tpu.memory_space<vmem>>, vector<1x32xf32>
    %c0_64 = arith.constant 0 : index
    %c0_65 = arith.constant 0 : index
    %31 = vector.load %arg3[%c0_64, %c0_65] : memref<1x32xf32, #tpu.memory_space<vmem>>, vector<1x32xf32>
    %cst = arith.constant dense<0.000000e+00> : vector<128xf32>
    %32 = vector.multi_reduction <add>, %29, %cst [1] : vector<128x32xf32> to vector<128xf32>
    %33 = vector.shape_cast %32 : vector<128xf32> to vector<128x1xf32>
    %cst_66 = arith.constant 3.200000e+01 : f32
    %34 = vector.broadcast %cst_66 : f32 to vector<128x1xf32>
    %35 = arith.divf %33, %34 : vector<128x1xf32>
    %36 = vector.broadcast %35 : vector<128x1xf32> to vector<128x32xf32>
    %37 = arith.subf %29, %36 : vector<128x32xf32>
    %38 = arith.mulf %37, %37 : vector<128x32xf32>
    %cst_67 = arith.constant dense<0.000000e+00> : vector<128xf32>
    %39 = vector.multi_reduction <add>, %38, %cst_67 [1] : vector<128x32xf32> to vector<128xf32>
    %40 = vector.shape_cast %39 : vector<128xf32> to vector<128x1xf32>
    %cst_68 = arith.constant 3.200000e+01 : f32
    %41 = vector.broadcast %cst_68 : f32 to vector<128x1xf32>
    %42 = arith.divf %40, %41 : vector<128x1xf32>
    %43 = vector.broadcast %35 : vector<128x1xf32> to vector<128x32xf32>
    %44 = arith.subf %29, %43 : vector<128x32xf32>
    %cst_69 = arith.constant 9.99999974E-6 : f32
    %45 = vector.broadcast %cst_69 : f32 to vector<128x1xf32>
    %46 = arith.addf %42, %45 : vector<128x1xf32>
    %47 = math.rsqrt %46 : vector<128x1xf32>
    %48 = vector.broadcast %47 : vector<128x1xf32> to vector<128x32xf32>
    %49 = arith.mulf %44, %48 : vector<128x32xf32>
    %50 = vector.broadcast %30 : vector<1x32xf32> to vector<128x32xf32>
    %51 = arith.mulf %49, %50 : vector<128x32xf32>
    %52 = vector.broadcast %31 : vector<1x32xf32> to vector<128x32xf32>
    %53 = arith.addf %51, %52 : vector<128x32xf32>
    %54 = vector.shape_cast %53 : vector<128x32xf32> to vector<2x64x32xf32>
    %c0_70 = arith.constant 0 : index
    %c0_71 = arith.constant 0 : index
    %c0_72 = arith.constant 0 : index
    %55 = vector.load %arg1[%c0_70, %c0_71, %c0_72] : memref<1x16x32xf32, #tpu.memory_space<vmem>>, vector<1x16x32xf32>
    %56 = vector.shape_cast %55 : vector<1x16x32xf32> to vector<1x16x32xf32>
    %57 = vector.broadcast %56 : vector<1x16x32xf32> to vector<2x16x32xf32>
    %58 = vector.shape_cast %54 : vector<2x64x32xf32> to vector<128x32xf32>
    %cst_73 = arith.constant dense<0.000000e+00> : vector<128xf32>
    %59 = vector.multi_reduction <add>, %58, %cst_73 [1] : vector<128x32xf32> to vector<128xf32>
    %60 = vector.shape_cast %59 : vector<128xf32> to vector<128x1xf32>
    %cst_74 = arith.constant 3.200000e+01 : f32
    %61 = vector.broadcast %cst_74 : f32 to vector<128x1xf32>
    %62 = arith.divf %60, %61 : vector<128x1xf32>
    %63 = vector.broadcast %62 : vector<128x1xf32> to vector<128x32xf32>
    %64 = arith.subf %58, %63 : vector<128x32xf32>
    %65 = arith.mulf %64, %64 : vector<128x32xf32>
    %cst_75 = arith.constant dense<0.000000e+00> : vector<128xf32>
    %66 = vector.multi_reduction <add>, %65, %cst_75 [1] : vector<128x32xf32> to vector<128xf32>
    %67 = vector.shape_cast %66 : vector<128xf32> to vector<128x1xf32>
    %cst_76 = arith.constant 3.200000e+01 : f32
    %68 = vector.broadcast %cst_76 : f32 to vector<128x1xf32>
    %69 = arith.divf %67, %68 : vector<128x1xf32>
    %70 = vector.broadcast %62 : vector<128x1xf32> to vector<128x32xf32>
    %71 = arith.subf %58, %70 : vector<128x32xf32>
    %cst_77 = arith.constant 9.99999974E-6 : f32
    %72 = vector.broadcast %cst_77 : f32 to vector<128x1xf32>
    %73 = arith.addf %69, %72 : vector<128x1xf32>
    %74 = math.rsqrt %73 : vector<128x1xf32>
    %75 = vector.broadcast %74 : vector<128x1xf32> to vector<128x32xf32>
    %76 = arith.mulf %71, %75 : vector<128x32xf32>
    %77 = vector.broadcast %0 : vector<1x32xf32> to vector<128x32xf32>
    %78 = arith.mulf %76, %77 : vector<128x32xf32>
    %79 = vector.broadcast %1 : vector<1x32xf32> to vector<128x32xf32>
    %80 = arith.addf %78, %79 : vector<128x32xf32>
    %81 = vector.shape_cast %80 : vector<128x32xf32> to vector<2x64x32xf32>
    %82 = vector.shape_cast %57 : vector<2x16x32xf32> to vector<2x1x16x32xf32>
    %83 = vector.shape_cast %82 : vector<2x1x16x32xf32> to vector<2x1x16x32xf32>
    %84 = vector.broadcast %83 : vector<2x1x16x32xf32> to vector<2x4x16x32xf32>
    %85 = vector.shape_cast %84 : vector<2x4x16x32xf32> to vector<8x16x32xf32>
    %86 = vector.shape_cast %2 : vector<4x32x8xbf16> to vector<1x4x32x8xbf16>
    %87 = vector.shape_cast %86 : vector<1x4x32x8xbf16> to vector<1x4x32x8xbf16>
    %88 = vector.broadcast %87 : vector<1x4x32x8xbf16> to vector<2x4x32x8xbf16>
    %89 = vector.shape_cast %88 : vector<2x4x32x8xbf16> to vector<8x32x8xbf16>
    %90 = arith.truncf %85 : vector<8x16x32xf32> to vector<8x16x32xbf16>
    "tpu.trace_start"() <{level = 10 : i32, message = "gtc,gcd->gtd"}> : () -> ()
    %cst_78 = arith.constant dense<0.000000e+00> : vector<8x16x8xf32>
    %91 = tpu.matmul %90, %89, %cst_78 {dimension_numbers = #tpu.dot_dimension_numbers<[2], [1], [1], [2], [0, 0, 0, 1, 1, 2], [0], [0]>} : vector<8x16x32xbf16>, vector<8x32x8xbf16>, vector<8x16x8xf32> -> vector<8x16x8xf32>
    "tpu.trace_stop"() : () -> ()
    %92 = vector.shape_cast %81 : vector<2x64x32xf32> to vector<2x1x64x32xf32>
    %93 = vector.shape_cast %92 : vector<2x1x64x32xf32> to vector<2x1x64x32xf32>
    %94 = vector.broadcast %93 : vector<2x1x64x32xf32> to vector<2x4x64x32xf32>
    %95 = vector.shape_cast %94 : vector<2x4x64x32xf32> to vector<8x64x32xf32>
    %96 = vector.shape_cast %3 : vector<4x32x8xbf16> to vector<1x4x32x8xbf16>
    %97 = vector.shape_cast %96 : vector<1x4x32x8xbf16> to vector<1x4x32x8xbf16>
    %98 = vector.broadcast %97 : vector<1x4x32x8xbf16> to vector<2x4x32x8xbf16>
    %99 = vector.shape_cast %98 : vector<2x4x32x8xbf16> to vector<8x32x8xbf16>
    %100 = arith.truncf %95 : vector<8x64x32xf32> to vector<8x64x32xbf16>
    "tpu.trace_start"() <{level = 10 : i32, message = "gtc,gcd->gtd"}> : () -> ()
    %cst_79 = arith.constant dense<0.000000e+00> : vector<8x64x8xf32>
    %101 = tpu.matmul %100, %99, %cst_79 {dimension_numbers = #tpu.dot_dimension_numbers<[2], [1], [1], [2], [0, 0, 0, 1, 1, 2], [0], [0]>} : vector<8x64x32xbf16>, vector<8x32x8xbf16>, vector<8x64x8xf32> -> vector<8x64x8xf32>
    "tpu.trace_stop"() : () -> ()
    %102 = vector.shape_cast %81 : vector<2x64x32xf32> to vector<2x1x64x32xf32>
    %103 = vector.shape_cast %102 : vector<2x1x64x32xf32> to vector<2x1x64x32xf32>
    %104 = vector.broadcast %103 : vector<2x1x64x32xf32> to vector<2x4x64x32xf32>
    %105 = vector.shape_cast %104 : vector<2x4x64x32xf32> to vector<8x64x32xf32>
    %106 = vector.shape_cast %4 : vector<4x32x8xbf16> to vector<1x4x32x8xbf16>
    %107 = vector.shape_cast %106 : vector<1x4x32x8xbf16> to vector<1x4x32x8xbf16>
    %108 = vector.broadcast %107 : vector<1x4x32x8xbf16> to vector<2x4x32x8xbf16>
    %109 = vector.shape_cast %108 : vector<2x4x32x8xbf16> to vector<8x32x8xbf16>
    %110 = arith.truncf %105 : vector<8x64x32xf32> to vector<8x64x32xbf16>
    "tpu.trace_start"() <{level = 10 : i32, message = "gtc,gcd->gtd"}> : () -> ()
    %cst_80 = arith.constant dense<0.000000e+00> : vector<8x64x8xf32>
    %111 = tpu.matmul %110, %109, %cst_80 {dimension_numbers = #tpu.dot_dimension_numbers<[2], [1], [1], [2], [0, 0, 0, 1, 1, 2], [0], [0]>} : vector<8x64x32xbf16>, vector<8x32x8xbf16>, vector<8x64x8xf32> -> vector<8x64x8xf32>
    "tpu.trace_stop"() : () -> ()
    %112 = arith.truncf %91 : vector<8x16x8xf32> to vector<8x16x8xbf16>
    %113 = arith.truncf %101 : vector<8x64x8xf32> to vector<8x64x8xbf16>
    "tpu.trace_start"() <{level = 10 : i32, message = "gmd,gnd->gmn"}> : () -> ()
    %cst_81 = arith.constant dense<0.000000e+00> : vector<8x16x64xf32>
    %114 = tpu.matmul %112, %113, %cst_81 {dimension_numbers = #tpu.dot_dimension_numbers<[2], [2], [1], [1], [0, 0, 0, 1, 1, 1], [0], [0]>} : vector<8x16x8xbf16>, vector<8x64x8xbf16>, vector<8x16x64xf32> -> vector<8x16x64xf32>
    "tpu.trace_stop"() : () -> ()
    %cst_82 = arith.constant 0.353553385 : f32
    %115 = vector.broadcast %cst_82 : f32 to vector<8x16x64xf32>
    %116 = arith.mulf %114, %115 : vector<8x16x64xf32>
    %cst_83 = arith.constant dense<0xFF800000> : vector<8x16xf32>
    %117 = vector.multi_reduction <maximumf>, %116, %cst_83 [2] : vector<8x16x64xf32> to vector<8x16xf32>
    %118 = vector.shape_cast %117 : vector<8x16xf32> to vector<8x16x1xf32>
    %119 = vector.broadcast %118 : vector<8x16x1xf32> to vector<8x16x64xf32>
    %120 = arith.subf %116, %119 : vector<8x16x64xf32>
    %121 = math.exp %120 : vector<8x16x64xf32>
    %cst_84 = arith.constant dense<0.000000e+00> : vector<8x16xf32>
    %122 = vector.multi_reduction <add>, %121, %cst_84 [2] : vector<8x16x64xf32> to vector<8x16xf32>
    %123 = vector.shape_cast %122 : vector<8x16xf32> to vector<8x16x1xf32>
    %124 = tpu.reciprocal %123 {approx = true} : vector<8x16x1xf32> -> vector<8x16x1xf32>
    %125 = vector.broadcast %124 : vector<8x16x1xf32> to vector<8x16x64xf32>
    %126 = arith.mulf %121, %125 : vector<8x16x64xf32>
    %127 = arith.truncf %126 : vector<8x16x64xf32> to vector<8x16x64xbf16>
    %128 = arith.truncf %111 : vector<8x64x8xf32> to vector<8x64x8xbf16>
    "tpu.trace_start"() <{level = 10 : i32, message = "gmn,gnd->gmd"}> : () -> ()
    %cst_85 = arith.constant dense<0.000000e+00> : vector<8x16x8xf32>
    %129 = tpu.matmul %127, %128, %cst_85 {dimension_numbers = #tpu.dot_dimension_numbers<[2], [1], [1], [2], [0, 0, 0, 1, 1, 2], [0], [0]>} : vector<8x16x64xbf16>, vector<8x64x8xbf16>, vector<8x16x8xf32> -> vector<8x16x8xf32>
    "tpu.trace_stop"() : () -> ()
    %130 = vector.shape_cast %5 : vector<4x8x32xbf16> to vector<1x4x8x32xbf16>
    %131 = vector.shape_cast %130 : vector<1x4x8x32xbf16> to vector<1x4x8x32xbf16>
    %132 = vector.broadcast %131 : vector<1x4x8x32xbf16> to vector<2x4x8x32xbf16>
    %133 = vector.shape_cast %132 : vector<2x4x8x32xbf16> to vector<8x8x32xbf16>
    %134 = arith.truncf %129 : vector<8x16x8xf32> to vector<8x16x8xbf16>
    "tpu.trace_start"() <{level = 10 : i32, message = "gmd,gdc->gmc"}> : () -> ()
    %cst_86 = arith.constant dense<0.000000e+00> : vector<8x16x32xf32>
    %135 = tpu.matmul %134, %133, %cst_86 {dimension_numbers = #tpu.dot_dimension_numbers<[2], [1], [1], [2], [0, 0, 0, 1, 1, 2], [0], [0]>} : vector<8x16x8xbf16>, vector<8x8x32xbf16>, vector<8x16x32xf32> -> vector<8x16x32xf32>
    "tpu.trace_stop"() : () -> ()
    %136 = vector.shape_cast %135 : vector<8x16x32xf32> to vector<2x4x16x32xf32>
    %137 = vector.extract_strided_slice %136 {offsets = [0, 0, 0, 0], sizes = [2, 1, 16, 32], strides = [1, 1, 1, 1]} : vector<2x4x16x32xf32> to vector<2x1x16x32xf32>
    %138 = vector.shape_cast %137 : vector<2x1x16x32xf32> to vector<2x16x32xf32>
    %139 = vector.extract_strided_slice %136 {offsets = [0, 1, 0, 0], sizes = [2, 1, 16, 32], strides = [1, 1, 1, 1]} : vector<2x4x16x32xf32> to vector<2x1x16x32xf32>
    %140 = vector.shape_cast %139 : vector<2x1x16x32xf32> to vector<2x16x32xf32>
    %141 = arith.addf %138, %140 : vector<2x16x32xf32>
    %142 = vector.extract_strided_slice %136 {offsets = [0, 2, 0, 0], sizes = [2, 1, 16, 32], strides = [1, 1, 1, 1]} : vector<2x4x16x32xf32> to vector<2x1x16x32xf32>
    %143 = vector.shape_cast %142 : vector<2x1x16x32xf32> to vector<2x16x32xf32>
    %144 = arith.addf %141, %143 : vector<2x16x32xf32>
    %145 = vector.extract_strided_slice %136 {offsets = [0, 3, 0, 0], sizes = [2, 1, 16, 32], strides = [1, 1, 1, 1]} : vector<2x4x16x32xf32> to vector<2x1x16x32xf32>
    %146 = vector.shape_cast %145 : vector<2x1x16x32xf32> to vector<2x16x32xf32>
    %147 = arith.addf %144, %146 : vector<2x16x32xf32>
    %148 = vector.shape_cast %147 : vector<2x16x32xf32> to vector<32x32xf32>
    %149 = vector.broadcast %6 : vector<1x32xf32> to vector<32x32xf32>
    %150 = arith.addf %148, %149 : vector<32x32xf32>
    %151 = vector.shape_cast %57 : vector<2x16x32xf32> to vector<32x32xf32>
    %152 = arith.addf %151, %150 : vector<32x32xf32>
    %cst_87 = arith.constant dense<0.000000e+00> : vector<32xf32>
    %153 = vector.multi_reduction <add>, %152, %cst_87 [1] : vector<32x32xf32> to vector<32xf32>
    %154 = vector.shape_cast %153 : vector<32xf32> to vector<32x1xf32>
    %cst_88 = arith.constant 3.200000e+01 : f32
    %155 = vector.broadcast %cst_88 : f32 to vector<32x1xf32>
    %156 = arith.divf %154, %155 : vector<32x1xf32>
    %157 = vector.broadcast %156 : vector<32x1xf32> to vector<32x32xf32>
    %158 = arith.subf %152, %157 : vector<32x32xf32>
    %159 = arith.mulf %158, %158 : vector<32x32xf32>
    %cst_89 = arith.constant dense<0.000000e+00> : vector<32xf32>
    %160 = vector.multi_reduction <add>, %159, %cst_89 [1] : vector<32x32xf32> to vector<32xf32>
    %161 = vector.shape_cast %160 : vector<32xf32> to vector<32x1xf32>
    %cst_90 = arith.constant 3.200000e+01 : f32
    %162 = vector.broadcast %cst_90 : f32 to vector<32x1xf32>
    %163 = arith.divf %161, %162 : vector<32x1xf32>
    %164 = vector.broadcast %156 : vector<32x1xf32> to vector<32x32xf32>
    %165 = arith.subf %152, %164 : vector<32x32xf32>
    %cst_91 = arith.constant 9.99999974E-6 : f32
    %166 = vector.broadcast %cst_91 : f32 to vector<32x1xf32>
    %167 = arith.addf %163, %166 : vector<32x1xf32>
    %168 = math.rsqrt %167 : vector<32x1xf32>
    %169 = vector.broadcast %168 : vector<32x1xf32> to vector<32x32xf32>
    %170 = arith.mulf %165, %169 : vector<32x32xf32>
    %171 = vector.broadcast %7 : vector<1x32xf32> to vector<32x32xf32>
    %172 = arith.mulf %170, %171 : vector<32x32xf32>
    %173 = vector.broadcast %8 : vector<1x32xf32> to vector<32x32xf32>
    %174 = arith.addf %172, %173 : vector<32x32xf32>
    %175 = arith.truncf %174 : vector<32x32xf32> to vector<32x32xbf16>
    %cst_92 = arith.constant dense<0.000000e+00> : vector<32x128xf32>
    %176 = tpu.matmul %175, %9, %cst_92 {dimension_numbers = #tpu.dot_dimension_numbers<[1], [0], [0], [1], [0, 0, 1, 1], [], []>} : vector<32x32xbf16>, vector<32x128xbf16>, vector<32x128xf32> -> vector<32x128xf32>
    %177 = vector.broadcast %10 : vector<1x128xf32> to vector<32x128xf32>
    %178 = arith.addf %176, %177 : vector<32x128xf32>
    %cst_93 = arith.constant 5.000000e-01 : f32
    %179 = vector.broadcast %cst_93 : f32 to vector<32x128xf32>
    %180 = arith.mulf %179, %178 : vector<32x128xf32>
    %cst_94 = arith.constant 0.707106769 : f32
    %181 = vector.broadcast %cst_94 : f32 to vector<32x128xf32>
    %182 = arith.mulf %178, %181 : vector<32x128xf32>
    %183 = math.erf %182 : vector<32x128xf32>
    %cst_95 = arith.constant 1.000000e+00 : f32
    %184 = vector.broadcast %cst_95 : f32 to vector<32x128xf32>
    %185 = arith.addf %184, %183 : vector<32x128xf32>
    %186 = arith.mulf %180, %185 : vector<32x128xf32>
    %187 = arith.truncf %186 : vector<32x128xf32> to vector<32x128xbf16>
    %cst_96 = arith.constant dense<0.000000e+00> : vector<32x32xf32>
    %188 = tpu.matmul %187, %11, %cst_96 {dimension_numbers = #tpu.dot_dimension_numbers<[1], [0], [0], [1], [0, 0, 1, 1], [], []>} : vector<32x128xbf16>, vector<128x32xbf16>, vector<32x32xf32> -> vector<32x32xf32>
    %189 = vector.broadcast %12 : vector<1x32xf32> to vector<32x32xf32>
    %190 = arith.addf %188, %189 : vector<32x32xf32>
    %191 = arith.addf %152, %190 : vector<32x32xf32>
    %192 = vector.shape_cast %191 : vector<32x32xf32> to vector<2x16x32xf32>
    %193 = tpu.concatenate %54, %192 in 1 : vector<2x64x32xf32>, vector<2x16x32xf32> -> vector<2x80x32xf32>
    %194 = vector.shape_cast %193 : vector<2x80x32xf32> to vector<160x32xf32>
    %cst_97 = arith.constant dense<0.000000e+00> : vector<160xf32>
    %195 = vector.multi_reduction <add>, %194, %cst_97 [1] : vector<160x32xf32> to vector<160xf32>
    %196 = vector.shape_cast %195 : vector<160xf32> to vector<160x1xf32>
    %cst_98 = arith.constant 3.200000e+01 : f32
    %197 = vector.broadcast %cst_98 : f32 to vector<160x1xf32>
    %198 = arith.divf %196, %197 : vector<160x1xf32>
    %199 = vector.broadcast %198 : vector<160x1xf32> to vector<160x32xf32>
    %200 = arith.subf %194, %199 : vector<160x32xf32>
    %201 = arith.mulf %200, %200 : vector<160x32xf32>
    %cst_99 = arith.constant dense<0.000000e+00> : vector<160xf32>
    %202 = vector.multi_reduction <add>, %201, %cst_99 [1] : vector<160x32xf32> to vector<160xf32>
    %203 = vector.shape_cast %202 : vector<160xf32> to vector<160x1xf32>
    %cst_100 = arith.constant 3.200000e+01 : f32
    %204 = vector.broadcast %cst_100 : f32 to vector<160x1xf32>
    %205 = arith.divf %203, %204 : vector<160x1xf32>
    %206 = vector.broadcast %198 : vector<160x1xf32> to vector<160x32xf32>
    %207 = arith.subf %194, %206 : vector<160x32xf32>
    %cst_101 = arith.constant 9.99999974E-6 : f32
    %208 = vector.broadcast %cst_101 : f32 to vector<160x1xf32>
    %209 = arith.addf %205, %208 : vector<160x1xf32>
    %210 = math.rsqrt %209 : vector<160x1xf32>
    %211 = vector.broadcast %210 : vector<160x1xf32> to vector<160x32xf32>
    %212 = arith.mulf %207, %211 : vector<160x32xf32>
    %213 = vector.broadcast %13 : vector<1x32xf32> to vector<160x32xf32>
    %214 = arith.mulf %212, %213 : vector<160x32xf32>
    %215 = vector.broadcast %14 : vector<1x32xf32> to vector<160x32xf32>
    %216 = arith.addf %214, %215 : vector<160x32xf32>
    %217 = vector.shape_cast %216 : vector<160x32xf32> to vector<2x80x32xf32>
    %218 = vector.shape_cast %192 : vector<2x16x32xf32> to vector<2x1x16x32xf32>
    %219 = vector.shape_cast %218 : vector<2x1x16x32xf32> to vector<2x1x16x32xf32>
    %220 = vector.broadcast %219 : vector<2x1x16x32xf32> to vector<2x4x16x32xf32>
    %221 = vector.shape_cast %220 : vector<2x4x16x32xf32> to vector<8x16x32xf32>
    %222 = vector.shape_cast %15 : vector<4x32x8xbf16> to vector<1x4x32x8xbf16>
    %223 = vector.shape_cast %222 : vector<1x4x32x8xbf16> to vector<1x4x32x8xbf16>
    %224 = vector.broadcast %223 : vector<1x4x32x8xbf16> to vector<2x4x32x8xbf16>
    %225 = vector.shape_cast %224 : vector<2x4x32x8xbf16> to vector<8x32x8xbf16>
    %226 = arith.truncf %221 : vector<8x16x32xf32> to vector<8x16x32xbf16>
    "tpu.trace_start"() <{level = 10 : i32, message = "gtc,gcd->gtd"}> : () -> ()
    %cst_102 = arith.constant dense<0.000000e+00> : vector<8x16x8xf32>
    %227 = tpu.matmul %226, %225, %cst_102 {dimension_numbers = #tpu.dot_dimension_numbers<[2], [1], [1], [2], [0, 0, 0, 1, 1, 2], [0], [0]>} : vector<8x16x32xbf16>, vector<8x32x8xbf16>, vector<8x16x8xf32> -> vector<8x16x8xf32>
    "tpu.trace_stop"() : () -> ()
    %228 = vector.shape_cast %217 : vector<2x80x32xf32> to vector<2x1x80x32xf32>
    %229 = vector.shape_cast %228 : vector<2x1x80x32xf32> to vector<2x1x80x32xf32>
    %230 = vector.broadcast %229 : vector<2x1x80x32xf32> to vector<2x4x80x32xf32>
    %231 = vector.shape_cast %230 : vector<2x4x80x32xf32> to vector<8x80x32xf32>
    %232 = vector.shape_cast %16 : vector<4x32x8xbf16> to vector<1x4x32x8xbf16>
    %233 = vector.shape_cast %232 : vector<1x4x32x8xbf16> to vector<1x4x32x8xbf16>
    %234 = vector.broadcast %233 : vector<1x4x32x8xbf16> to vector<2x4x32x8xbf16>
    %235 = vector.shape_cast %234 : vector<2x4x32x8xbf16> to vector<8x32x8xbf16>
    %236 = arith.truncf %231 : vector<8x80x32xf32> to vector<8x80x32xbf16>
    "tpu.trace_start"() <{level = 10 : i32, message = "gtc,gcd->gtd"}> : () -> ()
    %cst_103 = arith.constant dense<0.000000e+00> : vector<8x80x8xf32>
    %237 = tpu.matmul %236, %235, %cst_103 {dimension_numbers = #tpu.dot_dimension_numbers<[2], [1], [1], [2], [0, 0, 0, 1, 1, 2], [0], [0]>} : vector<8x80x32xbf16>, vector<8x32x8xbf16>, vector<8x80x8xf32> -> vector<8x80x8xf32>
    "tpu.trace_stop"() : () -> ()
    %238 = vector.shape_cast %217 : vector<2x80x32xf32> to vector<2x1x80x32xf32>
    %239 = vector.shape_cast %238 : vector<2x1x80x32xf32> to vector<2x1x80x32xf32>
    %240 = vector.broadcast %239 : vector<2x1x80x32xf32> to vector<2x4x80x32xf32>
    %241 = vector.shape_cast %240 : vector<2x4x80x32xf32> to vector<8x80x32xf32>
    %242 = vector.shape_cast %17 : vector<4x32x8xbf16> to vector<1x4x32x8xbf16>
    %243 = vector.shape_cast %242 : vector<1x4x32x8xbf16> to vector<1x4x32x8xbf16>
    %244 = vector.broadcast %243 : vector<1x4x32x8xbf16> to vector<2x4x32x8xbf16>
    %245 = vector.shape_cast %244 : vector<2x4x32x8xbf16> to vector<8x32x8xbf16>
    %246 = arith.truncf %241 : vector<8x80x32xf32> to vector<8x80x32xbf16>
    "tpu.trace_start"() <{level = 10 : i32, message = "gtc,gcd->gtd"}> : () -> ()
    %cst_104 = arith.constant dense<0.000000e+00> : vector<8x80x8xf32>
    %247 = tpu.matmul %246, %245, %cst_104 {dimension_numbers = #tpu.dot_dimension_numbers<[2], [1], [1], [2], [0, 0, 0, 1, 1, 2], [0], [0]>} : vector<8x80x32xbf16>, vector<8x32x8xbf16>, vector<8x80x8xf32> -> vector<8x80x8xf32>
    "tpu.trace_stop"() : () -> ()
    %248 = arith.truncf %227 : vector<8x16x8xf32> to vector<8x16x8xbf16>
    %249 = arith.truncf %237 : vector<8x80x8xf32> to vector<8x80x8xbf16>
    "tpu.trace_start"() <{level = 10 : i32, message = "gmd,gnd->gmn"}> : () -> ()
    %cst_105 = arith.constant dense<0.000000e+00> : vector<8x16x80xf32>
    %250 = tpu.matmul %248, %249, %cst_105 {dimension_numbers = #tpu.dot_dimension_numbers<[2], [2], [1], [1], [0, 0, 0, 1, 1, 1], [0], [0]>} : vector<8x16x8xbf16>, vector<8x80x8xbf16>, vector<8x16x80xf32> -> vector<8x16x80xf32>
    "tpu.trace_stop"() : () -> ()
    %cst_106 = arith.constant 0.353553385 : f32
    %251 = vector.broadcast %cst_106 : f32 to vector<8x16x80xf32>
    %252 = arith.mulf %250, %251 : vector<8x16x80xf32>
    %cst_107 = arith.constant dense<0xFF800000> : vector<8x16xf32>
    %253 = vector.multi_reduction <maximumf>, %252, %cst_107 [2] : vector<8x16x80xf32> to vector<8x16xf32>
    %254 = vector.shape_cast %253 : vector<8x16xf32> to vector<8x16x1xf32>
    %255 = vector.broadcast %254 : vector<8x16x1xf32> to vector<8x16x80xf32>
    %256 = arith.subf %252, %255 : vector<8x16x80xf32>
    %257 = math.exp %256 : vector<8x16x80xf32>
    %cst_108 = arith.constant dense<0.000000e+00> : vector<8x16xf32>
    %258 = vector.multi_reduction <add>, %257, %cst_108 [2] : vector<8x16x80xf32> to vector<8x16xf32>
    %259 = vector.shape_cast %258 : vector<8x16xf32> to vector<8x16x1xf32>
    %260 = tpu.reciprocal %259 {approx = true} : vector<8x16x1xf32> -> vector<8x16x1xf32>
    %261 = vector.broadcast %260 : vector<8x16x1xf32> to vector<8x16x80xf32>
    %262 = arith.mulf %257, %261 : vector<8x16x80xf32>
    %263 = arith.truncf %262 : vector<8x16x80xf32> to vector<8x16x80xbf16>
    %264 = arith.truncf %247 : vector<8x80x8xf32> to vector<8x80x8xbf16>
    "tpu.trace_start"() <{level = 10 : i32, message = "gmn,gnd->gmd"}> : () -> ()
    %cst_109 = arith.constant dense<0.000000e+00> : vector<8x16x8xf32>
    %265 = tpu.matmul %263, %264, %cst_109 {dimension_numbers = #tpu.dot_dimension_numbers<[2], [1], [1], [2], [0, 0, 0, 1, 1, 2], [0], [0]>} : vector<8x16x80xbf16>, vector<8x80x8xbf16>, vector<8x16x8xf32> -> vector<8x16x8xf32>
    "tpu.trace_stop"() : () -> ()
    %266 = vector.shape_cast %18 : vector<4x8x32xbf16> to vector<1x4x8x32xbf16>
    %267 = vector.shape_cast %266 : vector<1x4x8x32xbf16> to vector<1x4x8x32xbf16>
    %268 = vector.broadcast %267 : vector<1x4x8x32xbf16> to vector<2x4x8x32xbf16>
    %269 = vector.shape_cast %268 : vector<2x4x8x32xbf16> to vector<8x8x32xbf16>
    %270 = arith.truncf %265 : vector<8x16x8xf32> to vector<8x16x8xbf16>
    "tpu.trace_start"() <{level = 10 : i32, message = "gmd,gdc->gmc"}> : () -> ()
    %cst_110 = arith.constant dense<0.000000e+00> : vector<8x16x32xf32>
    %271 = tpu.matmul %270, %269, %cst_110 {dimension_numbers = #tpu.dot_dimension_numbers<[2], [1], [1], [2], [0, 0, 0, 1, 1, 2], [0], [0]>} : vector<8x16x8xbf16>, vector<8x8x32xbf16>, vector<8x16x32xf32> -> vector<8x16x32xf32>
    "tpu.trace_stop"() : () -> ()
    %272 = vector.shape_cast %271 : vector<8x16x32xf32> to vector<2x4x16x32xf32>
    %273 = vector.extract_strided_slice %272 {offsets = [0, 0, 0, 0], sizes = [2, 1, 16, 32], strides = [1, 1, 1, 1]} : vector<2x4x16x32xf32> to vector<2x1x16x32xf32>
    %274 = vector.shape_cast %273 : vector<2x1x16x32xf32> to vector<2x16x32xf32>
    %275 = vector.extract_strided_slice %272 {offsets = [0, 1, 0, 0], sizes = [2, 1, 16, 32], strides = [1, 1, 1, 1]} : vector<2x4x16x32xf32> to vector<2x1x16x32xf32>
    %276 = vector.shape_cast %275 : vector<2x1x16x32xf32> to vector<2x16x32xf32>
    %277 = arith.addf %274, %276 : vector<2x16x32xf32>
    %278 = vector.extract_strided_slice %272 {offsets = [0, 2, 0, 0], sizes = [2, 1, 16, 32], strides = [1, 1, 1, 1]} : vector<2x4x16x32xf32> to vector<2x1x16x32xf32>
    %279 = vector.shape_cast %278 : vector<2x1x16x32xf32> to vector<2x16x32xf32>
    %280 = arith.addf %277, %279 : vector<2x16x32xf32>
    %281 = vector.extract_strided_slice %272 {offsets = [0, 3, 0, 0], sizes = [2, 1, 16, 32], strides = [1, 1, 1, 1]} : vector<2x4x16x32xf32> to vector<2x1x16x32xf32>
    %282 = vector.shape_cast %281 : vector<2x1x16x32xf32> to vector<2x16x32xf32>
    %283 = arith.addf %280, %282 : vector<2x16x32xf32>
    %284 = vector.shape_cast %283 : vector<2x16x32xf32> to vector<32x32xf32>
    %285 = vector.broadcast %19 : vector<1x32xf32> to vector<32x32xf32>
    %286 = arith.addf %284, %285 : vector<32x32xf32>
    %287 = vector.shape_cast %192 : vector<2x16x32xf32> to vector<32x32xf32>
    %288 = arith.addf %287, %286 : vector<32x32xf32>
    %cst_111 = arith.constant dense<0.000000e+00> : vector<32xf32>
    %289 = vector.multi_reduction <add>, %288, %cst_111 [1] : vector<32x32xf32> to vector<32xf32>
    %290 = vector.shape_cast %289 : vector<32xf32> to vector<32x1xf32>
    %cst_112 = arith.constant 3.200000e+01 : f32
    %291 = vector.broadcast %cst_112 : f32 to vector<32x1xf32>
    %292 = arith.divf %290, %291 : vector<32x1xf32>
    %293 = vector.broadcast %292 : vector<32x1xf32> to vector<32x32xf32>
    %294 = arith.subf %288, %293 : vector<32x32xf32>
    %295 = arith.mulf %294, %294 : vector<32x32xf32>
    %cst_113 = arith.constant dense<0.000000e+00> : vector<32xf32>
    %296 = vector.multi_reduction <add>, %295, %cst_113 [1] : vector<32x32xf32> to vector<32xf32>
    %297 = vector.shape_cast %296 : vector<32xf32> to vector<32x1xf32>
    %cst_114 = arith.constant 3.200000e+01 : f32
    %298 = vector.broadcast %cst_114 : f32 to vector<32x1xf32>
    %299 = arith.divf %297, %298 : vector<32x1xf32>
    %300 = vector.broadcast %292 : vector<32x1xf32> to vector<32x32xf32>
    %301 = arith.subf %288, %300 : vector<32x32xf32>
    %cst_115 = arith.constant 9.99999974E-6 : f32
    %302 = vector.broadcast %cst_115 : f32 to vector<32x1xf32>
    %303 = arith.addf %299, %302 : vector<32x1xf32>
    %304 = math.rsqrt %303 : vector<32x1xf32>
    %305 = vector.broadcast %304 : vector<32x1xf32> to vector<32x32xf32>
    %306 = arith.mulf %301, %305 : vector<32x32xf32>
    %307 = vector.broadcast %20 : vector<1x32xf32> to vector<32x32xf32>
    %308 = arith.mulf %306, %307 : vector<32x32xf32>
    %309 = vector.broadcast %21 : vector<1x32xf32> to vector<32x32xf32>
    %310 = arith.addf %308, %309 : vector<32x32xf32>
    %311 = arith.truncf %310 : vector<32x32xf32> to vector<32x32xbf16>
    %cst_116 = arith.constant dense<0.000000e+00> : vector<32x128xf32>
    %312 = tpu.matmul %311, %22, %cst_116 {dimension_numbers = #tpu.dot_dimension_numbers<[1], [0], [0], [1], [0, 0, 1, 1], [], []>} : vector<32x32xbf16>, vector<32x128xbf16>, vector<32x128xf32> -> vector<32x128xf32>
    %313 = vector.broadcast %23 : vector<1x128xf32> to vector<32x128xf32>
    %314 = arith.addf %312, %313 : vector<32x128xf32>
    %cst_117 = arith.constant 5.000000e-01 : f32
    %315 = vector.broadcast %cst_117 : f32 to vector<32x128xf32>
    %316 = arith.mulf %315, %314 : vector<32x128xf32>
    %cst_118 = arith.constant 0.707106769 : f32
    %317 = vector.broadcast %cst_118 : f32 to vector<32x128xf32>
    %318 = arith.mulf %314, %317 : vector<32x128xf32>
    %319 = math.erf %318 : vector<32x128xf32>
    %cst_119 = arith.constant 1.000000e+00 : f32
    %320 = vector.broadcast %cst_119 : f32 to vector<32x128xf32>
    %321 = arith.addf %320, %319 : vector<32x128xf32>
    %322 = arith.mulf %316, %321 : vector<32x128xf32>
    %323 = arith.truncf %322 : vector<32x128xf32> to vector<32x128xbf16>
    %cst_120 = arith.constant dense<0.000000e+00> : vector<32x32xf32>
    %324 = tpu.matmul %323, %24, %cst_120 {dimension_numbers = #tpu.dot_dimension_numbers<[1], [0], [0], [1], [0, 0, 1, 1], [], []>} : vector<32x128xbf16>, vector<128x32xbf16>, vector<32x32xf32> -> vector<32x32xf32>
    %325 = vector.broadcast %25 : vector<1x32xf32> to vector<32x32xf32>
    %326 = arith.addf %324, %325 : vector<32x32xf32>
    %327 = arith.addf %288, %326 : vector<32x32xf32>
    %328 = vector.shape_cast %327 : vector<32x32xf32> to vector<2x16x32xf32>
    %329 = tpu.concatenate %27, %328 in 1 : vector<2x1x32xf32>, vector<2x16x32xf32> -> vector<2x17x32xf32>
    %c0_121 = arith.constant 0 : index
    %c0_122 = arith.constant 0 : index
    %c0_123 = arith.constant 0 : index
    %330 = vector.load %arg30[%c0_121, %c0_122, %c0_123] : memref<2x17x32xf32, #tpu.memory_space<vmem>>, vector<2x17x32xf32>
    tpu.vector_store %arg30[%c0_121, %c0_122, %c0_123], %329 {strides = array<i32>} : memref<2x17x32xf32, #tpu.memory_space<vmem>>, vector<2x17x32xf32>,
    return
  }
}

</mosaic_0001>

<llo_original>
// kernel: compressor_forward.1
$region0: #{compressor_forward.1}
  #allocation0 [shape = 'u32[]', space=smem, size = 0x4, offset = 0x4, fixed_abs, tag = 'smem constant byte address 0x4 - core index']
  #allocation1 [shape = 'u32[72,128]{1,0:T(1,128)}', space=vmem, size = 0x9000, scoped, tag = 'internal scratch']
  %s0 = inlined_call_operand.smem [shape: u32[31], index: -1, kind: input, shape index: {}]
  %s1 = sld [smem:[%s0]]
  %s2 = scalar_lea.smem %s0, 1
  %s3 = sld [smem:[%s2]]
  %s4 = scalar_lea.smem %s0, 2
  %s5 = sld [smem:[%s4]]
  %s6 = scalar_lea.smem %s0, 3
  %s7 = sld [smem:[%s6]]
  %s8 = scalar_lea.smem %s0, 4
  %s9 = sld [smem:[%s8]]
  %s10 = scalar_lea.smem %s0, 5
  %s11 = sld [smem:[%s10]]
  %s12 = scalar_lea.smem %s0, 6
  %s13 = sld [smem:[%s12]]
  %s14 = scalar_lea.smem %s0, 7
  %s15 = sld [smem:[%s14]]
  %s16 = scalar_lea.smem %s0, 8
  %s17 = sld [smem:[%s16]]
  %s18 = scalar_lea.smem %s0, 9
  %s19 = sld [smem:[%s18]]
  %s20 = scalar_lea.smem %s0, 10
  %s21 = sld [smem:[%s20]]
  %s22 = scalar_lea.smem %s0, 11
  %s23 = sld [smem:[%s22]]
  %s24 = scalar_lea.smem %s0, 12
  %s25 = sld [smem:[%s24]]
  %s26 = scalar_lea.smem %s0, 13
  %s27 = sld [smem:[%s26]]
  %s28 = scalar_lea.smem %s0, 14
  %s29 = sld [smem:[%s28]]
  %s30 = scalar_lea.smem %s0, 15
  %s31 = sld [smem:[%s30]]
  %s32 = scalar_lea.smem %s0, 16
  %s33 = sld [smem:[%s32]]
  %s34 = scalar_lea.smem %s0, 17
  %s35 = sld [smem:[%s34]]
  %s36 = scalar_lea.smem %s0, 18
  %s37 = sld [smem:[%s36]]
  %s38 = scalar_lea.smem %s0, 19
  %s39 = sld [smem:[%s38]]
  %s40 = scalar_lea.smem %s0, 20
  %s41 = sld [smem:[%s40]]
  %s42 = scalar_lea.smem %s0, 21
  %s43 = sld [smem:[%s42]]
  %s44 = scalar_lea.smem %s0, 22
  %s45 = sld [smem:[%s44]]
  %s46 = scalar_lea.smem %s0, 23
  %s47 = sld [smem:[%s46]]
  %s48 = scalar_lea.smem %s0, 24
  %s49 = sld [smem:[%s48]]
  %s50 = scalar_lea.smem %s0, 25
  %s51 = sld [smem:[%s50]]
  %s52 = scalar_lea.smem %s0, 26
  %s53 = sld [smem:[%s52]]
  %s54 = scalar_lea.smem %s0, 27
  %s55 = sld [smem:[%s54]]
  %s56 = scalar_lea.smem %s0, 28
  %s57 = sld [smem:[%s56]]
  %s58 = scalar_lea.smem %s0, 29
  %s59 = sld [smem:[%s58]]
  %s60 = scalar_lea.smem %s0, 30
  %s61 = sld [smem:[%s60]]
  %s62 = sld [smem:[#allocation0]]
  $region130: #{compressor_forward.1} parent=0
    _
  %s64 = ssub.s32 1, %s62
  %s65 = scalar_select 0, %s64, %s62
  // Predicated region
  $region2: #{compressor_forward.1} parent=0 // pred_check
    _
  $region3: #{compressor_forward.1} parent=0 // pred_check_branch
    %67 = sbr.rel (0) target = $region5
  $region4: #{compressor_forward.1} parent=0 // pred_region
    _
  $region5: #{compressor_forward.1} parent=0 // pred_fallthru
    _
  // Predicated region
  $region6: #{compressor_forward.1} parent=0 // pred_check
    _
  $region7: #{compressor_forward.1} parent=0 // pred_check_branch
    %69 = sbr.rel (0) target = $region9
  $region8: #{compressor_forward.1} parent=0 // pred_region
    _
  $region9: #{compressor_forward.1} parent=0 // pred_fallthru
    _
  // Predicated region
  $region10: #{compressor_forward.1} parent=0 // pred_check
    _
  $region11: #{compressor_forward.1} parent=0 // pred_check_branch
    %71 = sbr.rel (0) target = $region13
  $region12: #{compressor_forward.1} parent=0 // pred_region
    _
  $region13: #{compressor_forward.1} parent=0 // pred_fallthru
    _
  // Predicated region
  $region14: #{compressor_forward.1} parent=0 // pred_check
    _
  $region15: #{compressor_forward.1} parent=0 // pred_check_branch
    %73 = sbr.rel (0) target = $region17
  $region16: #{compressor_forward.1} parent=0 // pred_region
    _
  $region17: #{compressor_forward.1} parent=0 // pred_fallthru
    _
  // Predicated region
  $region18: #{compressor_forward.1} parent=0 // pred_check
    _
  $region19: #{compressor_forward.1} parent=0 // pred_check_branch
    %75 = sbr.rel (0) target = $region21
  $region20: #{compressor_forward.1} parent=0 // pred_region
    _
  $region21: #{compressor_forward.1} parent=0 // pred_fallthru
    _
  // Predicated region
  $region22: #{compressor_forward.1} parent=0 // pred_check
    _
  $region23: #{compressor_forward.1} parent=0 // pred_check_branch
    %77 = sbr.rel (0) target = $region25
  $region24: #{compressor_forward.1} parent=0 // pred_region
    _
  $region25: #{compressor_forward.1} parent=0 // pred_fallthru
    _
  // Predicated region
  $region26: #{compressor_forward.1} parent=0 // pred_check
    _
  $region27: #{compressor_forward.1} parent=0 // pred_check_branch
    %79 = sbr.rel (0) target = $region29
  $region28: #{compressor_forward.1} parent=0 // pred_region
    _
  $region29: #{compressor_forward.1} parent=0 // pred_fallthru
    _
  // Predicated region
  $region30: #{compressor_forward.1} parent=0 // pred_check
    _
  $region31: #{compressor_forward.1} parent=0 // pred_check_branch
    %81 = sbr.rel (0) target = $region33
  $region32: #{compressor_forward.1} parent=0 // pred_region
    _
  $region33: #{compressor_forward.1} parent=0 // pred_fallthru
    _
  // Predicated region
  $region34: #{compressor_forward.1} parent=0 // pred_check
    _
  $region35: #{compressor_forward.1} parent=0 // pred_check_branch
    %83 = sbr.rel (0) target = $region37
  $region36: #{compressor_forward.1} parent=0 // pred_region
    _
  $region37: #{compressor_forward.1} parent=0 // pred_fallthru
    _
  // Predicated region
  $region38: #{compressor_forward.1} parent=0 // pred_check
    _
  $region39: #{compressor_forward.1} parent=0 // pred_check_branch
    %85 = sbr.rel (0) target = $region41
  $region40: #{compressor_forward.1} parent=0 // pred_region
    _
  $region41: #{compressor_forward.1} parent=0 // pred_fallthru
    _
  // Predicated region
  $region42: #{compressor_forward.1} parent=0 // pred_check
    _
  $region43: #{compressor_forward.1} parent=0 // pred_check_branch
    %87 = sbr.rel (0) target = $region45
  $region44: #{compressor_forward.1} parent=0 // pred_region
    _
  $region45: #{compressor_forward.1} parent=0 // pred_fallthru
    _
  // Predicated region
  $region46: #{compressor_forward.1} parent=0 // pred_check
    _
  $region47: #{compressor_forward.1} parent=0 // pred_check_branch
    %89 = sbr.rel (0) target = $region49
  $region48: #{compressor_forward.1} parent=0 // pred_region
    _
  $region49: #{compressor_forward.1} parent=0 // pred_fallthru
    _
  // Predicated region
  $region50: #{compressor_forward.1} parent=0 // pred_check
    _
  $region51: #{compressor_forward.1} parent=0 // pred_check_branch
    %91 = sbr.rel (0) target = $region53
  $region52: #{compressor_forward.1} parent=0 // pred_region
    _
  $region53: #{compressor_forward.1} parent=0 // pred_fallthru
    _
  // Predicated region
  $region54: #{compressor_forward.1} parent=0 // pred_check
    _
  $region55: #{compressor_forward.1} parent=0 // pred_check_branch
    %93 = sbr.rel (0) target = $region57
  $region56: #{compressor_forward.1} parent=0 // pred_region
    _
  $region57: #{compressor_forward.1} parent=0 // pred_fallthru
    _
  // Predicated region
  $region58: #{compressor_forward.1} parent=0 // pred_check
    _
  $region59: #{compressor_forward.1} parent=0 // pred_check_branch
    %95 = sbr.rel (0) target = $region61
  $region60: #{compressor_forward.1} parent=0 // pred_region
    _
  $region61: #{compressor_forward.1} parent=0 // pred_fallthru
    _
  // Predicated region
  $region62: #{compressor_forward.1} parent=0 // pred_check
    _
  $region63: #{compressor_forward.1} parent=0 // pred_check_branch
    %97 = sbr.rel (0) target = $region65
  $region64: #{compressor_forward.1} parent=0 // pred_region
    _
  $region65: #{compressor_forward.1} parent=0 // pred_fallthru
    _
  // Predicated region
  $region66: #{compressor_forward.1} parent=0 // pred_check
    _
  $region67: #{compressor_forward.1} parent=0 // pred_check_branch
    %99 = sbr.rel (0) target = $region69
  $region68: #{compressor_forward.1} parent=0 // pred_region
    _
  $region69: #{compressor_forward.1} parent=0 // pred_fallthru
    _
  // Predicated region
  $region70: #{compressor_forward.1} parent=0 // pred_check
    _
  $region71: #{compressor_forward.1} parent=0 // pred_check_branch
    %101 = sbr.rel (0) target = $region73
  $region72: #{compressor_forward.1} parent=0 // pred_region
    _
  $region73: #{compressor_forward.1} parent=0 // pred_fallthru
    _
  // Predicated region
  $region74: #{compressor_forward.1} parent=0 // pred_check
    _
  $region75: #{compressor_forward.1} parent=0 // pred_check_branch
    %103 = sbr.rel (0) target = $region77
  $region76: #{compressor_forward.1} parent=0 // pred_region
    _
  $region77: #{compressor_forward.1} parent=0 // pred_fallthru
    _
  // Predicated region
  $region78: #{compressor_forward.1} parent=0 // pred_check
    _
  $region79: #{compressor_forward.1} parent=0 // pred_check_branch
    %105 = sbr.rel (0) target = $region81
  $region80: #{compressor_forward.1} parent=0 // pred_region
    _
  $region81: #{compressor_forward.1} parent=0 // pred_fallthru
    _
  // Predicated region
  $region82: #{compressor_forward.1} parent=0 // pred_check
    _
  $region83: #{compressor_forward.1} parent=0 // pred_check_branch
    %107 = sbr.rel (0) target = $region85
  $region84: #{compressor_forward.1} parent=0 // pred_region
    _
  $region85: #{compressor_forward.1} parent=0 // pred_fallthru
    _
  // Predicated region
  $region86: #{compressor_forward.1} parent=0 // pred_check
    _
  $region87: #{compressor_forward.1} parent=0 // pred_check_branch
    %109 = sbr.rel (0) target = $region89
  $region88: #{compressor_forward.1} parent=0 // pred_region
    _
  $region89: #{compressor_forward.1} parent=0 // pred_fallthru
    _
  // Predicated region
  $region90: #{compressor_forward.1} parent=0 // pred_check
    _
  $region91: #{compressor_forward.1} parent=0 // pred_check_branch
    %111 = sbr.rel (0) target = $region93
  $region92: #{compressor_forward.1} parent=0 // pred_region
    _
  $region93: #{compressor_forward.1} parent=0 // pred_fallthru
    _
  // Predicated region
  $region94: #{compressor_forward.1} parent=0 // pred_check
    _
  $region95: #{compressor_forward.1} parent=0 // pred_check_branch
    %113 = sbr.rel (0) target = $region97
  $region96: #{compressor_forward.1} parent=0 // pred_region
    _
  $region97: #{compressor_forward.1} parent=0 // pred_fallthru
    _
  // Predicated region
  $region98: #{compressor_forward.1} parent=0 // pred_check
    _
  $region99: #{compressor_forward.1} parent=0 // pred_check_branch
    %115 = sbr.rel (0) target = $region101
  $region100: #{compressor_forward.1} parent=0 // pred_region
    _
  $region101: #{compressor_forward.1} parent=0 // pred_fallthru
    _
  // Predicated region
  $region102: #{compressor_forward.1} parent=0 // pred_check
    _
  $region103: #{compressor_forward.1} parent=0 // pred_check_branch
    %117 = sbr.rel (0) target = $region105
  $region104: #{compressor_forward.1} parent=0 // pred_region
    _
  $region105: #{compressor_forward.1} parent=0 // pred_fallthru
    _
  // Predicated region
  $region106: #{compressor_forward.1} parent=0 // pred_check
    _
  $region107: #{compressor_forward.1} parent=0 // pred_check_branch
    %119 = sbr.rel (0) target = $region109
  $region108: #{compressor_forward.1} parent=0 // pred_region
    _
  $region109: #{compressor_forward.1} parent=0 // pred_fallthru
    _
  // Predicated region
  $region110: #{compressor_forward.1} parent=0 // pred_check
    _
  $region111: #{compressor_forward.1} parent=0 // pred_check_branch
    %121 = sbr.rel (0) target = $region113
  $region112: #{compressor_forward.1} parent=0 // pred_region
    _
  $region113: #{compressor_forward.1} parent=0 // pred_fallthru
    _
  // Predicated region
  $region114: #{compressor_forward.1} parent=0 // pred_check
    _
  $region115: #{compressor_forward.1} parent=0 // pred_check_branch
    %123 = sbr.rel (0) target = $region117
  $region116: #{compressor_forward.1} parent=0 // pred_region
    _
  $region117: #{compressor_forward.1} parent=0 // pred_fallthru
    _
  // Predicated region
  $region118: #{compressor_forward.1} parent=0 // pred_check
    _
  $region119: #{compressor_forward.1} parent=0 // pred_check_branch
    %125 = sbr.rel (0) target = $region121
  $region120: #{compressor_forward.1} parent=0 // pred_region
    _
  $region121: #{compressor_forward.1} parent=0 // pred_fallthru
    _
  %v127 = vld [vmem:[%s9] sm:$0x1]
  %v128 = vld [vmem:[%s11] sm:$0x1]
  %v129 = vld [vmem:[%s13] sm:$0xf]
  %v130 = vld [vmem:[%s13 + $0x4] sm:$0xf]
  %v131 = vld [vmem:[%s13 + $0x8] sm:$0xf]
  %v132 = vld [vmem:[%s13 + $0xc] sm:$0xf]
  %v133 = vld [vmem:[%s13 + $0x10] sm:$0xf]
  %v134 = vld [vmem:[%s13 + $0x14] sm:$0xf]
  %v135 = vld [vmem:[%s13 + $0x18] sm:$0xf]
  %v136 = vld [vmem:[%s13 + $0x1c] sm:$0xf]
  %v137 = vld [vmem:[%s13 + $0x20] sm:$0xf]
  %v138 = vld [vmem:[%s13 + $0x24] sm:$0xf]
  %v139 = vld [vmem:[%s13 + $0x28] sm:$0xf]
  %v140 = vld [vmem:[%s13 + $0x2c] sm:$0xf]
  %v141 = vld [vmem:[%s13 + $0x30] sm:$0xf]
  %v142 = vld [vmem:[%s13 + $0x34] sm:$0xf]
  %v143 = vld [vmem:[%s13 + $0x38] sm:$0xf]
  %v144 = vld [vmem:[%s13 + $0x3c] sm:$0xf]
  %v145 = vld [vmem:[%s15] sm:$0xf]
  %v146 = vld [vmem:[%s15 + $0x4] sm:$0xf]
  %v147 = vld [vmem:[%s15 + $0x8] sm:$0xf]
  %v148 = vld [vmem:[%s15 + $0xc] sm:$0xf]
  %v149 = vld [vmem:[%s15 + $0x10] sm:$0xf]
  %v150 = vld [vmem:[%s15 + $0x14] sm:$0xf]
  %v151 = vld [vmem:[%s15 + $0x18] sm:$0xf]
  %v152 = vld [vmem:[%s15 + $0x1c] sm:$0xf]
  %v153 = vld [vmem:[%s15 + $0x20] sm:$0xf]
  %v154 = vld [vmem:[%s15 + $0x24] sm:$0xf]
  %v155 = vld [vmem:[%s15 + $0x28] sm:$0xf]
  %v156 = vld [vmem:[%s15 + $0x2c] sm:$0xf]
  %v157 = vld [vmem:[%s15 + $0x30] sm:$0xf]
  %v158 = vld [vmem:[%s15 + $0x34] sm:$0xf]
  %v159 = vld [vmem:[%s15 + $0x38] sm:$0xf]
  %v160 = vld [vmem:[%s15 + $0x3c] sm:$0xf]
  %v161 = vld [vmem:[%s17] sm:$0xf]
  %v162 = vld [vmem:[%s17 + $0x4] sm:$0xf]
  %v163 = vld [vmem:[%s17 + $0x8] sm:$0xf]
  %v164 = vld [vmem:[%s17 + $0xc] sm:$0xf]
  %v165 = vld [vmem:[%s17 + $0x10] sm:$0xf]
  %v166 = vld [vmem:[%s17 + $0x14] sm:$0xf]
  %v167 = vld [vmem:[%s17 + $0x18] sm:$0xf]
  %v168 = vld [vmem:[%s17 + $0x1c] sm:$0xf]
  %v169 = vld [vmem:[%s17 + $0x20] sm:$0xf]
  %v170 = vld [vmem:[%s17 + $0x24] sm:$0xf]
  %v171 = vld [vmem:[%s17 + $0x28] sm:$0xf]
  %v172 = vld [vmem:[%s17 + $0x2c] sm:$0xf]
  %v173 = vld [vmem:[%s17 + $0x30] sm:$0xf]
  %v174 = vld [vmem:[%s17 + $0x34] sm:$0xf]
  %v175 = vld [vmem:[%s17 + $0x38] sm:$0xf]
  %v176 = vld [vmem:[%s17 + $0x3c] sm:$0xf]
  %v177 = vld [vmem:[%s19] sm:$0xf]
  %v178 = vld [vmem:[%s19 + $0x4] sm:$0xf]
  %v179 = vld [vmem:[%s19 + $0x8] sm:$0xf]
  %v180 = vld [vmem:[%s19 + $0xc] sm:$0xf]
  %v181 = vld [vmem:[%s21] sm:$0x1]
  %v182 = vld [vmem:[%s23] sm:$0x1]
  %v183 = vld [vmem:[%s25] sm:$0x1]
  %v184 = vld [vmem:[%s27] sm:$0xf]
  %v185 = vld [vmem:[%s27 + $0x4] sm:$0xf]
  %v186 = vld [vmem:[%s27 + $0x8] sm:$0xf]
  %v187 = vld [vmem:[%s27 + $0xc] sm:$0xf]
  %v188 = vld [vmem:[%s29] sm:$0x1]
  %v189 = vld [vmem:[%s31] sm:$0xf]
  %v190 = vld [vmem:[%s31 + $0x4] sm:$0xf]
  %v191 = vld [vmem:[%s31 + $0x8] sm:$0xf]
  %v192 = vld [vmem:[%s31 + $0xc] sm:$0xf]
  %v193 = vld [vmem:[%s31 + $0x10] sm:$0xf]
  %v194 = vld [vmem:[%s31 + $0x14] sm:$0xf]
  %v195 = vld [vmem:[%s31 + $0x18] sm:$0xf]
  %v196 = vld [vmem:[%s31 + $0x1c] sm:$0xf]
  %v197 = vld [vmem:[%s31 + $0x20] sm:$0xf]
  %v198 = vld [vmem:[%s31 + $0x24] sm:$0xf]
  %v199 = vld [vmem:[%s31 + $0x28] sm:$0xf]
  %v200 = vld [vmem:[%s31 + $0x2c] sm:$0xf]
  %v201 = vld [vmem:[%s31 + $0x30] sm:$0xf]
  %v202 = vld [vmem:[%s31 + $0x34] sm:$0xf]
  %v203 = vld [vmem:[%s31 + $0x38] sm:$0xf]
  %v204 = vld [vmem:[%s31 + $0x3c] sm:$0xf]
  %v205 = vld [vmem:[%s33] sm:$0x1]
  %v206 = vld [vmem:[%s35] sm:$0x1]
  %v207 = vld [vmem:[%s37] sm:$0x1]
  %v208 = vld [vmem:[%s39] sm:$0xf]
  %v209 = vld [vmem:[%s39 + $0x4] sm:$0xf]
  %v210 = vld [vmem:[%s39 + $0x8] sm:$0xf]
  %v211 = vld [vmem:[%s39 + $0xc] sm:$0xf]
  %v212 = vld [vmem:[%s39 + $0x10] sm:$0xf]
  %v213 = vld [vmem:[%s39 + $0x14] sm:$0xf]
  %v214 = vld [vmem:[%s39 + $0x18] sm:$0xf]
  %v215 = vld [vmem:[%s39 + $0x1c] sm:$0xf]
  %v216 = vld [vmem:[%s39 + $0x20] sm:$0xf]
  %v217 = vld [vmem:[%s39 + $0x24] sm:$0xf]
  %v218 = vld [vmem:[%s39 + $0x28] sm:$0xf]
  %v219 = vld [vmem:[%s39 + $0x2c] sm:$0xf]
  %v220 = vld [vmem:[%s39 + $0x30] sm:$0xf]
  %v221 = vld [vmem:[%s39 + $0x34] sm:$0xf]
  %v222 = vld [vmem:[%s39 + $0x38] sm:$0xf]
  %v223 = vld [vmem:[%s39 + $0x3c] sm:$0xf]
  %v224 = vld [vmem:[%s41] sm:$0xf]
  %v225 = vld [vmem:[%s41 + $0x4] sm:$0xf]
  %v226 = vld [vmem:[%s41 + $0x8] sm:$0xf]
  %v227 = vld [vmem:[%s41 + $0xc] sm:$0xf]
  %v228 = vld [vmem:[%s41 + $0x10] sm:$0xf]
  %v229 = vld [vmem:[%s41 + $0x14] sm:$0xf]
  %v230 = vld [vmem:[%s41 + $0x18] sm:$0xf]
  %v231 = vld [vmem:[%s41 + $0x1c] sm:$0xf]
  %v232 = vld [vmem:[%s41 + $0x20] sm:$0xf]
  %v233 = vld [vmem:[%s41 + $0x24] sm:$0xf]
  %v234 = vld [vmem:[%s41 + $0x28] sm:$0xf]
  %v235 = vld [vmem:[%s41 + $0x2c] sm:$0xf]
  %v236 = vld [vmem:[%s41 + $0x30] sm:$0xf]
  %v237 = vld [vmem:[%s41 + $0x34] sm:$0xf]
  %v238 = vld [vmem:[%s41 + $0x38] sm:$0xf]
  %v239 = vld [vmem:[%s41 + $0x3c] sm:$0xf]
  %v240 = vld [vmem:[%s43] sm:$0xf]
  %v241 = vld [vmem:[%s43 + $0x4] sm:$0xf]
  %v242 = vld [vmem:[%s43 + $0x8] sm:$0xf]
  %v243 = vld [vmem:[%s43 + $0xc] sm:$0xf]
  %v244 = vld [vmem:[%s43 + $0x10] sm:$0xf]
  %v245 = vld [vmem:[%s43 + $0x14] sm:$0xf]
  %v246 = vld [vmem:[%s43 + $0x18] sm:$0xf]
  %v247 = vld [vmem:[%s43 + $0x1c] sm:$0xf]
  %v248 = vld [vmem:[%s43 + $0x20] sm:$0xf]
  %v249 = vld [vmem:[%s43 + $0x24] sm:$0xf]
  %v250 = vld [vmem:[%s43 + $0x28] sm:$0xf]
  %v251 = vld [vmem:[%s43 + $0x2c] sm:$0xf]
  %v252 = vld [vmem:[%s43 + $0x30] sm:$0xf]
  %v253 = vld [vmem:[%s43 + $0x34] sm:$0xf]
  %v254 = vld [vmem:[%s43 + $0x38] sm:$0xf]
  %v255 = vld [vmem:[%s43 + $0x3c] sm:$0xf]
  %v256 = vld [vmem:[%s45] sm:$0xf]
  %v257 = vld [vmem:[%s45 + $0x4] sm:$0xf]
  %v258 = vld [vmem:[%s45 + $0x8] sm:$0xf]
  %v259 = vld [vmem:[%s45 + $0xc] sm:$0xf]
  %v260 = vld [vmem:[%s47] sm:$0x1]
  %v261 = vld [vmem:[%s49] sm:$0x1]
  %v262 = vld [vmem:[%s51] sm:$0x1]
  %v263 = vld [vmem:[%s53] sm:$0xf]
  %v264 = vld [vmem:[%s53 + $0x4] sm:$0xf]
  %v265 = vld [vmem:[%s53 + $0x8] sm:$0xf]
  %v266 = vld [vmem:[%s53 + $0xc] sm:$0xf]
  %v267 = vld [vmem:[%s55] sm:$0x1]
  %v268 = vld [vmem:[%s57] sm:$0xf]
  %v269 = vld [vmem:[%s57 + $0x4] sm:$0xf]
  %v270 = vld [vmem:[%s57 + $0x8] sm:$0xf]
  %v271 = vld [vmem:[%s57 + $0xc] sm:$0xf]
  %v272 = vld [vmem:[%s57 + $0x10] sm:$0xf]
  %v273 = vld [vmem:[%s57 + $0x14] sm:$0xf]
  %v274 = vld [vmem:[%s57 + $0x18] sm:$0xf]
  %v275 = vld [vmem:[%s57 + $0x1c] sm:$0xf]
  %v276 = vld [vmem:[%s57 + $0x20] sm:$0xf]
  %v277 = vld [vmem:[%s57 + $0x24] sm:$0xf]
  %v278 = vld [vmem:[%s57 + $0x28] sm:$0xf]
  %v279 = vld [vmem:[%s57 + $0x2c] sm:$0xf]
  %v280 = vld [vmem:[%s57 + $0x30] sm:$0xf]
  %v281 = vld [vmem:[%s57 + $0x34] sm:$0xf]
  %v282 = vld [vmem:[%s57 + $0x38] sm:$0xf]
  %v283 = vld [vmem:[%s57 + $0x3c] sm:$0xf]
  %v284 = vld [vmem:[%s59] sm:$0x1]
  %v285 = vld [vmem:[%s1] sm:$0xff]
  %v286 = vld [vmem:[%s1 + $0x8] sm:$0xff]
  %v287 = vld [vmem:[%s1 + $0x10] sm:$0xff]
  %v288 = vld [vmem:[%s1 + $0x18] sm:$0xff]
  %v289 = vld [vmem:[%s1 + $0x20] sm:$0xff]
  %v290 = vld [vmem:[%s1 + $0x28] sm:$0xff]
  %v291 = vld [vmem:[%s1 + $0x30] sm:$0xff]
  %v292 = vld [vmem:[%s1 + $0x38] sm:$0xff]
  %v293 = vld [vmem:[%s1 + $0x40] sm:$0x1]
  %v294 = vld [vmem:[%s1 + $0x48] sm:$0xff]
  %v295 = vld [vmem:[%s1 + $0x50] sm:$0xff]
  %v296 = vld [vmem:[%s1 + $0x58] sm:$0xff]
  %v297 = vld [vmem:[%s1 + $0x60] sm:$0xff]
  %v298 = vld [vmem:[%s1 + $0x68] sm:$0xff]
  %v299 = vld [vmem:[%s1 + $0x70] sm:$0xff]
  %v300 = vld [vmem:[%s1 + $0x78] sm:$0xff]
  %v301 = vld [vmem:[%s1 + $0x80] sm:$0xff]
  %v302 = vld [vmem:[%s1 + $0x88] sm:$0x1]
  %vm321 = vcmask 1046528
  %v322 = vrot.slane %v285, 1
  %v323 = vrot.slane %v286, 1
  %v324 = vsel %vm321, %v322, %v323
  %v325 = vrot.slane %v287, 1
  %v326 = vsel %vm321, %v323, %v325
  %v327 = vrot.slane %v288, 1
  %v328 = vsel %vm321, %v325, %v327
  %v329 = vrot.slane %v289, 1
  %v330 = vsel %vm321, %v327, %v329
  %v331 = vrot.slane %v290, 1
  %v332 = vsel %vm321, %v329, %v331
  %v333 = vrot.slane %v291, 1
  %v334 = vsel %vm321, %v331, %v333
  %v335 = vrot.slane %v292, 1
  %v336 = vsel %vm321, %v333, %v335
  %v337 = vrot.slane %v293, 1
  %v338 = vsel %vm321, %v335, %v337
  %v339 = vrot.slane %v294, 1
  %v340 = vrot.slane %v295, 1
  %v341 = vsel %vm321, %v339, %v340
  %v342 = vrot.slane %v296, 1
  %v343 = vsel %vm321, %v340, %v342
  %v344 = vrot.slane %v297, 1
  %v345 = vsel %vm321, %v342, %v344
  %v346 = vrot.slane %v298, 1
  %v347 = vsel %vm321, %v344, %v346
  %v348 = vrot.slane %v299, 1
  %v349 = vsel %vm321, %v346, %v348
  %v350 = vrot.slane %v300, 1
  %v351 = vsel %vm321, %v348, %v350
  %v352 = vrot.slane %v301, 1
  %v353 = vsel %vm321, %v350, %v352
  %v354 = vrot.slane %v302, 1
  %v355 = vsel %vm321, %v352, %v354
  %v372 = vld [vmem:[%s5] sm:$0x1]
  %v373 = vld [vmem:[%s7] sm:$0x1]
  %vm374 = vcmask 261120
  %v375 = vsel %vm374, %v324, 0.0
  %376 = vadd.xlane.f32.xlu0 %v375
  %v377 = vpop.xlane.xlu0 %376
  %v378 = vsel %vm374, %v326, 0.0
  %379 = vadd.xlane.f32.xlu0 %v378
  %v380 = vpop.xlane.xlu0 %379
  %v381 = vsel %vm374, %v328, 0.0
  %382 = vadd.xlane.f32.xlu0 %v381
  %v383 = vpop.xlane.xlu0 %382
  %v384 = vsel %vm374, %v330, 0.0
  %385 = vadd.xlane.f32.xlu0 %v384
  %v386 = vpop.xlane.xlu0 %385
  %v387 = vsel %vm374, %v332, 0.0
  %388 = vadd.xlane.f32.xlu0 %v387
  %v389 = vpop.xlane.xlu0 %388
  %v390 = vsel %vm374, %v334, 0.0
  %391 = vadd.xlane.f32.xlu0 %v390
  %v392 = vpop.xlane.xlu0 %391
  %v393 = vsel %vm374, %v336, 0.0
  %394 = vadd.xlane.f32.xlu0 %v393
  %v395 = vpop.xlane.xlu0 %394
  %v396 = vsel %vm374, %v338, 0.0
  %397 = vadd.xlane.f32.xlu0 %v396
  %v398 = vpop.xlane.xlu0 %397
  %v399 = vsel %vm374, %v341, 0.0
  %400 = vadd.xlane.f32.xlu0 %v399
  %v401 = vpop.xlane.xlu0 %400
  %v402 = vsel %vm374, %v343, 0.0
  %403 = vadd.xlane.f32.xlu0 %v402
  %v404 = vpop.xlane.xlu0 %403
  %v405 = vsel %vm374, %v345, 0.0
  %406 = vadd.xlane.f32.xlu0 %v405
  %v407 = vpop.xlane.xlu0 %406
  %v408 = vsel %vm374, %v347, 0.0
  %409 = vadd.xlane.f32.xlu0 %v408
  %v410 = vpop.xlane.xlu0 %409
  %v411 = vsel %vm374, %v349, 0.0
  %412 = vadd.xlane.f32.xlu0 %v411
  %v413 = vpop.xlane.xlu0 %412
  %v414 = vsel %vm374, %v351, 0.0
  %415 = vadd.xlane.f32.xlu0 %v414
  %v416 = vpop.xlane.xlu0 %415
  %v417 = vsel %vm374, %v353, 0.0
  %418 = vadd.xlane.f32.xlu0 %v417
  %v419 = vpop.xlane.xlu0 %418
  %v420 = vsel %vm374, %v355, 0.0
  %421 = vadd.xlane.f32.xlu0 %v420
  %v422 = vpop.xlane.xlu0 %421
  %v423 = vrcp.pop 32.0
  %v424 = vmul.f32 32.0, %v423
  %v425 = vsub.f32 1.0, %v424
  %v426 = vmul.f32 %v423, %v425
  %v427 = vadd.f32 %v423, %v426
  %vm428 = vweird.f32 %v423
  %v429 = vsel %vm428, %v423, %v427
  %v430 = vmul.f32 %v377, %v429
  %v431 = vmul.f32 %v380, %v429
  %v432 = vmul.f32 %v383, %v429
  %v433 = vmul.f32 %v386, %v429
  %v434 = vmul.f32 %v389, %v429
  %v435 = vmul.f32 %v392, %v429
  %v436 = vmul.f32 %v395, %v429
  %v437 = vmul.f32 %v398, %v429
  %v438 = vmul.f32 %v401, %v429
  %v439 = vmul.f32 %v404, %v429
  %v440 = vmul.f32 %v407, %v429
  %v441 = vmul.f32 %v410, %v429
  %v442 = vmul.f32 %v413, %v429
  %v443 = vmul.f32 %v416, %v429
  %v444 = vmul.f32 %v419, %v429
  %v445 = vmul.f32 %v422, %v429
  %v446 = vsub.f32 %v324, %v430
  %v447 = vsub.f32 %v326, %v431
  %v448 = vsub.f32 %v328, %v432
  %v449 = vsub.f32 %v330, %v433
  %v450 = vsub.f32 %v332, %v434
  %v451 = vsub.f32 %v334, %v435
  %v452 = vsub.f32 %v336, %v436
  %v453 = vsub.f32 %v338, %v437
  %v454 = vsub.f32 %v341, %v438
  %v455 = vsub.f32 %v343, %v439
  %v456 = vsub.f32 %v345, %v440
  %v457 = vsub.f32 %v347, %v441
  %v458 = vsub.f32 %v349, %v442
  %v459 = vsub.f32 %v351, %v443
  %v460 = vsub.f32 %v353, %v444
  %v461 = vsub.f32 %v355, %v445
  %v462 = vmul.f32 %v446, %v446
  %v463 = vmul.f32 %v447, %v447
  %v464 = vmul.f32 %v448, %v448
  %v465 = vmul.f32 %v449, %v449
  %v466 = vmul.f32 %v450, %v450
  %v467 = vmul.f32 %v451, %v451
  %v468 = vmul.f32 %v452, %v452
  %v469 = vmul.f32 %v453, %v453
  %v470 = vmul.f32 %v454, %v454
  %v471 = vmul.f32 %v455, %v455
  %v472 = vmul.f32 %v456, %v456
  %v473 = vmul.f32 %v457, %v457
  %v474 = vmul.f32 %v458, %v458
  %v475 = vmul.f32 %v459, %v459
  %v476 = vmul.f32 %v460, %v460
  %v477 = vmul.f32 %v461, %v461
  %v478 = vsel %vm374, %v462, 0.0
  %479 = vadd.xlane.f32.xlu0 %v478
  %v480 = vpop.xlane.xlu0 %479
  %v481 = vsel %vm374, %v463, 0.0
  %482 = vadd.xlane.f32.xlu0 %v481
  %v483 = vpop.xlane.xlu0 %482
  %v484 = vsel %vm374, %v464, 0.0
  %485 = vadd.xlane.f32.xlu0 %v484
  %v486 = vpop.xlane.xlu0 %485
  %v487 = vsel %vm374, %v465, 0.0
  %488 = vadd.xlane.f32.xlu0 %v487
  %v489 = vpop.xlane.xlu0 %488
  %v490 = vsel %vm374, %v466, 0.0
  %491 = vadd.xlane.f32.xlu0 %v490
  %v492 = vpop.xlane.xlu0 %491
  %v493 = vsel %vm374, %v467, 0.0
  %494 = vadd.xlane.f32.xlu0 %v493
  %v495 = vpop.xlane.xlu0 %494
  %v496 = vsel %vm374, %v468, 0.0
  %497 = vadd.xlane.f32.xlu0 %v496
  %v498 = vpop.xlane.xlu0 %497
  %v499 = vsel %vm374, %v469, 0.0
  %500 = vadd.xlane.f32.xlu0 %v499
  %v501 = vpop.xlane.xlu0 %500
  %v502 = vsel %vm374, %v470, 0.0
  %503 = vadd.xlane.f32.xlu0 %v502
  %v504 = vpop.xlane.xlu0 %503
  %v505 = vsel %vm374, %v471, 0.0
  %506 = vadd.xlane.f32.xlu0 %v505
  %v507 = vpop.xlane.xlu0 %506
  %v508 = vsel %vm374, %v472, 0.0
  %509 = vadd.xlane.f32.xlu0 %v508
  %v510 = vpop.xlane.xlu0 %509
  %v511 = vsel %vm374, %v473, 0.0
  %512 = vadd.xlane.f32.xlu0 %v511
  %v513 = vpop.xlane.xlu0 %512
  %v514 = vsel %vm374, %v474, 0.0
  %515 = vadd.xlane.f32.xlu0 %v514
  %v516 = vpop.xlane.xlu0 %515
  %v517 = vsel %vm374, %v475, 0.0
  %518 = vadd.xlane.f32.xlu0 %v517
  %v519 = vpop.xlane.xlu0 %518
  %v520 = vsel %vm374, %v476, 0.0
  %521 = vadd.xlane.f32.xlu0 %v520
  %v522 = vpop.xlane.xlu0 %521
  %v523 = vsel %vm374, %v477, 0.0
  %524 = vadd.xlane.f32.xlu0 %v523
  %v525 = vpop.xlane.xlu0 %524
  %v526 = vmul.f32 %v480, %v429
  %v527 = vmul.f32 %v483, %v429
  %v528 = vmul.f32 %v486, %v429
  %v529 = vmul.f32 %v489, %v429
  %v530 = vmul.f32 %v492, %v429
  %v531 = vmul.f32 %v495, %v429
  %v532 = vmul.f32 %v498, %v429
  %v533 = vmul.f32 %v501, %v429
  %v534 = vmul.f32 %v504, %v429
  %v535 = vmul.f32 %v507, %v429
  %v536 = vmul.f32 %v510, %v429
  %v537 = vmul.f32 %v513, %v429
  %v538 = vmul.f32 %v516, %v429
  %v539 = vmul.f32 %v519, %v429
  %v540 = vmul.f32 %v522, %v429
  %v541 = vmul.f32 %v525, %v429
  %v542 = vadd.f32 %v526, 1e-05
  %v543 = vadd.f32 %v527, 1e-05
  %v544 = vadd.f32 %v528, 1e-05
  %v545 = vadd.f32 %v529, 1e-05
  %v546 = vadd.f32 %v530, 1e-05
  %v547 = vadd.f32 %v531, 1e-05
  %v548 = vadd.f32 %v532, 1e-05
  %v549 = vadd.f32 %v533, 1e-05
  %v550 = vadd.f32 %v534, 1e-05
  %v551 = vadd.f32 %v535, 1e-05
  %v552 = vadd.f32 %v536, 1e-05
  %v553 = vadd.f32 %v537, 1e-05
  %v554 = vadd.f32 %v538, 1e-05
  %v555 = vadd.f32 %v539, 1e-05
  %v556 = vadd.f32 %v540, 1e-05
  %v557 = vadd.f32 %v541, 1e-05
  %v558 = vrsqrt.pop %v542
  %v559 = vmul.f32 %v558, %v542
  %v560 = vmul.f32 %v559, %v558
  %v561 = vmul.f32 0.5, %v560
  %v562 = vsub.f32 1.5, %v561
  %v563 = vmul.f32 %v558, %v562
  %vm564 = vweird.f32 %v542
  %vm565 = vweird.f32 %v558
  %vm566 = vmor %vm564, %vm565
  %v567 = vsel %vm566, %v558, %v563
  %v568 = vrsqrt.pop %v543
  %v569 = vmul.f32 %v568, %v543
  %v570 = vmul.f32 %v569, %v568
  %v571 = vmul.f32 0.5, %v570
  %v572 = vsub.f32 1.5, %v571
  %v573 = vmul.f32 %v568, %v572
  %vm574 = vweird.f32 %v543
  %vm575 = vweird.f32 %v568
  %vm576 = vmor %vm574, %vm575
  %v577 = vsel %vm576, %v568, %v573
  %v578 = vrsqrt.pop %v544
  %v579 = vmul.f32 %v578, %v544
  %v580 = vmul.f32 %v579, %v578
  %v581 = vmul.f32 0.5, %v580
  %v582 = vsub.f32 1.5, %v581
  %v583 = vmul.f32 %v578, %v582
  %vm584 = vweird.f32 %v544
  %vm585 = vweird.f32 %v578
  %vm586 = vmor %vm584, %vm585
  %v587 = vsel %vm586, %v578, %v583
  %v588 = vrsqrt.pop %v545
  %v589 = vmul.f32 %v588, %v545
  %v590 = vmul.f32 %v589, %v588
  %v591 = vmul.f32 0.5, %v590
  %v592 = vsub.f32 1.5, %v591
  %v593 = vmul.f32 %v588, %v592
  %vm594 = vweird.f32 %v545
  %vm595 = vweird.f32 %v588
  %vm596 = vmor %vm594, %vm595
  %v597 = vsel %vm596, %v588, %v593
  %v598 = vrsqrt.pop %v546
  %v599 = vmul.f32 %v598, %v546
  %v600 = vmul.f32 %v599, %v598
  %v601 = vmul.f32 0.5, %v600
  %v602 = vsub.f32 1.5, %v601
  %v603 = vmul.f32 %v598, %v602
  %vm604 = vweird.f32 %v546
  %vm605 = vweird.f32 %v598
  %vm606 = vmor %vm604, %vm605
  %v607 = vsel %vm606, %v598, %v603
  %v608 = vrsqrt.pop %v547
  %v609 = vmul.f32 %v608, %v547
  %v610 = vmul.f32 %v609, %v608
  %v611 = vmul.f32 0.5, %v610
  %v612 = vsub.f32 1.5, %v611
  %v613 = vmul.f32 %v608, %v612
  %vm614 = vweird.f32 %v547
  %vm615 = vweird.f32 %v608
  %vm616 = vmor %vm614, %vm615
  %v617 = vsel %vm616, %v608, %v613
  %v618 = vrsqrt.pop %v548
  %v619 = vmul.f32 %v618, %v548
  %v620 = vmul.f32 %v619, %v618
  %v621 = vmul.f32 0.5, %v620
  %v622 = vsub.f32 1.5, %v621
  %v623 = vmul.f32 %v618, %v622
  %vm624 = vweird.f32 %v548
  %vm625 = vweird.f32 %v618
  %vm626 = vmor %vm624, %vm625
  %v627 = vsel %vm626, %v618, %v623
  %v628 = vrsqrt.pop %v549
  %v629 = vmul.f32 %v628, %v549
  %v630 = vmul.f32 %v629, %v628
  %v631 = vmul.f32 0.5, %v630
  %v632 = vsub.f32 1.5, %v631
  %v633 = vmul.f32 %v628, %v632
  %vm634 = vweird.f32 %v549
  %vm635 = vweird.f32 %v628
  %vm636 = vmor %vm634, %vm635
  %v637 = vsel %vm636, %v628, %v633
  %v638 = vrsqrt.pop %v550
  %v639 = vmul.f32 %v638, %v550
  %v640 = vmul.f32 %v639, %v638
  %v641 = vmul.f32 0.5, %v640
  %v642 = vsub.f32 1.5, %v641
  %v643 = vmul.f32 %v638, %v642
  %vm644 = vweird.f32 %v550
  %vm645 = vweird.f32 %v638
  %vm646 = vmor %vm644, %vm645
  %v647 = vsel %vm646, %v638, %v643
  %v648 = vrsqrt.pop %v551
  %v649 = vmul.f32 %v648, %v551
  %v650 = vmul.f32 %v649, %v648
  %v651 = vmul.f32 0.5, %v650
  %v652 = vsub.f32 1.5, %v651
  %v653 = vmul.f32 %v648, %v652
  %vm654 = vweird.f32 %v551
  %vm655 = vweird.f32 %v648
  %vm656 = vmor %vm654, %vm655
  %v657 = vsel %vm656, %v648, %v653
  %v658 = vrsqrt.pop %v552
  %v659 = vmul.f32 %v658, %v552
  %v660 = vmul.f32 %v659, %v658
  %v661 = vmul.f32 0.5, %v660
  %v662 = vsub.f32 1.5, %v661
  %v663 = vmul.f32 %v658, %v662
  %vm664 = vweird.f32 %v552
  %vm665 = vweird.f32 %v658
  %vm666 = vmor %vm664, %vm665
  %v667 = vsel %vm666, %v658, %v663
  %v668 = vrsqrt.pop %v553
  %v669 = vmul.f32 %v668, %v553
  %v670 = vmul.f32 %v669, %v668
  %v671 = vmul.f32 0.5, %v670
  %v672 = vsub.f32 1.5, %v671
  %v673 = vmul.f32 %v668, %v672
  %vm674 = vweird.f32 %v553
  %vm675 = vweird.f32 %v668
  %vm676 = vmor %vm674, %vm675
  %v677 = vsel %vm676, %v668, %v673
  %v678 = vrsqrt.pop %v554
  %v679 = vmul.f32 %v678, %v554
  %v680 = vmul.f32 %v679, %v678
  %v681 = vmul.f32 0.5, %v680
  %v682 = vsub.f32 1.5, %v681
  %v683 = vmul.f32 %v678, %v682
  %vm684 = vweird.f32 %v554
  %vm685 = vweird.f32 %v678
  %vm686 = vmor %vm684, %vm685
  %v687 = vsel %vm686, %v678, %v683
  %v688 = vrsqrt.pop %v555
  %v689 = vmul.f32 %v688, %v555
  %v690 = vmul.f32 %v689, %v688
  %v691 = vmul.f32 0.5, %v690
  %v692 = vsub.f32 1.5, %v691
  %v693 = vmul.f32 %v688, %v692
  %vm694 = vweird.f32 %v555
  %vm695 = vweird.f32 %v688
  %vm696 = vmor %vm694, %vm695
  %v697 = vsel %vm696, %v688, %v693
  %v698 = vrsqrt.pop %v556
  %v699 = vmul.f32 %v698, %v556
  %v700 = vmul.f32 %v699, %v698
  %v701 = vmul.f32 0.5, %v700
  %v702 = vsub.f32 1.5, %v701
  %v703 = vmul.f32 %v698, %v702
  %vm704 = vweird.f32 %v556
  %vm705 = vweird.f32 %v698
  %vm706 = vmor %vm704, %vm705
  %v707 = vsel %vm706, %v698, %v703
  %v708 = vrsqrt.pop %v557
  %v709 = vmul.f32 %v708, %v557
  %v710 = vmul.f32 %v709, %v708
  %v711 = vmul.f32 0.5, %v710
  %v712 = vsub.f32 1.5, %v711
  %v713 = vmul.f32 %v708, %v712
  %vm714 = vweird.f32 %v557
  %vm715 = vweird.f32 %v708
  %vm716 = vmor %vm714, %vm715
  %v717 = vsel %vm716, %v708, %v713
  %v718 = vmul.f32 %v446, %v567
  %v719 = vmul.f32 %v447, %v577
  %v720 = vmul.f32 %v448, %v587
  %v721 = vmul.f32 %v449, %v597
  %v722 = vmul.f32 %v450, %v607
  %v723 = vmul.f32 %v451, %v617
  %v724 = vmul.f32 %v452, %v627
  %v725 = vmul.f32 %v453, %v637
  %v726 = vmul.f32 %v454, %v647
  %v727 = vmul.f32 %v455, %v657
  %v728 = vmul.f32 %v456, %v667
  %v729 = vmul.f32 %v457, %v677
  %v730 = vmul.f32 %v458, %v687
  %v731 = vmul.f32 %v459, %v697
  %v732 = vmul.f32 %v460, %v707
  %v733 = vmul.f32 %v461, %v717
  %v735 = vperm.slane %v372, 0
  %v737 = vmul.f32 %v718, %v735
  %v738 = vmul.f32 %v719, %v735
  %v739 = vmul.f32 %v720, %v735
  %v740 = vmul.f32 %v721, %v735
  %v741 = vmul.f32 %v722, %v735
  %v742 = vmul.f32 %v723, %v735
  %v743 = vmul.f32 %v724, %v735
  %v744 = vmul.f32 %v725, %v735
  %v745 = vmul.f32 %v726, %v735
  %v746 = vmul.f32 %v727, %v735
  %v747 = vmul.f32 %v728, %v735
  %v748 = vmul.f32 %v729, %v735
  %v749 = vmul.f32 %v730, %v735
  %v750 = vmul.f32 %v731, %v735
  %v751 = vmul.f32 %v732, %v735
  %v752 = vmul.f32 %v733, %v735
  %v754 = vperm.slane %v373, 0
  %v756 = vadd.f32 %v737, %v754
  %v757 = vadd.f32 %v738, %v754
  %v758 = vadd.f32 %v739, %v754
  %v759 = vadd.f32 %v740, %v754
  %v760 = vadd.f32 %v741, %v754
  %v761 = vadd.f32 %v742, %v754
  %v762 = vadd.f32 %v743, %v754
  %v763 = vadd.f32 %v744, %v754
  %v764 = vadd.f32 %v745, %v754
  %v765 = vadd.f32 %v746, %v754
  %v766 = vadd.f32 %v747, %v754
  %v767 = vadd.f32 %v748, %v754
  %v768 = vadd.f32 %v749, %v754
  %v769 = vadd.f32 %v750, %v754
  %v770 = vadd.f32 %v751, %v754
  %v771 = vadd.f32 %v752, %v754
  %v772 = vld [vmem:[%s3] sm:$0xff]
  %v773 = vld [vmem:[%s3 + $0x8] sm:$0xff]
  %v774 = vsel %vm374, %v756, 0.0
  %775 = vadd.xlane.f32.xlu0 %v774
  %v776 = vpop.xlane.xlu0 %775
  %v777 = vsel %vm374, %v757, 0.0
  %778 = vadd.xlane.f32.xlu0 %v777
  %v779 = vpop.xlane.xlu0 %778
  %v780 = vsel %vm374, %v758, 0.0
  %781 = vadd.xlane.f32.xlu0 %v780
  %v782 = vpop.xlane.xlu0 %781
  %v783 = vsel %vm374, %v759, 0.0
  %784 = vadd.xlane.f32.xlu0 %v783
  %v785 = vpop.xlane.xlu0 %784
  %v786 = vsel %vm374, %v760, 0.0
  %787 = vadd.xlane.f32.xlu0 %v786
  %v788 = vpop.xlane.xlu0 %787
  %v789 = vsel %vm374, %v761, 0.0
  %790 = vadd.xlane.f32.xlu0 %v789
  %v791 = vpop.xlane.xlu0 %790
  %v792 = vsel %vm374, %v762, 0.0
  %793 = vadd.xlane.f32.xlu0 %v792
  %v794 = vpop.xlane.xlu0 %793
  %v795 = vsel %vm374, %v763, 0.0
  %796 = vadd.xlane.f32.xlu0 %v795
  %v797 = vpop.xlane.xlu0 %796
  %v798 = vsel %vm374, %v764, 0.0
  %799 = vadd.xlane.f32.xlu0 %v798
  %v800 = vpop.xlane.xlu0 %799
  %v801 = vsel %vm374, %v765, 0.0
  %802 = vadd.xlane.f32.xlu0 %v801
  %v803 = vpop.xlane.xlu0 %802
  %v804 = vsel %vm374, %v766, 0.0
  %805 = vadd.xlane.f32.xlu0 %v804
  %v806 = vpop.xlane.xlu0 %805
  %v807 = vsel %vm374, %v767, 0.0
  %808 = vadd.xlane.f32.xlu0 %v807
  %v809 = vpop.xlane.xlu0 %808
  %v810 = vsel %vm374, %v768, 0.0
  %811 = vadd.xlane.f32.xlu0 %v810
  %v812 = vpop.xlane.xlu0 %811
  %v813 = vsel %vm374, %v769, 0.0
  %814 = vadd.xlane.f32.xlu0 %v813
  %v815 = vpop.xlane.xlu0 %814
  %v816 = vsel %vm374, %v770, 0.0
  %817 = vadd.xlane.f32.xlu0 %v816
  %v818 = vpop.xlane.xlu0 %817
  %v819 = vsel %vm374, %v771, 0.0
  %820 = vadd.xlane.f32.xlu0 %v819
  %v821 = vpop.xlane.xlu0 %820
  %v822 = vmul.f32 %v776, %v429
  %v823 = vmul.f32 %v779, %v429
  %v824 = vmul.f32 %v782, %v429
  %v825 = vmul.f32 %v785, %v429
  %v826 = vmul.f32 %v788, %v429
  %v827 = vmul.f32 %v791, %v429
  %v828 = vmul.f32 %v794, %v429
  %v829 = vmul.f32 %v797, %v429
  %v830 = vmul.f32 %v800, %v429
  %v831 = vmul.f32 %v803, %v429
  %v832 = vmul.f32 %v806, %v429
  %v833 = vmul.f32 %v809, %v429
  %v834 = vmul.f32 %v812, %v429
  %v835 = vmul.f32 %v815, %v429
  %v836 = vmul.f32 %v818, %v429
  %v837 = vmul.f32 %v821, %v429
  %v838 = vsub.f32 %v756, %v822
  %v839 = vsub.f32 %v757, %v823
  %v840 = vsub.f32 %v758, %v824
  %v841 = vsub.f32 %v759, %v825
  %v842 = vsub.f32 %v760, %v826
  %v843 = vsub.f32 %v761, %v827
  %v844 = vsub.f32 %v762, %v828
  %v845 = vsub.f32 %v763, %v829
  %v846 = vsub.f32 %v764, %v830
  %v847 = vsub.f32 %v765, %v831
  %v848 = vsub.f32 %v766, %v832
  %v849 = vsub.f32 %v767, %v833
  %v850 = vsub.f32 %v768, %v834
  %v851 = vsub.f32 %v769, %v835
  %v852 = vsub.f32 %v770, %v836
  %v853 = vsub.f32 %v771, %v837
  %v854 = vmul.f32 %v838, %v838
  %v855 = vmul.f32 %v839, %v839
  %v856 = vmul.f32 %v840, %v840
  %v857 = vmul.f32 %v841, %v841
  %v858 = vmul.f32 %v842, %v842
  %v859 = vmul.f32 %v843, %v843
  %v860 = vmul.f32 %v844, %v844
  %v861 = vmul.f32 %v845, %v845
  %v862 = vmul.f32 %v846, %v846
  %v863 = vmul.f32 %v847, %v847
  %v864 = vmul.f32 %v848, %v848
  %v865 = vmul.f32 %v849, %v849
  %v866 = vmul.f32 %v850, %v850
  %v867 = vmul.f32 %v851, %v851
  %v868 = vmul.f32 %v852, %v852
  %v869 = vmul.f32 %v853, %v853
  %v870 = vsel %vm374, %v854, 0.0
  %871 = vadd.xlane.f32.xlu0 %v870
  %v872 = vpop.xlane.xlu0 %871
  %v873 = vsel %vm374, %v855, 0.0
  %874 = vadd.xlane.f32.xlu0 %v873
  %v875 = vpop.xlane.xlu0 %874
  %v876 = vsel %vm374, %v856, 0.0
  %877 = vadd.xlane.f32.xlu0 %v876
  %v878 = vpop.xlane.xlu0 %877
  %v879 = vsel %vm374, %v857, 0.0
  %880 = vadd.xlane.f32.xlu0 %v879
  %v881 = vpop.xlane.xlu0 %880
  %v882 = vsel %vm374, %v858, 0.0
  %883 = vadd.xlane.f32.xlu0 %v882
  %v884 = vpop.xlane.xlu0 %883
  %v885 = vsel %vm374, %v859, 0.0
  %886 = vadd.xlane.f32.xlu0 %v885
  %v887 = vpop.xlane.xlu0 %886
  %v888 = vsel %vm374, %v860, 0.0
  %889 = vadd.xlane.f32.xlu0 %v888
  %v890 = vpop.xlane.xlu0 %889
  %v891 = vsel %vm374, %v861, 0.0
  %892 = vadd.xlane.f32.xlu0 %v891
  %v893 = vpop.xlane.xlu0 %892
  %v894 = vsel %vm374, %v862, 0.0
  %895 = vadd.xlane.f32.xlu0 %v894
  %v896 = vpop.xlane.xlu0 %895
  %v897 = vsel %vm374, %v863, 0.0
  %898 = vadd.xlane.f32.xlu0 %v897
  %v899 = vpop.xlane.xlu0 %898
  %v900 = vsel %vm374, %v864, 0.0
  %901 = vadd.xlane.f32.xlu0 %v900
  %v902 = vpop.xlane.xlu0 %901
  %v903 = vsel %vm374, %v865, 0.0
  %904 = vadd.xlane.f32.xlu0 %v903
  %v905 = vpop.xlane.xlu0 %904
  %v906 = vsel %vm374, %v866, 0.0
  %907 = vadd.xlane.f32.xlu0 %v906
  %v908 = vpop.xlane.xlu0 %907
  %v909 = vsel %vm374, %v867, 0.0
  %910 = vadd.xlane.f32.xlu0 %v909
  %v911 = vpop.xlane.xlu0 %910
  %v912 = vsel %vm374, %v868, 0.0
  %913 = vadd.xlane.f32.xlu0 %v912
  %v914 = vpop.xlane.xlu0 %913
  %v915 = vsel %vm374, %v869, 0.0
  %916 = vadd.xlane.f32.xlu0 %v915
  %v917 = vpop.xlane.xlu0 %916
  %v918 = vmul.f32 %v872, %v429
  %v919 = vmul.f32 %v875, %v429
  %v920 = vmul.f32 %v878, %v429
  %v921 = vmul.f32 %v881, %v429
  %v922 = vmul.f32 %v884, %v429
  %v923 = vmul.f32 %v887, %v429
  %v924 = vmul.f32 %v890, %v429
  %v925 = vmul.f32 %v893, %v429
  %v926 = vmul.f32 %v896, %v429
  %v927 = vmul.f32 %v899, %v429
  %v928 = vmul.f32 %v902, %v429
  %v929 = vmul.f32 %v905, %v429
  %v930 = vmul.f32 %v908, %v429
  %v931 = vmul.f32 %v911, %v429
  %v932 = vmul.f32 %v914, %v429
  %v933 = vmul.f32 %v917, %v429
  %v934 = vadd.f32 %v918, 1e-05
  %v935 = vadd.f32 %v919, 1e-05
  %v936 = vadd.f32 %v920, 1e-05
  %v937 = vadd.f32 %v921, 1e-05
  %v938 = vadd.f32 %v922, 1e-05
  %v939 = vadd.f32 %v923, 1e-05
  %v940 = vadd.f32 %v924, 1e-05
  %v941 = vadd.f32 %v925, 1e-05
  %v942 = vadd.f32 %v926, 1e-05
  %v943 = vadd.f32 %v927, 1e-05
  %v944 = vadd.f32 %v928, 1e-05
  %v945 = vadd.f32 %v929, 1e-05
  %v946 = vadd.f32 %v930, 1e-05
  %v947 = vadd.f32 %v931, 1e-05
  %v948 = vadd.f32 %v932, 1e-05
  %v949 = vadd.f32 %v933, 1e-05
  %v950 = vrsqrt.pop %v934
  %v951 = vmul.f32 %v950, %v934
  %v952 = vmul.f32 %v951, %v950
  %v953 = vmul.f32 0.5, %v952
  %v954 = vsub.f32 1.5, %v953
  %v955 = vmul.f32 %v950, %v954
  %vm956 = vweird.f32 %v934
  %vm957 = vweird.f32 %v950
  %vm958 = vmor %vm956, %vm957
  %v959 = vsel %vm958, %v950, %v955
  %v960 = vrsqrt.pop %v935
  %v961 = vmul.f32 %v960, %v935
  %v962 = vmul.f32 %v961, %v960
  %v963 = vmul.f32 0.5, %v962
  %v964 = vsub.f32 1.5, %v963
  %v965 = vmul.f32 %v960, %v964
  %vm966 = vweird.f32 %v935
  %vm967 = vweird.f32 %v960
  %vm968 = vmor %vm966, %vm967
  %v969 = vsel %vm968, %v960, %v965
  %v970 = vrsqrt.pop %v936
  %v971 = vmul.f32 %v970, %v936
  %v972 = vmul.f32 %v971, %v970
  %v973 = vmul.f32 0.5, %v972
  %v974 = vsub.f32 1.5, %v973
  %v975 = vmul.f32 %v970, %v974
  %vm976 = vweird.f32 %v936
  %vm977 = vweird.f32 %v970
  %vm978 = vmor %vm976, %vm977
  %v979 = vsel %vm978, %v970, %v975
  %v980 = vrsqrt.pop %v937
  %v981 = vmul.f32 %v980, %v937
  %v982 = vmul.f32 %v981, %v980
  %v983 = vmul.f32 0.5, %v982
  %v984 = vsub.f32 1.5, %v983
  %v985 = vmul.f32 %v980, %v984
  %vm986 = vweird.f32 %v937
  %vm987 = vweird.f32 %v980
  %vm988 = vmor %vm986, %vm987
  %v989 = vsel %vm988, %v980, %v985
  %v990 = vrsqrt.pop %v938
  %v991 = vmul.f32 %v990, %v938
  %v992 = vmul.f32 %v991, %v990
  %v993 = vmul.f32 0.5, %v992
  %v994 = vsub.f32 1.5, %v993
  %v995 = vmul.f32 %v990, %v994
  %vm996 = vweird.f32 %v938
  %vm997 = vweird.f32 %v990
  %vm998 = vmor %vm996, %vm997
  %v999 = vsel %vm998, %v990, %v995
  %v1000 = vrsqrt.pop %v939
  %v1001 = vmul.f32 %v1000, %v939
  %v1002 = vmul.f32 %v1001, %v1000
  %v1003 = vmul.f32 0.5, %v1002
  %v1004 = vsub.f32 1.5, %v1003
  %v1005 = vmul.f32 %v1000, %v1004
  %vm1006 = vweird.f32 %v939
  %vm1007 = vweird.f32 %v1000
  %vm1008 = vmor %vm1006, %vm1007
  %v1009 = vsel %vm1008, %v1000, %v1005
  %v1010 = vrsqrt.pop %v940
  %v1011 = vmul.f32 %v1010, %v940
  %v1012 = vmul.f32 %v1011, %v1010
  %v1013 = vmul.f32 0.5, %v1012
  %v1014 = vsub.f32 1.5, %v1013
  %v1015 = vmul.f32 %v1010, %v1014
  %vm1016 = vweird.f32 %v940
  %vm1017 = vweird.f32 %v1010
  %vm1018 = vmor %vm1016, %vm1017
  %v1019 = vsel %vm1018, %v1010, %v1015
  %v1020 = vrsqrt.pop %v941
  %v1021 = vmul.f32 %v1020, %v941
  %v1022 = vmul.f32 %v1021, %v1020
  %v1023 = vmul.f32 0.5, %v1022
  %v1024 = vsub.f32 1.5, %v1023
  %v1025 = vmul.f32 %v1020, %v1024
  %vm1026 = vweird.f32 %v941
  %vm1027 = vweird.f32 %v1020
  %vm1028 = vmor %vm1026, %vm1027
  %v1029 = vsel %vm1028, %v1020, %v1025
  %v1030 = vrsqrt.pop %v942
  %v1031 = vmul.f32 %v1030, %v942
  %v1032 = vmul.f32 %v1031, %v1030
  %v1033 = vmul.f32 0.5, %v1032
  %v1034 = vsub.f32 1.5, %v1033
  %v1035 = vmul.f32 %v1030, %v1034
  %vm1036 = vweird.f32 %v942
  %vm1037 = vweird.f32 %v1030
  %vm1038 = vmor %vm1036, %vm1037
  %v1039 = vsel %vm1038, %v1030, %v1035
  %v1040 = vrsqrt.pop %v943
  %v1041 = vmul.f32 %v1040, %v943
  %v1042 = vmul.f32 %v1041, %v1040
  %v1043 = vmul.f32 0.5, %v1042
  %v1044 = vsub.f32 1.5, %v1043
  %v1045 = vmul.f32 %v1040, %v1044
  %vm1046 = vweird.f32 %v943
  %vm1047 = vweird.f32 %v1040
  %vm1048 = vmor %vm1046, %vm1047
  %v1049 = vsel %vm1048, %v1040, %v1045
  %v1050 = vrsqrt.pop %v944
  %v1051 = vmul.f32 %v1050, %v944
  %v1052 = vmul.f32 %v1051, %v1050
  %v1053 = vmul.f32 0.5, %v1052
  %v1054 = vsub.f32 1.5, %v1053
  %v1055 = vmul.f32 %v1050, %v1054
  %vm1056 = vweird.f32 %v944
  %vm1057 = vweird.f32 %v1050
  %vm1058 = vmor %vm1056, %vm1057
  %v1059 = vsel %vm1058, %v1050, %v1055
  %v1060 = vrsqrt.pop %v945
  %v1061 = vmul.f32 %v1060, %v945
  %v1062 = vmul.f32 %v1061, %v1060
  %v1063 = vmul.f32 0.5, %v1062
  %v1064 = vsub.f32 1.5, %v1063
  %v1065 = vmul.f32 %v1060, %v1064
  %vm1066 = vweird.f32 %v945
  %vm1067 = vweird.f32 %v1060
  %vm1068 = vmor %vm1066, %vm1067
  %v1069 = vsel %vm1068, %v1060, %v1065
  %v1070 = vrsqrt.pop %v946
  %v1071 = vmul.f32 %v1070, %v946
  %v1072 = vmul.f32 %v1071, %v1070
  %v1073 = vmul.f32 0.5, %v1072
  %v1074 = vsub.f32 1.5, %v1073
  %v1075 = vmul.f32 %v1070, %v1074
  %vm1076 = vweird.f32 %v946
  %vm1077 = vweird.f32 %v1070
  %vm1078 = vmor %vm1076, %vm1077
  %v1079 = vsel %vm1078, %v1070, %v1075
  %v1080 = vrsqrt.pop %v947
  %v1081 = vmul.f32 %v1080, %v947
  %v1082 = vmul.f32 %v1081, %v1080
  %v1083 = vmul.f32 0.5, %v1082
  %v1084 = vsub.f32 1.5, %v1083
  %v1085 = vmul.f32 %v1080, %v1084
  %vm1086 = vweird.f32 %v947
  %vm1087 = vweird.f32 %v1080
  %vm1088 = vmor %vm1086, %vm1087
  %v1089 = vsel %vm1088, %v1080, %v1085
  %v1090 = vrsqrt.pop %v948
  %v1091 = vmul.f32 %v1090, %v948
  %v1092 = vmul.f32 %v1091, %v1090
  %v1093 = vmul.f32 0.5, %v1092
  %v1094 = vsub.f32 1.5, %v1093
  %v1095 = vmul.f32 %v1090, %v1094
  %vm1096 = vweird.f32 %v948
  %vm1097 = vweird.f32 %v1090
  %vm1098 = vmor %vm1096, %vm1097
  %v1099 = vsel %vm1098, %v1090, %v1095
  %v1100 = vrsqrt.pop %v949
  %v1101 = vmul.f32 %v1100, %v949
  %v1102 = vmul.f32 %v1101, %v1100
  %v1103 = vmul.f32 0.5, %v1102
  %v1104 = vsub.f32 1.5, %v1103
  %v1105 = vmul.f32 %v1100, %v1104
  %vm1106 = vweird.f32 %v949
  %vm1107 = vweird.f32 %v1100
  %vm1108 = vmor %vm1106, %vm1107
  %v1109 = vsel %vm1108, %v1100, %v1105
  %v1110 = vmul.f32 %v838, %v959
  %v1111 = vmul.f32 %v839, %v969
  %v1112 = vmul.f32 %v840, %v979
  %v1113 = vmul.f32 %v841, %v989
  %v1114 = vmul.f32 %v842, %v999
  %v1115 = vmul.f32 %v843, %v1009
  %v1116 = vmul.f32 %v844, %v1019
  %v1117 = vmul.f32 %v845, %v1029
  %v1118 = vmul.f32 %v846, %v1039
  %v1119 = vmul.f32 %v847, %v1049
  %v1120 = vmul.f32 %v848, %v1059
  %v1121 = vmul.f32 %v849, %v1069
  %v1122 = vmul.f32 %v850, %v1079
  %v1123 = vmul.f32 %v851, %v1089
  %v1124 = vmul.f32 %v852, %v1099
  %v1125 = vmul.f32 %v853, %v1109
  %v1127 = vperm.slane %v127, 0
  %v1129 = vmul.f32 %v1110, %v1127
  %v1130 = vmul.f32 %v1111, %v1127
  %v1131 = vmul.f32 %v1112, %v1127
  %v1132 = vmul.f32 %v1113, %v1127
  %v1133 = vmul.f32 %v1114, %v1127
  %v1134 = vmul.f32 %v1115, %v1127
  %v1135 = vmul.f32 %v1116, %v1127
  %v1136 = vmul.f32 %v1117, %v1127
  %v1137 = vmul.f32 %v1118, %v1127
  %v1138 = vmul.f32 %v1119, %v1127
  %v1139 = vmul.f32 %v1120, %v1127
  %v1140 = vmul.f32 %v1121, %v1127
  %v1141 = vmul.f32 %v1122, %v1127
  %v1142 = vmul.f32 %v1123, %v1127
  %v1143 = vmul.f32 %v1124, %v1127
  %v1144 = vmul.f32 %v1125, %v1127
  %v1146 = vperm.slane %v128, 0
  %v1148 = vadd.f32 %v1129, %v1146
  %v1149 = vadd.f32 %v1130, %v1146
  %v1150 = vadd.f32 %v1131, %v1146
  %v1151 = vadd.f32 %v1132, %v1146
  %v1152 = vadd.f32 %v1133, %v1146
  %v1153 = vadd.f32 %v1134, %v1146
  %v1154 = vadd.f32 %v1135, %v1146
  %v1155 = vadd.f32 %v1136, %v1146
  %v1156 = vadd.f32 %v1137, %v1146
  %v1157 = vadd.f32 %v1138, %v1146
  %v1158 = vadd.f32 %v1139, %v1146
  %v1159 = vadd.f32 %v1140, %v1146
  %v1160 = vadd.f32 %v1141, %v1146
  %v1161 = vadd.f32 %v1142, %v1146
  %v1162 = vadd.f32 %v1143, %v1146
  %v1163 = vadd.f32 %v1144, %v1146
  %v1164 = vpack.c.bf16 %v772, %v772
  %v1165 = vpack.c.bf16 %v773, %v773
  %v1168 = vunpack.c.l.b16 %v1164
  %v1169 = vunpack.c.l.b16 %v1165
  %v1170 = vpack.c.b16 %v1169, %v1168
  %v1175 = vunpack.c.l.b16 %v129
  %v1176 = vunpack.c.l.b16 %v130
  %v1177 = vunpack.c.l.b16 %v131
  %v1178 = vunpack.c.l.b16 %v132
  %v1179 = vpack.c.b16 %v1176, %v1175
  %v1180 = vpack.c.b16 %v1178, %v1177
  %v1184 = vsel %vm374, %v1170, 0
  %1186 = vmatpush.bf16.msra.mxu0 0
  %1187 = vmatpush.bf16.msra.mxu0 0
  %1188 = vmatpush.bf16.msra.mxu0 0
  %1189 = vmatpush.bf16.msra.mxu0 0
  %1190 = vmatpush.bf16.msra.mxu0 0
  %1191 = vmatpush.bf16.msra.mxu0 0
  %1192 = vmatpush.bf16.msra.mxu0 %v1180
  %1193 = vmatpush.bf16.msra.mxu0 %v1179
  %1194 = vmatmul.bf16.gmra.mxu0 %v1184
  %v1195 = vpop.f32.mrf.mxu0
  %v1196 = vadd.f32 0.0, %v1195
  %v1197 = vpop.f32.mrf.mxu0
  %v1198 = vadd.f32 0.0, %v1197
  %1199 = vdwg.mxu0
  %v1204 = vunpack.c.l.b16 %v133
  %v1205 = vunpack.c.l.b16 %v134
  %v1206 = vunpack.c.l.b16 %v135
  %v1207 = vunpack.c.l.b16 %v136
  %v1208 = vpack.c.b16 %v1205, %v1204
  %v1209 = vpack.c.b16 %v1207, %v1206
  %1212 = vmatpush.bf16.msra.mxu0 0
  %1213 = vmatpush.bf16.msra.mxu0 0
  %1214 = vmatpush.bf16.msra.mxu0 0
  %1215 = vmatpush.bf16.msra.mxu0 0
  %1216 = vmatpush.bf16.msra.mxu0 0
  %1217 = vmatpush.bf16.msra.mxu0 0
  %1218 = vmatpush.bf16.msra.mxu0 %v1209
  %1219 = vmatpush.bf16.msra.mxu0 %v1208
  %1220 = vmatmul.bf16.gmra.mxu0 %v1184
  %v1221 = vpop.f32.mrf.mxu0
  %v1222 = vadd.f32 0.0, %v1221
  %v1223 = vpop.f32.mrf.mxu0
  %v1224 = vadd.f32 0.0, %v1223
  %1225 = vdwg.mxu0
  %v1230 = vunpack.c.l.b16 %v137
  %v1231 = vunpack.c.l.b16 %v138
  %v1232 = vunpack.c.l.b16 %v139
  %v1233 = vunpack.c.l.b16 %v140
  %v1234 = vpack.c.b16 %v1231, %v1230
  %v1235 = vpack.c.b16 %v1233, %v1232
  %1238 = vmatpush.bf16.msra.mxu0 0
  %1239 = vmatpush.bf16.msra.mxu0 0
  %1240 = vmatpush.bf16.msra.mxu0 0
  %1241 = vmatpush.bf16.msra.mxu0 0
  %1242 = vmatpush.bf16.msra.mxu0 0
  %1243 = vmatpush.bf16.msra.mxu0 0
  %1244 = vmatpush.bf16.msra.mxu0 %v1235
  %1245 = vmatpush.bf16.msra.mxu0 %v1234
  %1246 = vmatmul.bf16.gmra.mxu0 %v1184
  %v1247 = vpop.f32.mrf.mxu0
  %v1248 = vadd.f32 0.0, %v1247
  %v1249 = vpop.f32.mrf.mxu0
  %v1250 = vadd.f32 0.0, %v1249
  %1251 = vdwg.mxu0
  %v1256 = vunpack.c.l.b16 %v141
  %v1257 = vunpack.c.l.b16 %v142
  %v1258 = vunpack.c.l.b16 %v143
  %v1259 = vunpack.c.l.b16 %v144
  %v1260 = vpack.c.b16 %v1257, %v1256
  %v1261 = vpack.c.b16 %v1259, %v1258
  %1264 = vmatpush.bf16.msra.mxu0 0
  %1265 = vmatpush.bf16.msra.mxu0 0
  %1266 = vmatpush.bf16.msra.mxu0 0
  %1267 = vmatpush.bf16.msra.mxu0 0
  %1268 = vmatpush.bf16.msra.mxu0 0
  %1269 = vmatpush.bf16.msra.mxu0 0
  %1270 = vmatpush.bf16.msra.mxu0 %v1261
  %1271 = vmatpush.bf16.msra.mxu0 %v1260
  %1272 = vmatmul.bf16.gmra.mxu0 %v1184
  %v1273 = vpop.f32.mrf.mxu0
  %v1274 = vadd.f32 0.0, %v1273
  %v1275 = vpop.f32.mrf.mxu0
  %v1276 = vadd.f32 0.0, %v1275
  %1277 = vdwg.mxu0
  %v1278 = vpack.c.bf16 %v1148, %v1148
  %v1279 = vpack.c.bf16 %v1149, %v1149
  %v1280 = vpack.c.bf16 %v1150, %v1150
  %v1281 = vpack.c.bf16 %v1151, %v1151
  %v1282 = vpack.c.bf16 %v1152, %v1152
  %v1283 = vpack.c.bf16 %v1153, %v1153
  %v1284 = vpack.c.bf16 %v1154, %v1154
  %v1285 = vpack.c.bf16 %v1155, %v1155
  %v1286 = vpack.c.bf16 %v1156, %v1156
  %v1287 = vpack.c.bf16 %v1157, %v1157
  %v1288 = vpack.c.bf16 %v1158, %v1158
  %v1289 = vpack.c.bf16 %v1159, %v1159
  %v1290 = vpack.c.bf16 %v1160, %v1160
  %v1291 = vpack.c.bf16 %v1161, %v1161
  %v1292 = vpack.c.bf16 %v1162, %v1162
  %v1293 = vpack.c.bf16 %v1163, %v1163
  %v1302 = vunpack.c.l.b16 %v1278
  %v1303 = vunpack.c.l.b16 %v1279
  %v1304 = vunpack.c.l.b16 %v1280
  %v1305 = vunpack.c.l.b16 %v1281
  %v1306 = vunpack.c.l.b16 %v1282
  %v1307 = vunpack.c.l.b16 %v1283
  %v1308 = vunpack.c.l.b16 %v1284
  %v1309 = vunpack.c.l.b16 %v1285
  %v1310 = vpack.c.b16 %v1303, %v1302
  %v1311 = vpack.c.b16 %v1305, %v1304
  %v1312 = vpack.c.b16 %v1307, %v1306
  %v1313 = vpack.c.b16 %v1309, %v1308
  %v1318 = vunpack.c.l.b16 %v145
  %v1319 = vunpack.c.l.b16 %v146
  %v1320 = vunpack.c.l.b16 %v147
  %v1321 = vunpack.c.l.b16 %v148
  %v1322 = vpack.c.b16 %v1319, %v1318
  %v1323 = vpack.c.b16 %v1321, %v1320
  %v1327 = vsel %vm374, %v1310, 0
  %v1330 = vsel %vm374, %v1311, 0
  %v1333 = vsel %vm374, %v1312, 0
  %v1336 = vsel %vm374, %v1313, 0
  %1338 = vmatpush.bf16.msra.mxu0 0
  %1339 = vmatpush.bf16.msra.mxu0 0
  %1340 = vmatpush.bf16.msra.mxu0 0
  %1341 = vmatpush.bf16.msra.mxu0 0
  %1342 = vmatpush.bf16.msra.mxu0 0
  %1343 = vmatpush.bf16.msra.mxu0 0
  %1344 = vmatpush.bf16.msra.mxu0 %v1323
  %1345 = vmatpush.bf16.msra.mxu0 %v1322
  %1346 = vmatmul.bf16.gmra.mxu0 %v1327
  %v1347 = vpop.f32.mrf.mxu0
  %v1348 = vadd.f32 0.0, %v1347
  %v1349 = vpop.f32.mrf.mxu0
  %v1350 = vadd.f32 0.0, %v1349
  %1351 = vmatmul.bf16.gmra.mxu0 %v1330
  %v1352 = vpop.f32.mrf.mxu0
  %v1353 = vadd.f32 0.0, %v1352
  %v1354 = vpop.f32.mrf.mxu0
  %v1355 = vadd.f32 0.0, %v1354
  %1356 = vmatmul.bf16.gmra.mxu0 %v1333
  %v1357 = vpop.f32.mrf.mxu0
  %v1358 = vadd.f32 0.0, %v1357
  %v1359 = vpop.f32.mrf.mxu0
  %v1360 = vadd.f32 0.0, %v1359
  %1361 = vmatmul.bf16.gmra.mxu0 %v1336
  %v1362 = vpop.f32.mrf.mxu0
  %v1363 = vadd.f32 0.0, %v1362
  %v1364 = vpop.f32.mrf.mxu0
  %v1365 = vadd.f32 0.0, %v1364
  %1366 = vdwg.mxu0
  %v1371 = vunpack.c.l.b16 %v149
  %v1372 = vunpack.c.l.b16 %v150
  %v1373 = vunpack.c.l.b16 %v151
  %v1374 = vunpack.c.l.b16 %v152
  %v1375 = vpack.c.b16 %v1372, %v1371
  %v1376 = vpack.c.b16 %v1374, %v1373
  %1379 = vmatpush.bf16.msra.mxu0 0
  %1380 = vmatpush.bf16.msra.mxu0 0
  %1381 = vmatpush.bf16.msra.mxu0 0
  %1382 = vmatpush.bf16.msra.mxu0 0
  %1383 = vmatpush.bf16.msra.mxu0 0
  %1384 = vmatpush.bf16.msra.mxu0 0
  %1385 = vmatpush.bf16.msra.mxu0 %v1376
  %1386 = vmatpush.bf16.msra.mxu0 %v1375
  %1387 = vmatmul.bf16.gmra.mxu0 %v1327
  %v1388 = vpop.f32.mrf.mxu0
  %v1389 = vadd.f32 0.0, %v1388
  %v1390 = vpop.f32.mrf.mxu0
  %v1391 = vadd.f32 0.0, %v1390
  %1392 = vmatmul.bf16.gmra.mxu0 %v1330
  %v1393 = vpop.f32.mrf.mxu0
  %v1394 = vadd.f32 0.0, %v1393
  %v1395 = vpop.f32.mrf.mxu0
  %v1396 = vadd.f32 0.0, %v1395
  %1397 = vmatmul.bf16.gmra.mxu0 %v1333
  %v1398 = vpop.f32.mrf.mxu0
  %v1399 = vadd.f32 0.0, %v1398
  %v1400 = vpop.f32.mrf.mxu0
  %v1401 = vadd.f32 0.0, %v1400
  %1402 = vmatmul.bf16.gmra.mxu0 %v1336
  %v1403 = vpop.f32.mrf.mxu0
  %v1404 = vadd.f32 0.0, %v1403
  %v1405 = vpop.f32.mrf.mxu0
  %v1406 = vadd.f32 0.0, %v1405
  %1407 = vdwg.mxu0
  %v1412 = vunpack.c.l.b16 %v153
  %v1413 = vunpack.c.l.b16 %v154
  %v1414 = vunpack.c.l.b16 %v155
  %v1415 = vunpack.c.l.b16 %v156
  %v1416 = vpack.c.b16 %v1413, %v1412
  %v1417 = vpack.c.b16 %v1415, %v1414
  %1420 = vmatpush.bf16.msra.mxu0 0
  %1421 = vmatpush.bf16.msra.mxu0 0
  %1422 = vmatpush.bf16.msra.mxu0 0
  %1423 = vmatpush.bf16.msra.mxu0 0
  %1424 = vmatpush.bf16.msra.mxu0 0
  %1425 = vmatpush.bf16.msra.mxu0 0
  %1426 = vmatpush.bf16.msra.mxu0 %v1417
  %1427 = vmatpush.bf16.msra.mxu0 %v1416
  %1428 = vmatmul.bf16.gmra.mxu0 %v1327
  %v1429 = vpop.f32.mrf.mxu0
  %v1430 = vadd.f32 0.0, %v1429
  %v1431 = vpop.f32.mrf.mxu0
  %v1432 = vadd.f32 0.0, %v1431
  %1433 = vmatmul.bf16.gmra.mxu0 %v1330
  %v1434 = vpop.f32.mrf.mxu0
  %v1435 = vadd.f32 0.0, %v1434
  %v1436 = vpop.f32.mrf.mxu0
  %v1437 = vadd.f32 0.0, %v1436
  %1438 = vmatmul.bf16.gmra.mxu0 %v1333
  %v1439 = vpop.f32.mrf.mxu0
  %v1440 = vadd.f32 0.0, %v1439
  %v1441 = vpop.f32.mrf.mxu0
  %v1442 = vadd.f32 0.0, %v1441
  %1443 = vmatmul.bf16.gmra.mxu0 %v1336
  %v1444 = vpop.f32.mrf.mxu0
  %v1445 = vadd.f32 0.0, %v1444
  %v1446 = vpop.f32.mrf.mxu0
  %v1447 = vadd.f32 0.0, %v1446
  %1448 = vdwg.mxu0
  %v1453 = vunpack.c.l.b16 %v157
  %v1454 = vunpack.c.l.b16 %v158
  %v1455 = vunpack.c.l.b16 %v159
  %v1456 = vunpack.c.l.b16 %v160
  %v1457 = vpack.c.b16 %v1454, %v1453
  %v1458 = vpack.c.b16 %v1456, %v1455
  %1461 = vmatpush.bf16.msra.mxu0 0
  %1462 = vmatpush.bf16.msra.mxu0 0
  %1463 = vmatpush.bf16.msra.mxu0 0
  %1464 = vmatpush.bf16.msra.mxu0 0
  %1465 = vmatpush.bf16.msra.mxu0 0
  %1466 = vmatpush.bf16.msra.mxu0 0
  %1467 = vmatpush.bf16.msra.mxu0 %v1458
  %1468 = vmatpush.bf16.msra.mxu0 %v1457
  %1469 = vmatmul.bf16.gmra.mxu0 %v1327
  %v1470 = vpop.f32.mrf.mxu0
  %v1471 = vadd.f32 0.0, %v1470
  %v1472 = vpop.f32.mrf.mxu0
  %v1473 = vadd.f32 0.0, %v1472
  %1474 = vmatmul.bf16.gmra.mxu0 %v1330
  %v1475 = vpop.f32.mrf.mxu0
  %v1476 = vadd.f32 0.0, %v1475
  %v1477 = vpop.f32.mrf.mxu0
  %v1478 = vadd.f32 0.0, %v1477
  %1479 = vmatmul.bf16.gmra.mxu0 %v1333
  %v1480 = vpop.f32.mrf.mxu0
  %v1481 = vadd.f32 0.0, %v1480
  %v1482 = vpop.f32.mrf.mxu0
  %v1483 = vadd.f32 0.0, %v1482
  %1484 = vmatmul.bf16.gmra.mxu0 %v1336
  %v1485 = vpop.f32.mrf.mxu0
  %v1486 = vadd.f32 0.0, %v1485
  %v1487 = vpop.f32.mrf.mxu0
  %v1488 = vadd.f32 0.0, %v1487
  %1489 = vdwg.mxu0
  %v1498 = vunpack.c.l.b16 %v1286
  %v1499 = vunpack.c.l.b16 %v1287
  %v1500 = vunpack.c.l.b16 %v1288
  %v1501 = vunpack.c.l.b16 %v1289
  %v1502 = vunpack.c.l.b16 %v1290
  %v1503 = vunpack.c.l.b16 %v1291
  %v1504 = vunpack.c.l.b16 %v1292
  %v1505 = vunpack.c.l.b16 %v1293
  %v1506 = vpack.c.b16 %v1499, %v1498
  %v1507 = vpack.c.b16 %v1501, %v1500
  %v1508 = vpack.c.b16 %v1503, %v1502
  %v1509 = vpack.c.b16 %v1505, %v1504
  %v1511 = vsel %vm374, %v1506, 0
  %v1514 = vsel %vm374, %v1507, 0
  %v1517 = vsel %vm374, %v1508, 0
  %v1520 = vsel %vm374, %v1509, 0
  %1522 = vmatpush.bf16.msra.mxu0 0
  %1523 = vmatpush.bf16.msra.mxu0 0
  %1524 = vmatpush.bf16.msra.mxu0 0
  %1525 = vmatpush.bf16.msra.mxu0 0
  %1526 = vmatpush.bf16.msra.mxu0 0
  %1527 = vmatpush.bf16.msra.mxu0 0
  %1528 = vmatpush.bf16.msra.mxu0 %v1323
  %1529 = vmatpush.bf16.msra.mxu0 %v1322
  %1530 = vmatmul.bf16.gmra.mxu0 %v1511
  %v1531 = vpop.f32.mrf.mxu0
  %v1532 = vadd.f32 0.0, %v1531
  %v1533 = vpop.f32.mrf.mxu0
  %v1534 = vadd.f32 0.0, %v1533
  %1535 = vmatmul.bf16.gmra.mxu0 %v1514
  %v1536 = vpop.f32.mrf.mxu0
  %v1537 = vadd.f32 0.0, %v1536
  %v1538 = vpop.f32.mrf.mxu0
  %v1539 = vadd.f32 0.0, %v1538
  %1540 = vmatmul.bf16.gmra.mxu0 %v1517
  %v1541 = vpop.f32.mrf.mxu0
  %v1542 = vadd.f32 0.0, %v1541
  %v1543 = vpop.f32.mrf.mxu0
  %v1544 = vadd.f32 0.0, %v1543
  %1545 = vmatmul.bf16.gmra.mxu0 %v1520
  %v1546 = vpop.f32.mrf.mxu0
  %v1547 = vadd.f32 0.0, %v1546
  %v1548 = vpop.f32.mrf.mxu0
  %v1549 = vadd.f32 0.0, %v1548
  %1550 = vdwg.mxu0
  %1551 = vmatpush.bf16.msra.mxu0 0
  %1552 = vmatpush.bf16.msra.mxu0 0
  %1553 = vmatpush.bf16.msra.mxu0 0
  %1554 = vmatpush.bf16.msra.mxu0 0
  %1555 = vmatpush.bf16.msra.mxu0 0
  %1556 = vmatpush.bf16.msra.mxu0 0
  %1557 = vmatpush.bf16.msra.mxu0 %v1376
  %1558 = vmatpush.bf16.msra.mxu0 %v1375
  %1559 = vmatmul.bf16.gmra.mxu0 %v1511
  %v1560 = vpop.f32.mrf.mxu0
  %v1561 = vadd.f32 0.0, %v1560
  %v1562 = vpop.f32.mrf.mxu0
  %v1563 = vadd.f32 0.0, %v1562
  %1564 = vmatmul.bf16.gmra.mxu0 %v1514
  %v1565 = vpop.f32.mrf.mxu0
  %v1566 = vadd.f32 0.0, %v1565
  %v1567 = vpop.f32.mrf.mxu0
  %v1568 = vadd.f32 0.0, %v1567
  %1569 = vmatmul.bf16.gmra.mxu0 %v1517
  %v1570 = vpop.f32.mrf.mxu0
  %v1571 = vadd.f32 0.0, %v1570
  %v1572 = vpop.f32.mrf.mxu0
  %v1573 = vadd.f32 0.0, %v1572
  %1574 = vmatmul.bf16.gmra.mxu0 %v1520
  %v1575 = vpop.f32.mrf.mxu0
  %v1576 = vadd.f32 0.0, %v1575
  %v1577 = vpop.f32.mrf.mxu0
  %v1578 = vadd.f32 0.0, %v1577
  %1579 = vdwg.mxu0
  %1580 = vmatpush.bf16.msra.mxu0 0
  %1581 = vmatpush.bf16.msra.mxu0 0
  %1582 = vmatpush.bf16.msra.mxu0 0
  %1583 = vmatpush.bf16.msra.mxu0 0
  %1584 = vmatpush.bf16.msra.mxu0 0
  %1585 = vmatpush.bf16.msra.mxu0 0
  %1586 = vmatpush.bf16.msra.mxu0 %v1417
  %1587 = vmatpush.bf16.msra.mxu0 %v1416
  %1588 = vmatmul.bf16.gmra.mxu0 %v1511
  %v1589 = vpop.f32.mrf.mxu0
  %v1590 = vadd.f32 0.0, %v1589
  %v1591 = vpop.f32.mrf.mxu0
  %v1592 = vadd.f32 0.0, %v1591
  %1593 = vmatmul.bf16.gmra.mxu0 %v1514
  %v1594 = vpop.f32.mrf.mxu0
  %v1595 = vadd.f32 0.0, %v1594
  %v1596 = vpop.f32.mrf.mxu0
  %v1597 = vadd.f32 0.0, %v1596
  %1598 = vmatmul.bf16.gmra.mxu0 %v1517
  %v1599 = vpop.f32.mrf.mxu0
  %v1600 = vadd.f32 0.0, %v1599
  %v1601 = vpop.f32.mrf.mxu0
  %v1602 = vadd.f32 0.0, %v1601
  %1603 = vmatmul.bf16.gmra.mxu0 %v1520
  %v1604 = vpop.f32.mrf.mxu0
  %v1605 = vadd.f32 0.0, %v1604
  %v1606 = vpop.f32.mrf.mxu0
  %v1607 = vadd.f32 0.0, %v1606
  %1608 = vdwg.mxu0
  %1609 = vmatpush.bf16.msra.mxu0 0
  %1610 = vmatpush.bf16.msra.mxu0 0
  %1611 = vmatpush.bf16.msra.mxu0 0
  %1612 = vmatpush.bf16.msra.mxu0 0
  %1613 = vmatpush.bf16.msra.mxu0 0
  %1614 = vmatpush.bf16.msra.mxu0 0
  %1615 = vmatpush.bf16.msra.mxu0 %v1458
  %1616 = vmatpush.bf16.msra.mxu0 %v1457
  %1617 = vmatmul.bf16.gmra.mxu0 %v1511
  %v1618 = vpop.f32.mrf.mxu0
  %v1619 = vadd.f32 0.0, %v1618
  %v1620 = vpop.f32.mrf.mxu0
  %v1621 = vadd.f32 0.0, %v1620
  %1622 = vmatmul.bf16.gmra.mxu0 %v1514
  %v1623 = vpop.f32.mrf.mxu0
  %v1624 = vadd.f32 0.0, %v1623
  %v1625 = vpop.f32.mrf.mxu0
  %v1626 = vadd.f32 0.0, %v1625
  %1627 = vmatmul.bf16.gmra.mxu0 %v1517
  %v1628 = vpop.f32.mrf.mxu0
  %v1629 = vadd.f32 0.0, %v1628
  %v1630 = vpop.f32.mrf.mxu0
  %v1631 = vadd.f32 0.0, %v1630
  %1632 = vmatmul.bf16.gmra.mxu0 %v1520
  %v1633 = vpop.f32.mrf.mxu0
  %v1634 = vadd.f32 0.0, %v1633
  %v1635 = vpop.f32.mrf.mxu0
  %v1636 = vadd.f32 0.0, %v1635
  %1637 = vdwg.mxu0
  %v1642 = vunpack.c.l.b16 %v161
  %v1643 = vunpack.c.l.b16 %v162
  %v1644 = vunpack.c.l.b16 %v163
  %v1645 = vunpack.c.l.b16 %v164
  %v1646 = vpack.c.b16 %v1643, %v1642
  %v1647 = vpack.c.b16 %v1645, %v1644
  %1650 = vmatpush.bf16.msra.mxu0 0
  %1651 = vmatpush.bf16.msra.mxu0 0
  %1652 = vmatpush.bf16.msra.mxu0 0
  %1653 = vmatpush.bf16.msra.mxu0 0
  %1654 = vmatpush.bf16.msra.mxu0 0
  %1655 = vmatpush.bf16.msra.mxu0 0
  %1656 = vmatpush.bf16.msra.mxu0 %v1647
  %1657 = vmatpush.bf16.msra.mxu0 %v1646
  %1658 = vmatmul.bf16.gmra.mxu0 %v1327
  %v1659 = vpop.f32.mrf.mxu0
  %v1660 = vadd.f32 0.0, %v1659
  %v1661 = vpop.f32.mrf.mxu0
  %v1662 = vadd.f32 0.0, %v1661
  %1663 = vmatmul.bf16.gmra.mxu0 %v1330
  %v1664 = vpop.f32.mrf.mxu0
  %v1665 = vadd.f32 0.0, %v1664
  %v1666 = vpop.f32.mrf.mxu0
  %v1667 = vadd.f32 0.0, %v1666
  %1668 = vmatmul.bf16.gmra.mxu0 %v1333
  %v1669 = vpop.f32.mrf.mxu0
  %v1670 = vadd.f32 0.0, %v1669
  %v1671 = vpop.f32.mrf.mxu0
  %v1672 = vadd.f32 0.0, %v1671
  %1673 = vmatmul.bf16.gmra.mxu0 %v1336
  %v1674 = vpop.f32.mrf.mxu0
  %v1675 = vadd.f32 0.0, %v1674
  %v1676 = vpop.f32.mrf.mxu0
  %v1677 = vadd.f32 0.0, %v1676
  %1678 = vdwg.mxu0
  %v1683 = vunpack.c.l.b16 %v165
  %v1684 = vunpack.c.l.b16 %v166
  %v1685 = vunpack.c.l.b16 %v167
  %v1686 = vunpack.c.l.b16 %v168
  %v1687 = vpack.c.b16 %v1684, %v1683
  %v1688 = vpack.c.b16 %v1686, %v1685
  %1691 = vmatpush.bf16.msra.mxu0 0
  %1692 = vmatpush.bf16.msra.mxu0 0
  %1693 = vmatpush.bf16.msra.mxu0 0
  %1694 = vmatpush.bf16.msra.mxu0 0
  %1695 = vmatpush.bf16.msra.mxu0 0
  %1696 = vmatpush.bf16.msra.mxu0 0
  %1697 = vmatpush.bf16.msra.mxu0 %v1688
  %1698 = vmatpush.bf16.msra.mxu0 %v1687
  %1699 = vmatmul.bf16.gmra.mxu0 %v1327
  %v1700 = vpop.f32.mrf.mxu0
  %v1701 = vadd.f32 0.0, %v1700
  %v1702 = vpop.f32.mrf.mxu0
  %v1703 = vadd.f32 0.0, %v1702
  %1704 = vmatmul.bf16.gmra.mxu0 %v1330
  %v1705 = vpop.f32.mrf.mxu0
  %v1706 = vadd.f32 0.0, %v1705
  %v1707 = vpop.f32.mrf.mxu0
  %v1708 = vadd.f32 0.0, %v1707
  %1709 = vmatmul.bf16.gmra.mxu0 %v1333
  %v1710 = vpop.f32.mrf.mxu0
  %v1711 = vadd.f32 0.0, %v1710
  %v1712 = vpop.f32.mrf.mxu0
  %v1713 = vadd.f32 0.0, %v1712
  %1714 = vmatmul.bf16.gmra.mxu0 %v1336
  %v1715 = vpop.f32.mrf.mxu0
  %v1716 = vadd.f32 0.0, %v1715
  %v1717 = vpop.f32.mrf.mxu0
  %v1718 = vadd.f32 0.0, %v1717
  %1719 = vdwg.mxu0
  %v1724 = vunpack.c.l.b16 %v169
  %v1725 = vunpack.c.l.b16 %v170
  %v1726 = vunpack.c.l.b16 %v171
  %v1727 = vunpack.c.l.b16 %v172
  %v1728 = vpack.c.b16 %v1725, %v1724
  %v1729 = vpack.c.b16 %v1727, %v1726
  %1732 = vmatpush.bf16.msra.mxu0 0
  %1733 = vmatpush.bf16.msra.mxu0 0
  %1734 = vmatpush.bf16.msra.mxu0 0
  %1735 = vmatpush.bf16.msra.mxu0 0
  %1736 = vmatpush.bf16.msra.mxu0 0
  %1737 = vmatpush.bf16.msra.mxu0 0
  %1738 = vmatpush.bf16.msra.mxu0 %v1729
  %1739 = vmatpush.bf16.msra.mxu0 %v1728
  %1740 = vmatmul.bf16.gmra.mxu0 %v1327
  %v1741 = vpop.f32.mrf.mxu0
  %v1742 = vadd.f32 0.0, %v1741
  %v1743 = vpop.f32.mrf.mxu0
  %v1744 = vadd.f32 0.0, %v1743
  %1745 = vmatmul.bf16.gmra.mxu0 %v1330
  %v1746 = vpop.f32.mrf.mxu0
  %v1747 = vadd.f32 0.0, %v1746
  %v1748 = vpop.f32.mrf.mxu0
  %v1749 = vadd.f32 0.0, %v1748
  %1750 = vmatmul.bf16.gmra.mxu0 %v1333
  %v1751 = vpop.f32.mrf.mxu0
  %v1752 = vadd.f32 0.0, %v1751
  %v1753 = vpop.f32.mrf.mxu0
  %v1754 = vadd.f32 0.0, %v1753
  %1755 = vmatmul.bf16.gmra.mxu0 %v1336
  %v1756 = vpop.f32.mrf.mxu0
  %v1757 = vadd.f32 0.0, %v1756
  %v1758 = vpop.f32.mrf.mxu0
  %v1759 = vadd.f32 0.0, %v1758
  %1760 = vdwg.mxu0
  %v1765 = vunpack.c.l.b16 %v173
  %v1766 = vunpack.c.l.b16 %v174
  %v1767 = vunpack.c.l.b16 %v175
  %v1768 = vunpack.c.l.b16 %v176
  %v1769 = vpack.c.b16 %v1766, %v1765
  %v1770 = vpack.c.b16 %v1768, %v1767
  %1773 = vmatpush.bf16.msra.mxu0 0
  %1774 = vmatpush.bf16.msra.mxu0 0
  %1775 = vmatpush.bf16.msra.mxu0 0
  %1776 = vmatpush.bf16.msra.mxu0 0
  %1777 = vmatpush.bf16.msra.mxu0 0
  %1778 = vmatpush.bf16.msra.mxu0 0
  %1779 = vmatpush.bf16.msra.mxu0 %v1770
  %1780 = vmatpush.bf16.msra.mxu0 %v1769
  %1781 = vmatmul.bf16.gmra.mxu0 %v1327
  %v1782 = vpop.f32.mrf.mxu0
  %v1783 = vadd.f32 0.0, %v1782
  %v1784 = vpop.f32.mrf.mxu0
  %v1785 = vadd.f32 0.0, %v1784
  %1786 = vmatmul.bf16.gmra.mxu0 %v1330
  %v1787 = vpop.f32.mrf.mxu0
  %v1788 = vadd.f32 0.0, %v1787
  %v1789 = vpop.f32.mrf.mxu0
  %v1790 = vadd.f32 0.0, %v1789
  %1791 = vmatmul.bf16.gmra.mxu0 %v1333
  %v1792 = vpop.f32.mrf.mxu0
  %v1793 = vadd.f32 0.0, %v1792
  %v1794 = vpop.f32.mrf.mxu0
  %v1795 = vadd.f32 0.0, %v1794
  %1796 = vmatmul.bf16.gmra.mxu0 %v1336
  %v1797 = vpop.f32.mrf.mxu0
  %v1798 = vadd.f32 0.0, %v1797
  %v1799 = vpop.f32.mrf.mxu0
  %v1800 = vadd.f32 0.0, %v1799
  %1801 = vdwg.mxu0
  %1802 = vmatpush.bf16.msra.mxu0 0
  %1803 = vmatpush.bf16.msra.mxu0 0
  %1804 = vmatpush.bf16.msra.mxu0 0
  %1805 = vmatpush.bf16.msra.mxu0 0
  %1806 = vmatpush.bf16.msra.mxu0 0
  %1807 = vmatpush.bf16.msra.mxu0 0
  %1808 = vmatpush.bf16.msra.mxu0 %v1647
  %1809 = vmatpush.bf16.msra.mxu0 %v1646
  %1810 = vmatmul.bf16.gmra.mxu0 %v1511
  %v1811 = vpop.f32.mrf.mxu0
  %v1812 = vadd.f32 0.0, %v1811
  %v1813 = vpop.f32.mrf.mxu0
  %v1814 = vadd.f32 0.0, %v1813
  %1815 = vmatmul.bf16.gmra.mxu0 %v1514
  %v1816 = vpop.f32.mrf.mxu0
  %v1817 = vadd.f32 0.0, %v1816
  %v1818 = vpop.f32.mrf.mxu0
  %v1819 = vadd.f32 0.0, %v1818
  %1820 = vmatmul.bf16.gmra.mxu0 %v1517
  %v1821 = vpop.f32.mrf.mxu0
  %v1822 = vadd.f32 0.0, %v1821
  %v1823 = vpop.f32.mrf.mxu0
  %v1824 = vadd.f32 0.0, %v1823
  %1825 = vmatmul.bf16.gmra.mxu0 %v1520
  %v1826 = vpop.f32.mrf.mxu0
  %v1827 = vadd.f32 0.0, %v1826
  %v1828 = vpop.f32.mrf.mxu0
  %v1829 = vadd.f32 0.0, %v1828
  %1830 = vdwg.mxu0
  %1831 = vmatpush.bf16.msra.mxu0 0
  %1832 = vmatpush.bf16.msra.mxu0 0
  %1833 = vmatpush.bf16.msra.mxu0 0
  %1834 = vmatpush.bf16.msra.mxu0 0
  %1835 = vmatpush.bf16.msra.mxu0 0
  %1836 = vmatpush.bf16.msra.mxu0 0
  %1837 = vmatpush.bf16.msra.mxu0 %v1688
  %1838 = vmatpush.bf16.msra.mxu0 %v1687
  %1839 = vmatmul.bf16.gmra.mxu0 %v1511
  %v1840 = vpop.f32.mrf.mxu0
  %v1841 = vadd.f32 0.0, %v1840
  %v1842 = vpop.f32.mrf.mxu0
  %v1843 = vadd.f32 0.0, %v1842
  %1844 = vmatmul.bf16.gmra.mxu0 %v1514
  %v1845 = vpop.f32.mrf.mxu0
  %v1846 = vadd.f32 0.0, %v1845
  %v1847 = vpop.f32.mrf.mxu0
  %v1848 = vadd.f32 0.0, %v1847
  %1849 = vmatmul.bf16.gmra.mxu0 %v1517
  %v1850 = vpop.f32.mrf.mxu0
  %v1851 = vadd.f32 0.0, %v1850
  %v1852 = vpop.f32.mrf.mxu0
  %v1853 = vadd.f32 0.0, %v1852
  %1854 = vmatmul.bf16.gmra.mxu0 %v1520
  %v1855 = vpop.f32.mrf.mxu0
  %v1856 = vadd.f32 0.0, %v1855
  %v1857 = vpop.f32.mrf.mxu0
  %v1858 = vadd.f32 0.0, %v1857
  %1859 = vdwg.mxu0
  %1860 = vmatpush.bf16.msra.mxu0 0
  %1861 = vmatpush.bf16.msra.mxu0 0
  %1862 = vmatpush.bf16.msra.mxu0 0
  %1863 = vmatpush.bf16.msra.mxu0 0
  %1864 = vmatpush.bf16.msra.mxu0 0
  %1865 = vmatpush.bf16.msra.mxu0 0
  %1866 = vmatpush.bf16.msra.mxu0 %v1729
  %1867 = vmatpush.bf16.msra.mxu0 %v1728
  %1868 = vmatmul.bf16.gmra.mxu0 %v1511
  %v1869 = vpop.f32.mrf.mxu0
  %v1870 = vadd.f32 0.0, %v1869
  %v1871 = vpop.f32.mrf.mxu0
  %v1872 = vadd.f32 0.0, %v1871
  %1873 = vmatmul.bf16.gmra.mxu0 %v1514
  %v1874 = vpop.f32.mrf.mxu0
  %v1875 = vadd.f32 0.0, %v1874
  %v1876 = vpop.f32.mrf.mxu0
  %v1877 = vadd.f32 0.0, %v1876
  %1878 = vmatmul.bf16.gmra.mxu0 %v1517
  %v1879 = vpop.f32.mrf.mxu0
  %v1880 = vadd.f32 0.0, %v1879
  %v1881 = vpop.f32.mrf.mxu0
  %v1882 = vadd.f32 0.0, %v1881
  %1883 = vmatmul.bf16.gmra.mxu0 %v1520
  %v1884 = vpop.f32.mrf.mxu0
  %v1885 = vadd.f32 0.0, %v1884
  %v1886 = vpop.f32.mrf.mxu0
  %v1887 = vadd.f32 0.0, %v1886
  %1888 = vdwg.mxu0
  %1889 = vmatpush.bf16.msra.mxu0 0
  %1890 = vmatpush.bf16.msra.mxu0 0
  %1891 = vmatpush.bf16.msra.mxu0 0
  %1892 = vmatpush.bf16.msra.mxu0 0
  %1893 = vmatpush.bf16.msra.mxu0 0
  %1894 = vmatpush.bf16.msra.mxu0 0
  %1895 = vmatpush.bf16.msra.mxu0 %v1770
  %1896 = vmatpush.bf16.msra.mxu0 %v1769
  %1897 = vmatmul.bf16.gmra.mxu0 %v1511
  %v1898 = vpop.f32.mrf.mxu0
  %v1899 = vadd.f32 0.0, %v1898
  %v1900 = vpop.f32.mrf.mxu0
  %v1901 = vadd.f32 0.0, %v1900
  %1902 = vmatmul.bf16.gmra.mxu0 %v1514
  %v1903 = vpop.f32.mrf.mxu0
  %v1904 = vadd.f32 0.0, %v1903
  %v1905 = vpop.f32.mrf.mxu0
  %v1906 = vadd.f32 0.0, %v1905
  %1907 = vmatmul.bf16.gmra.mxu0 %v1517
  %v1908 = vpop.f32.mrf.mxu0
  %v1909 = vadd.f32 0.0, %v1908
  %v1910 = vpop.f32.mrf.mxu0
  %v1911 = vadd.f32 0.0, %v1910
  %1912 = vmatmul.bf16.gmra.mxu0 %v1520
  %v1913 = vpop.f32.mrf.mxu0
  %v1914 = vadd.f32 0.0, %v1913
  %v1915 = vpop.f32.mrf.mxu0
  %v1916 = vadd.f32 0.0, %v1915
  %1917 = vdwg.mxu0
  %v1918 = vpack.c.bf16 %v1196, %v1196
  %v1919 = vpack.c.bf16 %v1198, %v1198
  %v1920 = vpack.c.bf16 %v1222, %v1222
  %v1921 = vpack.c.bf16 %v1224, %v1224
  %v1922 = vpack.c.bf16 %v1248, %v1248
  %v1923 = vpack.c.bf16 %v1250, %v1250
  %v1924 = vpack.c.bf16 %v1274, %v1274
  %v1925 = vpack.c.bf16 %v1276, %v1276
  %v1926 = vpack.c.bf16 %v1348, %v1348
  %v1927 = vpack.c.bf16 %v1350, %v1350
  %v1928 = vpack.c.bf16 %v1353, %v1353
  %v1929 = vpack.c.bf16 %v1355, %v1355
  %v1930 = vpack.c.bf16 %v1358, %v1358
  %v1931 = vpack.c.bf16 %v1360, %v1360
  %v1932 = vpack.c.bf16 %v1363, %v1363
  %v1933 = vpack.c.bf16 %v1365, %v1365
  %v1934 = vpack.c.bf16 %v1389, %v1389
  %v1935 = vpack.c.bf16 %v1391, %v1391
  %v1936 = vpack.c.bf16 %v1394, %v1394
  %v1937 = vpack.c.bf16 %v1396, %v1396
  %v1938 = vpack.c.bf16 %v1399, %v1399
  %v1939 = vpack.c.bf16 %v1401, %v1401
  %v1940 = vpack.c.bf16 %v1404, %v1404
  %v1941 = vpack.c.bf16 %v1406, %v1406
  %v1942 = vpack.c.bf16 %v1430, %v1430
  %v1943 = vpack.c.bf16 %v1432, %v1432
  %v1944 = vpack.c.bf16 %v1435, %v1435
  %v1945 = vpack.c.bf16 %v1437, %v1437
  %v1946 = vpack.c.bf16 %v1440, %v1440
  %v1947 = vpack.c.bf16 %v1442, %v1442
  %v1948 = vpack.c.bf16 %v1445, %v1445
  %v1949 = vpack.c.bf16 %v1447, %v1447
  %v1950 = vpack.c.bf16 %v1471, %v1471
  %v1951 = vpack.c.bf16 %v1473, %v1473
  %v1952 = vpack.c.bf16 %v1476, %v1476
  %v1953 = vpack.c.bf16 %v1478, %v1478
  %v1954 = vpack.c.bf16 %v1481, %v1481
  %v1955 = vpack.c.bf16 %v1483, %v1483
  %v1956 = vpack.c.bf16 %v1486, %v1486
  %v1957 = vpack.c.bf16 %v1488, %v1488
  %v1958 = vpack.c.bf16 %v1532, %v1532
  %v1959 = vpack.c.bf16 %v1534, %v1534
  %v1960 = vpack.c.bf16 %v1537, %v1537
  %v1961 = vpack.c.bf16 %v1539, %v1539
  %v1962 = vpack.c.bf16 %v1542, %v1542
  %v1963 = vpack.c.bf16 %v1544, %v1544
  %v1964 = vpack.c.bf16 %v1547, %v1547
  %v1965 = vpack.c.bf16 %v1549, %v1549
  %v1966 = vpack.c.bf16 %v1561, %v1561
  %v1967 = vpack.c.bf16 %v1563, %v1563
  %v1968 = vpack.c.bf16 %v1566, %v1566
  %v1969 = vpack.c.bf16 %v1568, %v1568
  %v1970 = vpack.c.bf16 %v1571, %v1571
  %v1971 = vpack.c.bf16 %v1573, %v1573
  %v1972 = vpack.c.bf16 %v1576, %v1576
  %v1973 = vpack.c.bf16 %v1578, %v1578
  %v1974 = vpack.c.bf16 %v1590, %v1590
  %v1975 = vpack.c.bf16 %v1592, %v1592
  %v1976 = vpack.c.bf16 %v1595, %v1595
  %v1977 = vpack.c.bf16 %v1597, %v1597
  %v1978 = vpack.c.bf16 %v1600, %v1600
  %v1979 = vpack.c.bf16 %v1602, %v1602
  %v1980 = vpack.c.bf16 %v1605, %v1605
  %v1981 = vpack.c.bf16 %v1607, %v1607
  %v1982 = vpack.c.bf16 %v1619, %v1619
  %v1983 = vpack.c.bf16 %v1621, %v1621
  %v1984 = vpack.c.bf16 %v1624, %v1624
  %v1985 = vpack.c.bf16 %v1626, %v1626
  %v1986 = vpack.c.bf16 %v1629, %v1629
  %v1987 = vpack.c.bf16 %v1631, %v1631
  %v1988 = vpack.c.bf16 %v1634, %v1634
  %v1989 = vpack.c.bf16 %v1636, %v1636
  %v1992 = vunpack.c.l.b16 %v1918
  %v1993 = vunpack.c.l.b16 %v1919
  %v1994 = vpack.c.b16 %v1993, %v1992
  %v2003 = vunpack.c.l.b16 %v1926
  %v2004 = vunpack.c.l.b16 %v1927
  %v2005 = vunpack.c.l.b16 %v1928
  %v2006 = vunpack.c.l.b16 %v1929
  %v2007 = vunpack.c.l.b16 %v1930
  %v2008 = vunpack.c.l.b16 %v1931
  %v2009 = vunpack.c.l.b16 %v1932
  %v2010 = vunpack.c.l.b16 %v1933
  %v2011 = vpack.c.b16 %v2004, %v2003
  %v2012 = vpack.c.b16 %v2006, %v2005
  %v2013 = vpack.c.b16 %v2008, %v2007
  %v2014 = vpack.c.b16 %v2010, %v2009
  %vm2015 = vcmask 64512
  %v2017 = vsel %vm2015, %v1994, 0
  %v2020 = vsel %vm2015, %v2011, 0
  %v2023 = vsel %vm2015, %v2012, 0
  %v2026 = vsel %vm2015, %v2013, 0
  %v2029 = vsel %vm2015, %v2014, 0
  %2031 = vmatpush.bf16.xpose.msra.mxu0 0
  %2032 = vmatpush.bf16.xpose.msra.mxu0 0
  %2033 = vmatpush.bf16.xpose.msra.mxu0 0
  %2034 = vmatpush.bf16.xpose.msra.mxu0 0
  %2035 = vmatpush.bf16.xpose.msra.mxu0 %v2029
  %2036 = vmatpush.bf16.xpose.msra.mxu0 %v2026
  %2037 = vmatpush.bf16.xpose.msra.mxu0 %v2023
  %2038 = vmatpush.bf16.xpose.msra.mxu0 %v2020
  %2039 = vmatmul.bf16.gmra.mxu0 %v2017
  %v2040 = vpop.f32.mrf.mxu0
  %v2041 = vadd.f32 0.0, %v2040
  %v2042 = vpop.f32.mrf.mxu0
  %v2043 = vadd.f32 0.0, %v2042
  %2044 = vdwg.mxu0
  %v2047 = vunpack.c.l.b16 %v1920
  %v2048 = vunpack.c.l.b16 %v1921
  %v2049 = vpack.c.b16 %v2048, %v2047
  %v2058 = vunpack.c.l.b16 %v1934
  %v2059 = vunpack.c.l.b16 %v1935
  %v2060 = vunpack.c.l.b16 %v1936
  %v2061 = vunpack.c.l.b16 %v1937
  %v2062 = vunpack.c.l.b16 %v1938
  %v2063 = vunpack.c.l.b16 %v1939
  %v2064 = vunpack.c.l.b16 %v1940
  %v2065 = vunpack.c.l.b16 %v1941
  %v2066 = vpack.c.b16 %v2059, %v2058
  %v2067 = vpack.c.b16 %v2061, %v2060
  %v2068 = vpack.c.b16 %v2063, %v2062
  %v2069 = vpack.c.b16 %v2065, %v2064
  %v2071 = vsel %vm2015, %v2049, 0
  %v2074 = vsel %vm2015, %v2066, 0
  %v2077 = vsel %vm2015, %v2067, 0
  %v2080 = vsel %vm2015, %v2068, 0
  %v2083 = vsel %vm2015, %v2069, 0
  %2085 = vmatpush.bf16.xpose.msra.mxu0 0
  %2086 = vmatpush.bf16.xpose.msra.mxu0 0
  %2087 = vmatpush.bf16.xpose.msra.mxu0 0
  %2088 = vmatpush.bf16.xpose.msra.mxu0 0
  %2089 = vmatpush.bf16.xpose.msra.mxu0 %v2083
  %2090 = vmatpush.bf16.xpose.msra.mxu0 %v2080
  %2091 = vmatpush.bf16.xpose.msra.mxu0 %v2077
  %2092 = vmatpush.bf16.xpose.msra.mxu0 %v2074
  %2093 = vmatmul.bf16.gmra.mxu0 %v2071
  %v2094 = vpop.f32.mrf.mxu0
  %v2095 = vadd.f32 0.0, %v2094
  %v2096 = vpop.f32.mrf.mxu0
  %v2097 = vadd.f32 0.0, %v2096
  %2098 = vdwg.mxu0
  %v2101 = vunpack.c.l.b16 %v1922
  %v2102 = vunpack.c.l.b16 %v1923
  %v2103 = vpack.c.b16 %v2102, %v2101
  %v2112 = vunpack.c.l.b16 %v1942
  %v2113 = vunpack.c.l.b16 %v1943
  %v2114 = vunpack.c.l.b16 %v1944
  %v2115 = vunpack.c.l.b16 %v1945
  %v2116 = vunpack.c.l.b16 %v1946
  %v2117 = vunpack.c.l.b16 %v1947
  %v2118 = vunpack.c.l.b16 %v1948
  %v2119 = vunpack.c.l.b16 %v1949
  %v2120 = vpack.c.b16 %v2113, %v2112
  %v2121 = vpack.c.b16 %v2115, %v2114
  %v2122 = vpack.c.b16 %v2117, %v2116
  %v2123 = vpack.c.b16 %v2119, %v2118
  %v2125 = vsel %vm2015, %v2103, 0
  %v2128 = vsel %vm2015, %v2120, 0
  %v2131 = vsel %vm2015, %v2121, 0
  %v2134 = vsel %vm2015, %v2122, 0
  %v2137 = vsel %vm2015, %v2123, 0
  %2139 = vmatpush.bf16.xpose.msra.mxu0 0
  %2140 = vmatpush.bf16.xpose.msra.mxu0 0
  %2141 = vmatpush.bf16.xpose.msra.mxu0 0
  %2142 = vmatpush.bf16.xpose.msra.mxu0 0
  %2143 = vmatpush.bf16.xpose.msra.mxu0 %v2137
  %2144 = vmatpush.bf16.xpose.msra.mxu0 %v2134
  %2145 = vmatpush.bf16.xpose.msra.mxu0 %v2131
  %2146 = vmatpush.bf16.xpose.msra.mxu0 %v2128
  %2147 = vmatmul.bf16.gmra.mxu0 %v2125
  %v2148 = vpop.f32.mrf.mxu0
  %v2149 = vadd.f32 0.0, %v2148
  %v2150 = vpop.f32.mrf.mxu0
  %v2151 = vadd.f32 0.0, %v2150
  %2152 = vdwg.mxu0
  %v2155 = vunpack.c.l.b16 %v1924
  %v2156 = vunpack.c.l.b16 %v1925
  %v2157 = vpack.c.b16 %v2156, %v2155
  %v2166 = vunpack.c.l.b16 %v1950
  %v2167 = vunpack.c.l.b16 %v1951
  %v2168 = vunpack.c.l.b16 %v1952
  %v2169 = vunpack.c.l.b16 %v1953
  %v2170 = vunpack.c.l.b16 %v1954
  %v2171 = vunpack.c.l.b16 %v1955
  %v2172 = vunpack.c.l.b16 %v1956
  %v2173 = vunpack.c.l.b16 %v1957
  %v2174 = vpack.c.b16 %v2167, %v2166
  %v2175 = vpack.c.b16 %v2169, %v2168
  %v2176 = vpack.c.b16 %v2171, %v2170
  %v2177 = vpack.c.b16 %v2173, %v2172
  %v2179 = vsel %vm2015, %v2157, 0
  %v2182 = vsel %vm2015, %v2174, 0
  %v2185 = vsel %vm2015, %v2175, 0
  %v2188 = vsel %vm2015, %v2176, 0
  %v2191 = vsel %vm2015, %v2177, 0
  %2193 = vmatpush.bf16.xpose.msra.mxu0 0
  %2194 = vmatpush.bf16.xpose.msra.mxu0 0
  %2195 = vmatpush.bf16.xpose.msra.mxu0 0
  %2196 = vmatpush.bf16.xpose.msra.mxu0 0
  %2197 = vmatpush.bf16.xpose.msra.mxu0 %v2191
  %2198 = vmatpush.bf16.xpose.msra.mxu0 %v2188
  %2199 = vmatpush.bf16.xpose.msra.mxu0 %v2185
  %2200 = vmatpush.bf16.xpose.msra.mxu0 %v2182
  %2201 = vmatmul.bf16.gmra.mxu0 %v2179
  %v2202 = vpop.f32.mrf.mxu0
  %v2203 = vadd.f32 0.0, %v2202
  %v2204 = vpop.f32.mrf.mxu0
  %v2205 = vadd.f32 0.0, %v2204
  %2206 = vdwg.mxu0
  %v2215 = vunpack.c.l.b16 %v1958
  %v2216 = vunpack.c.l.b16 %v1959
  %v2217 = vunpack.c.l.b16 %v1960
  %v2218 = vunpack.c.l.b16 %v1961
  %v2219 = vunpack.c.l.b16 %v1962
  %v2220 = vunpack.c.l.b16 %v1963
  %v2221 = vunpack.c.l.b16 %v1964
  %v2222 = vunpack.c.l.b16 %v1965
  %v2223 = vpack.c.b16 %v2216, %v2215
  %v2224 = vpack.c.b16 %v2218, %v2217
  %v2225 = vpack.c.b16 %v2220, %v2219
  %v2226 = vpack.c.b16 %v2222, %v2221
  %v2228 = vsel %vm2015, %v2223, 0
  %v2231 = vsel %vm2015, %v2224, 0
  %v2234 = vsel %vm2015, %v2225, 0
  %v2237 = vsel %vm2015, %v2226, 0
  %2239 = vmatpush.bf16.xpose.msra.mxu0 0
  %2240 = vmatpush.bf16.xpose.msra.mxu0 0
  %2241 = vmatpush.bf16.xpose.msra.mxu0 0
  %2242 = vmatpush.bf16.xpose.msra.mxu0 0
  %2243 = vmatpush.bf16.xpose.msra.mxu0 %v2237
  %2244 = vmatpush.bf16.xpose.msra.mxu0 %v2234
  %2245 = vmatpush.bf16.xpose.msra.mxu0 %v2231
  %2246 = vmatpush.bf16.xpose.msra.mxu0 %v2228
  %2247 = vmatmul.bf16.gmra.mxu0 %v2017
  %v2248 = vpop.f32.mrf.mxu0
  %v2249 = vadd.f32 0.0, %v2248
  %v2250 = vpop.f32.mrf.mxu0
  %v2251 = vadd.f32 0.0, %v2250
  %2252 = vdwg.mxu0
  %v2261 = vunpack.c.l.b16 %v1966
  %v2262 = vunpack.c.l.b16 %v1967
  %v2263 = vunpack.c.l.b16 %v1968
  %v2264 = vunpack.c.l.b16 %v1969
  %v2265 = vunpack.c.l.b16 %v1970
  %v2266 = vunpack.c.l.b16 %v1971
  %v2267 = vunpack.c.l.b16 %v1972
  %v2268 = vunpack.c.l.b16 %v1973
  %v2269 = vpack.c.b16 %v2262, %v2261
  %v2270 = vpack.c.b16 %v2264, %v2263
  %v2271 = vpack.c.b16 %v2266, %v2265
  %v2272 = vpack.c.b16 %v2268, %v2267
  %v2274 = vsel %vm2015, %v2269, 0
  %v2277 = vsel %vm2015, %v2270, 0
  %v2280 = vsel %vm2015, %v2271, 0
  %v2283 = vsel %vm2015, %v2272, 0
  %2285 = vmatpush.bf16.xpose.msra.mxu0 0
  %2286 = vmatpush.bf16.xpose.msra.mxu0 0
  %2287 = vmatpush.bf16.xpose.msra.mxu0 0
  %2288 = vmatpush.bf16.xpose.msra.mxu0 0
  %2289 = vmatpush.bf16.xpose.msra.mxu0 %v2283
  %2290 = vmatpush.bf16.xpose.msra.mxu0 %v2280
  %2291 = vmatpush.bf16.xpose.msra.mxu0 %v2277
  %2292 = vmatpush.bf16.xpose.msra.mxu0 %v2274
  %2293 = vmatmul.bf16.gmra.mxu0 %v2071
  %v2294 = vpop.f32.mrf.mxu0
  %v2295 = vadd.f32 0.0, %v2294
  %v2296 = vpop.f32.mrf.mxu0
  %v2297 = vadd.f32 0.0, %v2296
  %2298 = vdwg.mxu0
  %v2307 = vunpack.c.l.b16 %v1974
  %v2308 = vunpack.c.l.b16 %v1975
  %v2309 = vunpack.c.l.b16 %v1976
  %v2310 = vunpack.c.l.b16 %v1977
  %v2311 = vunpack.c.l.b16 %v1978
  %v2312 = vunpack.c.l.b16 %v1979
  %v2313 = vunpack.c.l.b16 %v1980
  %v2314 = vunpack.c.l.b16 %v1981
  %v2315 = vpack.c.b16 %v2308, %v2307
  %v2316 = vpack.c.b16 %v2310, %v2309
  %v2317 = vpack.c.b16 %v2312, %v2311
  %v2318 = vpack.c.b16 %v2314, %v2313
  %v2320 = vsel %vm2015, %v2315, 0
  %v2323 = vsel %vm2015, %v2316, 0
  %v2326 = vsel %vm2015, %v2317, 0
  %v2329 = vsel %vm2015, %v2318, 0
  %2331 = vmatpush.bf16.xpose.msra.mxu0 0
  %2332 = vmatpush.bf16.xpose.msra.mxu0 0
  %2333 = vmatpush.bf16.xpose.msra.mxu0 0
  %2334 = vmatpush.bf16.xpose.msra.mxu0 0
  %2335 = vmatpush.bf16.xpose.msra.mxu0 %v2329
  %2336 = vmatpush.bf16.xpose.msra.mxu0 %v2326
  %2337 = vmatpush.bf16.xpose.msra.mxu0 %v2323
  %2338 = vmatpush.bf16.xpose.msra.mxu0 %v2320
  %2339 = vmatmul.bf16.gmra.mxu0 %v2125
  %v2340 = vpop.f32.mrf.mxu0
  %v2341 = vadd.f32 0.0, %v2340
  %v2342 = vpop.f32.mrf.mxu0
  %v2343 = vadd.f32 0.0, %v2342
  %2344 = vdwg.mxu0
  %v2353 = vunpack.c.l.b16 %v1982
  %v2354 = vunpack.c.l.b16 %v1983
  %v2355 = vunpack.c.l.b16 %v1984
  %v2356 = vunpack.c.l.b16 %v1985
  %v2357 = vunpack.c.l.b16 %v1986
  %v2358 = vunpack.c.l.b16 %v1987
  %v2359 = vunpack.c.l.b16 %v1988
  %v2360 = vunpack.c.l.b16 %v1989
  %v2361 = vpack.c.b16 %v2354, %v2353
  %v2362 = vpack.c.b16 %v2356, %v2355
  %v2363 = vpack.c.b16 %v2358, %v2357
  %v2364 = vpack.c.b16 %v2360, %v2359
  %v2366 = vsel %vm2015, %v2361, 0
  %v2369 = vsel %vm2015, %v2362, 0
  %v2372 = vsel %vm2015, %v2363, 0
  %v2375 = vsel %vm2015, %v2364, 0
  %2377 = vmatpush.bf16.xpose.msra.mxu0 0
  %2378 = vmatpush.bf16.xpose.msra.mxu0 0
  %2379 = vmatpush.bf16.xpose.msra.mxu0 0
  %2380 = vmatpush.bf16.xpose.msra.mxu0 0
  %2381 = vmatpush.bf16.xpose.msra.mxu0 %v2375
  %2382 = vmatpush.bf16.xpose.msra.mxu0 %v2372
  %2383 = vmatpush.bf16.xpose.msra.mxu0 %v2369
  %2384 = vmatpush.bf16.xpose.msra.mxu0 %v2366
  %2385 = vmatmul.bf16.gmra.mxu0 %v2179
  %v2386 = vpop.f32.mrf.mxu0
  %v2387 = vadd.f32 0.0, %v2386
  %v2388 = vpop.f32.mrf.mxu0
  %v2389 = vadd.f32 0.0, %v2388
  %2390 = vdwg.mxu0
  %v2391 = vmul.f32 %v2041, 0.35355338
  %v2392 = vmul.f32 %v2043, 0.35355338
  %v2393 = vmul.f32 %v2095, 0.35355338
  %v2394 = vmul.f32 %v2097, 0.35355338
  %v2395 = vmul.f32 %v2149, 0.35355338
  %v2396 = vmul.f32 %v2151, 0.35355338
  %v2397 = vmul.f32 %v2203, 0.35355338
  %v2398 = vmul.f32 %v2205, 0.35355338
  %v2399 = vmul.f32 %v2249, 0.35355338
  %v2400 = vmul.f32 %v2251, 0.35355338
  %v2401 = vmul.f32 %v2295, 0.35355338
  %v2402 = vmul.f32 %v2297, 0.35355338
  %v2403 = vmul.f32 %v2341, 0.35355338
  %v2404 = vmul.f32 %v2343, 0.35355338
  %v2405 = vmul.f32 %v2387, 0.35355338
  %v2406 = vmul.f32 %v2389, 0.35355338
  %vm2407 = vcmask 523264
  %v2408 = vsel %vm2407, %v2391, -inf
  %2409 = vmax.xlane.f32.xlu0 %v2408
  %v2410 = vpop.xlane.xlu0 %2409
  %v2411 = vsel %vm2407, %v2392, -inf
  %2412 = vmax.xlane.f32.xlu0 %v2411
  %v2413 = vpop.xlane.xlu0 %2412
  %v2414 = vsel %vm2407, %v2393, -inf
  %2415 = vmax.xlane.f32.xlu0 %v2414
  %v2416 = vpop.xlane.xlu0 %2415
  %v2417 = vsel %vm2407, %v2394, -inf
  %2418 = vmax.xlane.f32.xlu0 %v2417
  %v2419 = vpop.xlane.xlu0 %2418
  %v2420 = vsel %vm2407, %v2395, -inf
  %2421 = vmax.xlane.f32.xlu0 %v2420
  %v2422 = vpop.xlane.xlu0 %2421
  %v2423 = vsel %vm2407, %v2396, -inf
  %2424 = vmax.xlane.f32.xlu0 %v2423
  %v2425 = vpop.xlane.xlu0 %2424
  %v2426 = vsel %vm2407, %v2397, -inf
  %2427 = vmax.xlane.f32.xlu0 %v2426
  %v2428 = vpop.xlane.xlu0 %2427
  %v2429 = vsel %vm2407, %v2398, -inf
  %2430 = vmax.xlane.f32.xlu0 %v2429
  %v2431 = vpop.xlane.xlu0 %2430
  %v2432 = vsel %vm2407, %v2399, -inf
  %2433 = vmax.xlane.f32.xlu0 %v2432
  %v2434 = vpop.xlane.xlu0 %2433
  %v2435 = vsel %vm2407, %v2400, -inf
  %2436 = vmax.xlane.f32.xlu0 %v2435
  %v2437 = vpop.xlane.xlu0 %2436
  %v2438 = vsel %vm2407, %v2401, -inf
  %2439 = vmax.xlane.f32.xlu0 %v2438
  %v2440 = vpop.xlane.xlu0 %2439
  %v2441 = vsel %vm2407, %v2402, -inf
  %2442 = vmax.xlane.f32.xlu0 %v2441
  %v2443 = vpop.xlane.xlu0 %2442
  %v2444 = vsel %vm2407, %v2403, -inf
  %2445 = vmax.xlane.f32.xlu0 %v2444
  %v2446 = vpop.xlane.xlu0 %2445
  %v2447 = vsel %vm2407, %v2404, -inf
  %2448 = vmax.xlane.f32.xlu0 %v2447
  %v2449 = vpop.xlane.xlu0 %2448
  %v2450 = vsel %vm2407, %v2405, -inf
  %2451 = vmax.xlane.f32.xlu0 %v2450
  %v2452 = vpop.xlane.xlu0 %2451
  %v2453 = vsel %vm2407, %v2406, -inf
  %2454 = vmax.xlane.f32.xlu0 %v2453
  %v2455 = vpop.xlane.xlu0 %2454
  %v2456 = vsub.f32 %v2391, %v2410
  %v2457 = vsub.f32 %v2392, %v2413
  %v2458 = vsub.f32 %v2393, %v2416
  %v2459 = vsub.f32 %v2394, %v2419
  %v2460 = vsub.f32 %v2395, %v2422
  %v2461 = vsub.f32 %v2396, %v2425
  %v2462 = vsub.f32 %v2397, %v2428
  %v2463 = vsub.f32 %v2398, %v2431
  %v2464 = vsub.f32 %v2399, %v2434
  %v2465 = vsub.f32 %v2400, %v2437
  %v2466 = vsub.f32 %v2401, %v2440
  %v2467 = vsub.f32 %v2402, %v2443
  %v2468 = vsub.f32 %v2403, %v2446
  %v2469 = vsub.f32 %v2404, %v2449
  %v2470 = vsub.f32 %v2405, %v2452
  %v2471 = vsub.f32 %v2406, %v2455
  %v2472 = vmul.f32 %v2456, 1.442695
  %v2473 = vpow.pop %v2472
  %v2474 = vmul.f32 %v2457, 1.442695
  %v2475 = vpow.pop %v2474
  %v2476 = vmul.f32 %v2458, 1.442695
  %v2477 = vpow.pop %v2476
  %v2478 = vmul.f32 %v2459, 1.442695
  %v2479 = vpow.pop %v2478
  %v2480 = vmul.f32 %v2460, 1.442695
  %v2481 = vpow.pop %v2480
  %v2482 = vmul.f32 %v2461, 1.442695
  %v2483 = vpow.pop %v2482
  %v2484 = vmul.f32 %v2462, 1.442695
  %v2485 = vpow.pop %v2484
  %v2486 = vmul.f32 %v2463, 1.442695
  %v2487 = vpow.pop %v2486
  %v2488 = vmul.f32 %v2464, 1.442695
  %v2489 = vpow.pop %v2488
  %v2490 = vmul.f32 %v2465, 1.442695
  %v2491 = vpow.pop %v2490
  %v2492 = vmul.f32 %v2466, 1.442695
  %v2493 = vpow.pop %v2492
  %v2494 = vmul.f32 %v2467, 1.442695
  %v2495 = vpow.pop %v2494
  %v2496 = vmul.f32 %v2468, 1.442695
  %v2497 = vpow.pop %v2496
  %v2498 = vmul.f32 %v2469, 1.442695
  %v2499 = vpow.pop %v2498
  %v2500 = vmul.f32 %v2470, 1.442695
  %v2501 = vpow.pop %v2500
  %v2502 = vmul.f32 %v2471, 1.442695
  %v2503 = vpow.pop %v2502
  %v2504 = vsel %vm2407, %v2473, 0.0
  %2505 = vadd.xlane.f32.xlu0 %v2504
  %v2506 = vpop.xlane.xlu0 %2505
  %v2507 = vsel %vm2407, %v2475, 0.0
  %2508 = vadd.xlane.f32.xlu0 %v2507
  %v2509 = vpop.xlane.xlu0 %2508
  %v2510 = vsel %vm2407, %v2477, 0.0
  %2511 = vadd.xlane.f32.xlu0 %v2510
  %v2512 = vpop.xlane.xlu0 %2511
  %v2513 = vsel %vm2407, %v2479, 0.0
  %2514 = vadd.xlane.f32.xlu0 %v2513
  %v2515 = vpop.xlane.xlu0 %2514
  %v2516 = vsel %vm2407, %v2481, 0.0
  %2517 = vadd.xlane.f32.xlu0 %v2516
  %v2518 = vpop.xlane.xlu0 %2517
  %v2519 = vsel %vm2407, %v2483, 0.0
  %2520 = vadd.xlane.f32.xlu0 %v2519
  %v2521 = vpop.xlane.xlu0 %2520
  %v2522 = vsel %vm2407, %v2485, 0.0
  %2523 = vadd.xlane.f32.xlu0 %v2522
  %v2524 = vpop.xlane.xlu0 %2523
  %v2525 = vsel %vm2407, %v2487, 0.0
  %2526 = vadd.xlane.f32.xlu0 %v2525
  %v2527 = vpop.xlane.xlu0 %2526
  %v2528 = vsel %vm2407, %v2489, 0.0
  %2529 = vadd.xlane.f32.xlu0 %v2528
  %v2530 = vpop.xlane.xlu0 %2529
  %v2531 = vsel %vm2407, %v2491, 0.0
  %2532 = vadd.xlane.f32.xlu0 %v2531
  %v2533 = vpop.xlane.xlu0 %2532
  %v2534 = vsel %vm2407, %v2493, 0.0
  %2535 = vadd.xlane.f32.xlu0 %v2534
  %v2536 = vpop.xlane.xlu0 %2535
  %v2537 = vsel %vm2407, %v2495, 0.0
  %2538 = vadd.xlane.f32.xlu0 %v2537
  %v2539 = vpop.xlane.xlu0 %2538
  %v2540 = vsel %vm2407, %v2497, 0.0
  %2541 = vadd.xlane.f32.xlu0 %v2540
  %v2542 = vpop.xlane.xlu0 %2541
  %v2543 = vsel %vm2407, %v2499, 0.0
  %2544 = vadd.xlane.f32.xlu0 %v2543
  %v2545 = vpop.xlane.xlu0 %2544
  %v2546 = vsel %vm2407, %v2501, 0.0
  %2547 = vadd.xlane.f32.xlu0 %v2546
  %v2548 = vpop.xlane.xlu0 %2547
  %v2549 = vsel %vm2407, %v2503, 0.0
  %2550 = vadd.xlane.f32.xlu0 %v2549
  %v2551 = vpop.xlane.xlu0 %2550
  %v2552 = vrcp.pop %v2506
  %v2553 = vrcp.pop %v2509
  %v2554 = vrcp.pop %v2512
  %v2555 = vrcp.pop %v2515
  %v2556 = vrcp.pop %v2518
  %v2557 = vrcp.pop %v2521
  %v2558 = vrcp.pop %v2524
  %v2559 = vrcp.pop %v2527
  %v2560 = vrcp.pop %v2530
  %v2561 = vrcp.pop %v2533
  %v2562 = vrcp.pop %v2536
  %v2563 = vrcp.pop %v2539
  %v2564 = vrcp.pop %v2542
  %v2565 = vrcp.pop %v2545
  %v2566 = vrcp.pop %v2548
  %v2567 = vrcp.pop %v2551
  %v2568 = vmul.f32 %v2473, %v2552
  %v2569 = vmul.f32 %v2475, %v2553
  %v2570 = vmul.f32 %v2477, %v2554
  %v2571 = vmul.f32 %v2479, %v2555
  %v2572 = vmul.f32 %v2481, %v2556
  %v2573 = vmul.f32 %v2483, %v2557
  %v2574 = vmul.f32 %v2485, %v2558
  %v2575 = vmul.f32 %v2487, %v2559
  %v2576 = vmul.f32 %v2489, %v2560
  %v2577 = vmul.f32 %v2491, %v2561
  %v2578 = vmul.f32 %v2493, %v2562
  %v2579 = vmul.f32 %v2495, %v2563
  %v2580 = vmul.f32 %v2497, %v2564
  %v2581 = vmul.f32 %v2499, %v2565
  %v2582 = vmul.f32 %v2501, %v2566
  %v2583 = vmul.f32 %v2503, %v2567
  %v2584 = vpack.c.bf16 %v2568, %v2568
  %v2585 = vpack.c.bf16 %v2569, %v2569
  %v2586 = vpack.c.bf16 %v2570, %v2570
  %v2587 = vpack.c.bf16 %v2571, %v2571
  %v2588 = vpack.c.bf16 %v2572, %v2572
  %v2589 = vpack.c.bf16 %v2573, %v2573
  %v2590 = vpack.c.bf16 %v2574, %v2574
  %v2591 = vpack.c.bf16 %v2575, %v2575
  %v2592 = vpack.c.bf16 %v2576, %v2576
  %v2593 = vpack.c.bf16 %v2577, %v2577
  %v2594 = vpack.c.bf16 %v2578, %v2578
  %v2595 = vpack.c.bf16 %v2579, %v2579
  %v2596 = vpack.c.bf16 %v2580, %v2580
  %v2597 = vpack.c.bf16 %v2581, %v2581
  %v2598 = vpack.c.bf16 %v2582, %v2582
  %v2599 = vpack.c.bf16 %v2583, %v2583
  %v2600 = vpack.c.bf16 %v1660, %v1660
  %v2601 = vpack.c.bf16 %v1662, %v1662
  %v2602 = vpack.c.bf16 %v1665, %v1665
  %v2603 = vpack.c.bf16 %v1667, %v1667
  %v2604 = vpack.c.bf16 %v1670, %v1670
  %v2605 = vpack.c.bf16 %v1672, %v1672
  %v2606 = vpack.c.bf16 %v1675, %v1675
  %v2607 = vpack.c.bf16 %v1677, %v1677
  %v2608 = vpack.c.bf16 %v1701, %v1701
  %v2609 = vpack.c.bf16 %v1703, %v1703
  %v2610 = vpack.c.bf16 %v1706, %v1706
  %v2611 = vpack.c.bf16 %v1708, %v1708
  %v2612 = vpack.c.bf16 %v1711, %v1711
  %v2613 = vpack.c.bf16 %v1713, %v1713
  %v2614 = vpack.c.bf16 %v1716, %v1716
  %v2615 = vpack.c.bf16 %v1718, %v1718
  %v2616 = vpack.c.bf16 %v1742, %v1742
  %v2617 = vpack.c.bf16 %v1744, %v1744
  %v2618 = vpack.c.bf16 %v1747, %v1747
  %v2619 = vpack.c.bf16 %v1749, %v1749
  %v2620 = vpack.c.bf16 %v1752, %v1752
  %v2621 = vpack.c.bf16 %v1754, %v1754
  %v2622 = vpack.c.bf16 %v1757, %v1757
  %v2623 = vpack.c.bf16 %v1759, %v1759
  %v2624 = vpack.c.bf16 %v1783, %v1783
  %v2625 = vpack.c.bf16 %v1785, %v1785
  %v2626 = vpack.c.bf16 %v1788, %v1788
  %v2627 = vpack.c.bf16 %v1790, %v1790
  %v2628 = vpack.c.bf16 %v1793, %v1793
  %v2629 = vpack.c.bf16 %v1795, %v1795
  %v2630 = vpack.c.bf16 %v1798, %v1798
  %v2631 = vpack.c.bf16 %v1800, %v1800
  %v2632 = vpack.c.bf16 %v1812, %v1812
  %v2633 = vpack.c.bf16 %v1814, %v1814
  %v2634 = vpack.c.bf16 %v1817, %v1817
  %v2635 = vpack.c.bf16 %v1819, %v1819
  %v2636 = vpack.c.bf16 %v1822, %v1822
  %v2637 = vpack.c.bf16 %v1824, %v1824
  %v2638 = vpack.c.bf16 %v1827, %v1827
  %v2639 = vpack.c.bf16 %v1829, %v1829
  %v2640 = vpack.c.bf16 %v1841, %v1841
  %v2641 = vpack.c.bf16 %v1843, %v1843
  %v2642 = vpack.c.bf16 %v1846, %v1846
  %v2643 = vpack.c.bf16 %v1848, %v1848
  %v2644 = vpack.c.bf16 %v1851, %v1851
  %v2645 = vpack.c.bf16 %v1853, %v1853
  %v2646 = vpack.c.bf16 %v1856, %v1856
  %v2647 = vpack.c.bf16 %v1858, %v1858
  %v2648 = vpack.c.bf16 %v1870, %v1870
  %v2649 = vpack.c.bf16 %v1872, %v1872
  %v2650 = vpack.c.bf16 %v1875, %v1875
  %v2651 = vpack.c.bf16 %v1877, %v1877
  %v2652 = vpack.c.bf16 %v1880, %v1880
  %v2653 = vpack.c.bf16 %v1882, %v1882
  %v2654 = vpack.c.bf16 %v1885, %v1885
  %v2655 = vpack.c.bf16 %v1887, %v1887
  %v2656 = vpack.c.bf16 %v1899, %v1899
  %v2657 = vpack.c.bf16 %v1901, %v1901
  %v2658 = vpack.c.bf16 %v1904, %v1904
  %v2659 = vpack.c.bf16 %v1906, %v1906
  %v2660 = vpack.c.bf16 %v1909, %v1909
  %v2661 = vpack.c.bf16 %v1911, %v1911
  %v2662 = vpack.c.bf16 %v1914, %v1914
  %v2663 = vpack.c.bf16 %v1916, %v1916
  %v2666 = vunpack.c.l.b16 %v2584
  %v2667 = vunpack.c.l.b16 %v2585
  %v2668 = vpack.c.b16 %v2667, %v2666
  %v2677 = vunpack.c.l.b16 %v2600
  %v2678 = vunpack.c.l.b16 %v2601
  %v2679 = vunpack.c.l.b16 %v2602
  %v2680 = vunpack.c.l.b16 %v2603
  %v2681 = vunpack.c.l.b16 %v2604
  %v2682 = vunpack.c.l.b16 %v2605
  %v2683 = vunpack.c.l.b16 %v2606
  %v2684 = vunpack.c.l.b16 %v2607
  %v2685 = vpack.c.b16 %v2678, %v2677
  %v2686 = vpack.c.b16 %v2680, %v2679
  %v2687 = vpack.c.b16 %v2682, %v2681
  %v2688 = vpack.c.b16 %v2684, %v2683
  %v2694 = vsel %vm2407, %v2668, 0
  %2696 = vmatpush.bf16.msra.mxu0 0
  %2697 = vmatpush.bf16.msra.mxu0 0
  %2698 = vmatpush.bf16.msra.mxu0 0
  %2699 = vmatpush.bf16.msra.mxu0 0
  %2700 = vmatpush.bf16.msra.mxu0 %v2688
  %2701 = vmatpush.bf16.msra.mxu0 %v2687
  %2702 = vmatpush.bf16.msra.mxu0 %v2686
  %2703 = vmatpush.bf16.msra.mxu0 %v2685
  %2704 = vmatmul.bf16.gmra.mxu0 %v2694
  %v2705 = vpop.f32.mrf.mxu0
  %v2706 = vadd.f32 0.0, %v2705
  %v2707 = vpop.f32.mrf.mxu0
  %v2708 = vadd.f32 0.0, %v2707
  %2709 = vdwg.mxu0
  %v2712 = vunpack.c.l.b16 %v2586
  %v2713 = vunpack.c.l.b16 %v2587
  %v2714 = vpack.c.b16 %v2713, %v2712
  %v2723 = vunpack.c.l.b16 %v2608
  %v2724 = vunpack.c.l.b16 %v2609
  %v2725 = vunpack.c.l.b16 %v2610
  %v2726 = vunpack.c.l.b16 %v2611
  %v2727 = vunpack.c.l.b16 %v2612
  %v2728 = vunpack.c.l.b16 %v2613
  %v2729 = vunpack.c.l.b16 %v2614
  %v2730 = vunpack.c.l.b16 %v2615
  %v2731 = vpack.c.b16 %v2724, %v2723
  %v2732 = vpack.c.b16 %v2726, %v2725
  %v2733 = vpack.c.b16 %v2728, %v2727
  %v2734 = vpack.c.b16 %v2730, %v2729
  %v2740 = vsel %vm2407, %v2714, 0
  %2742 = vmatpush.bf16.msra.mxu0 0
  %2743 = vmatpush.bf16.msra.mxu0 0
  %2744 = vmatpush.bf16.msra.mxu0 0
  %2745 = vmatpush.bf16.msra.mxu0 0
  %2746 = vmatpush.bf16.msra.mxu0 %v2734
  %2747 = vmatpush.bf16.msra.mxu0 %v2733
  %2748 = vmatpush.bf16.msra.mxu0 %v2732
  %2749 = vmatpush.bf16.msra.mxu0 %v2731
  %2750 = vmatmul.bf16.gmra.mxu0 %v2740
  %v2751 = vpop.f32.mrf.mxu0
  %v2752 = vadd.f32 0.0, %v2751
  %v2753 = vpop.f32.mrf.mxu0
  %v2754 = vadd.f32 0.0, %v2753
  %2755 = vdwg.mxu0
  %v2758 = vunpack.c.l.b16 %v2588
  %v2759 = vunpack.c.l.b16 %v2589
  %v2760 = vpack.c.b16 %v2759, %v2758
  %v2769 = vunpack.c.l.b16 %v2616
  %v2770 = vunpack.c.l.b16 %v2617
  %v2771 = vunpack.c.l.b16 %v2618
  %v2772 = vunpack.c.l.b16 %v2619
  %v2773 = vunpack.c.l.b16 %v2620
  %v2774 = vunpack.c.l.b16 %v2621
  %v2775 = vunpack.c.l.b16 %v2622
  %v2776 = vunpack.c.l.b16 %v2623
  %v2777 = vpack.c.b16 %v2770, %v2769
  %v2778 = vpack.c.b16 %v2772, %v2771
  %v2779 = vpack.c.b16 %v2774, %v2773
  %v2780 = vpack.c.b16 %v2776, %v2775
  %v2786 = vsel %vm2407, %v2760, 0
  %2788 = vmatpush.bf16.msra.mxu0 0
  %2789 = vmatpush.bf16.msra.mxu0 0
  %2790 = vmatpush.bf16.msra.mxu0 0
  %2791 = vmatpush.bf16.msra.mxu0 0
  %2792 = vmatpush.bf16.msra.mxu0 %v2780
  %2793 = vmatpush.bf16.msra.mxu0 %v2779
  %2794 = vmatpush.bf16.msra.mxu0 %v2778
  %2795 = vmatpush.bf16.msra.mxu0 %v2777
  %2796 = vmatmul.bf16.gmra.mxu0 %v2786
  %v2797 = vpop.f32.mrf.mxu0
  %v2798 = vadd.f32 0.0, %v2797
  %v2799 = vpop.f32.mrf.mxu0
  %v2800 = vadd.f32 0.0, %v2799
  %2801 = vdwg.mxu0
  %v2804 = vunpack.c.l.b16 %v2590
  %v2805 = vunpack.c.l.b16 %v2591
  %v2806 = vpack.c.b16 %v2805, %v2804
  %v2815 = vunpack.c.l.b16 %v2624
  %v2816 = vunpack.c.l.b16 %v2625
  %v2817 = vunpack.c.l.b16 %v2626
  %v2818 = vunpack.c.l.b16 %v2627
  %v2819 = vunpack.c.l.b16 %v2628
  %v2820 = vunpack.c.l.b16 %v2629
  %v2821 = vunpack.c.l.b16 %v2630
  %v2822 = vunpack.c.l.b16 %v2631
  %v2823 = vpack.c.b16 %v2816, %v2815
  %v2824 = vpack.c.b16 %v2818, %v2817
  %v2825 = vpack.c.b16 %v2820, %v2819
  %v2826 = vpack.c.b16 %v2822, %v2821
  %v2832 = vsel %vm2407, %v2806, 0
  %2834 = vmatpush.bf16.msra.mxu0 0
  %2835 = vmatpush.bf16.msra.mxu0 0
  %2836 = vmatpush.bf16.msra.mxu0 0
  %2837 = vmatpush.bf16.msra.mxu0 0
  %2838 = vmatpush.bf16.msra.mxu0 %v2826
  %2839 = vmatpush.bf16.msra.mxu0 %v2825
  %2840 = vmatpush.bf16.msra.mxu0 %v2824
  %2841 = vmatpush.bf16.msra.mxu0 %v2823
  %2842 = vmatmul.bf16.gmra.mxu0 %v2832
  %v2843 = vpop.f32.mrf.mxu0
  %v2844 = vadd.f32 0.0, %v2843
  %v2845 = vpop.f32.mrf.mxu0
  %v2846 = vadd.f32 0.0, %v2845
  %2847 = vdwg.mxu0
  %v2850 = vunpack.c.l.b16 %v2592
  %v2851 = vunpack.c.l.b16 %v2593
  %v2852 = vpack.c.b16 %v2851, %v2850
  %v2861 = vunpack.c.l.b16 %v2632
  %v2862 = vunpack.c.l.b16 %v2633
  %v2863 = vunpack.c.l.b16 %v2634
  %v2864 = vunpack.c.l.b16 %v2635
  %v2865 = vunpack.c.l.b16 %v2636
  %v2866 = vunpack.c.l.b16 %v2637
  %v2867 = vunpack.c.l.b16 %v2638
  %v2868 = vunpack.c.l.b16 %v2639
  %v2869 = vpack.c.b16 %v2862, %v2861
  %v2870 = vpack.c.b16 %v2864, %v2863
  %v2871 = vpack.c.b16 %v2866, %v2865
  %v2872 = vpack.c.b16 %v2868, %v2867
  %v2878 = vsel %vm2407, %v2852, 0
  %2880 = vmatpush.bf16.msra.mxu0 0
  %2881 = vmatpush.bf16.msra.mxu0 0
  %2882 = vmatpush.bf16.msra.mxu0 0
  %2883 = vmatpush.bf16.msra.mxu0 0
  %2884 = vmatpush.bf16.msra.mxu0 %v2872
  %2885 = vmatpush.bf16.msra.mxu0 %v2871
  %2886 = vmatpush.bf16.msra.mxu0 %v2870
  %2887 = vmatpush.bf16.msra.mxu0 %v2869
  %2888 = vmatmul.bf16.gmra.mxu0 %v2878
  %v2889 = vpop.f32.mrf.mxu0
  %v2890 = vadd.f32 0.0, %v2889
  %v2891 = vpop.f32.mrf.mxu0
  %v2892 = vadd.f32 0.0, %v2891
  %2893 = vdwg.mxu0
  %v2896 = vunpack.c.l.b16 %v2594
  %v2897 = vunpack.c.l.b16 %v2595
  %v2898 = vpack.c.b16 %v2897, %v2896
  %v2907 = vunpack.c.l.b16 %v2640
  %v2908 = vunpack.c.l.b16 %v2641
  %v2909 = vunpack.c.l.b16 %v2642
  %v2910 = vunpack.c.l.b16 %v2643
  %v2911 = vunpack.c.l.b16 %v2644
  %v2912 = vunpack.c.l.b16 %v2645
  %v2913 = vunpack.c.l.b16 %v2646
  %v2914 = vunpack.c.l.b16 %v2647
  %v2915 = vpack.c.b16 %v2908, %v2907
  %v2916 = vpack.c.b16 %v2910, %v2909
  %v2917 = vpack.c.b16 %v2912, %v2911
  %v2918 = vpack.c.b16 %v2914, %v2913
  %v2924 = vsel %vm2407, %v2898, 0
  %2926 = vmatpush.bf16.msra.mxu0 0
  %2927 = vmatpush.bf16.msra.mxu0 0
  %2928 = vmatpush.bf16.msra.mxu0 0
  %2929 = vmatpush.bf16.msra.mxu0 0
  %2930 = vmatpush.bf16.msra.mxu0 %v2918
  %2931 = vmatpush.bf16.msra.mxu0 %v2917
  %2932 = vmatpush.bf16.msra.mxu0 %v2916
  %2933 = vmatpush.bf16.msra.mxu0 %v2915
  %2934 = vmatmul.bf16.gmra.mxu0 %v2924
  %v2935 = vpop.f32.mrf.mxu0
  %v2936 = vadd.f32 0.0, %v2935
  %v2937 = vpop.f32.mrf.mxu0
  %v2938 = vadd.f32 0.0, %v2937
  %2939 = vdwg.mxu0
  %v2942 = vunpack.c.l.b16 %v2596
  %v2943 = vunpack.c.l.b16 %v2597
  %v2944 = vpack.c.b16 %v2943, %v2942
  %v2953 = vunpack.c.l.b16 %v2648
  %v2954 = vunpack.c.l.b16 %v2649
  %v2955 = vunpack.c.l.b16 %v2650
  %v2956 = vunpack.c.l.b16 %v2651
  %v2957 = vunpack.c.l.b16 %v2652
  %v2958 = vunpack.c.l.b16 %v2653
  %v2959 = vunpack.c.l.b16 %v2654
  %v2960 = vunpack.c.l.b16 %v2655
  %v2961 = vpack.c.b16 %v2954, %v2953
  %v2962 = vpack.c.b16 %v2956, %v2955
  %v2963 = vpack.c.b16 %v2958, %v2957
  %v2964 = vpack.c.b16 %v2960, %v2959
  %v2970 = vsel %vm2407, %v2944, 0
  %2972 = vmatpush.bf16.msra.mxu0 0
  %2973 = vmatpush.bf16.msra.mxu0 0
  %2974 = vmatpush.bf16.msra.mxu0 0
  %2975 = vmatpush.bf16.msra.mxu0 0
  %2976 = vmatpush.bf16.msra.mxu0 %v2964
  %2977 = vmatpush.bf16.msra.mxu0 %v2963
  %2978 = vmatpush.bf16.msra.mxu0 %v2962
  %2979 = vmatpush.bf16.msra.mxu0 %v2961
  %2980 = vmatmul.bf16.gmra.mxu0 %v2970
  %v2981 = vpop.f32.mrf.mxu0
  %v2982 = vadd.f32 0.0, %v2981
  %v2983 = vpop.f32.mrf.mxu0
  %v2984 = vadd.f32 0.0, %v2983
  %2985 = vdwg.mxu0
  %v2988 = vunpack.c.l.b16 %v2598
  %v2989 = vunpack.c.l.b16 %v2599
  %v2990 = vpack.c.b16 %v2989, %v2988
  %v2999 = vunpack.c.l.b16 %v2656
  %v3000 = vunpack.c.l.b16 %v2657
  %v3001 = vunpack.c.l.b16 %v2658
  %v3002 = vunpack.c.l.b16 %v2659
  %v3003 = vunpack.c.l.b16 %v2660
  %v3004 = vunpack.c.l.b16 %v2661
  %v3005 = vunpack.c.l.b16 %v2662
  %v3006 = vunpack.c.l.b16 %v2663
  %v3007 = vpack.c.b16 %v3000, %v2999
  %v3008 = vpack.c.b16 %v3002, %v3001
  %v3009 = vpack.c.b16 %v3004, %v3003
  %v3010 = vpack.c.b16 %v3006, %v3005
  %v3016 = vsel %vm2407, %v2990, 0
  %3018 = vmatpush.bf16.msra.mxu0 0
  %3019 = vmatpush.bf16.msra.mxu0 0
  %3020 = vmatpush.bf16.msra.mxu0 0
  %3021 = vmatpush.bf16.msra.mxu0 0
  %3022 = vmatpush.bf16.msra.mxu0 %v3010
  %3023 = vmatpush.bf16.msra.mxu0 %v3009
  %3024 = vmatpush.bf16.msra.mxu0 %v3008
  %3025 = vmatpush.bf16.msra.mxu0 %v3007
  %3026 = vmatmul.bf16.gmra.mxu0 %v3016
  %v3027 = vpop.f32.mrf.mxu0
  %v3028 = vadd.f32 0.0, %v3027
  %v3029 = vpop.f32.mrf.mxu0
  %v3030 = vadd.f32 0.0, %v3029
  %3031 = vdwg.mxu0
  %v3032 = vpack.c.bf16 %v2706, %v2706
  %v3033 = vpack.c.bf16 %v2708, %v2708
  %v3034 = vpack.c.bf16 %v2752, %v2752
  %v3035 = vpack.c.bf16 %v2754, %v2754
  %v3036 = vpack.c.bf16 %v2798, %v2798
  %v3037 = vpack.c.bf16 %v2800, %v2800
  %v3038 = vpack.c.bf16 %v2844, %v2844
  %v3039 = vpack.c.bf16 %v2846, %v2846
  %v3040 = vpack.c.bf16 %v2890, %v2890
  %v3041 = vpack.c.bf16 %v2892, %v2892
  %v3042 = vpack.c.bf16 %v2936, %v2936
  %v3043 = vpack.c.bf16 %v2938, %v2938
  %v3044 = vpack.c.bf16 %v2982, %v2982
  %v3045 = vpack.c.bf16 %v2984, %v2984
  %v3046 = vpack.c.bf16 %v3028, %v3028
  %v3047 = vpack.c.bf16 %v3030, %v3030
  %v3050 = vunpack.c.l.b16 %v3032
  %v3051 = vunpack.c.l.b16 %v3033
  %v3052 = vpack.c.b16 %v3051, %v3050
  %v3054 = vsel %vm2015, %v3052, 0
  %vm3056 = vcmask 1043456
  %v3058 = vsel %vm3056, %v177, 0
  %3060 = vmatpush.bf16.msra.mxu0 0
  %3061 = vmatpush.bf16.msra.mxu0 0
  %3062 = vmatpush.bf16.msra.mxu0 0
  %3063 = vmatpush.bf16.msra.mxu0 0
  %3064 = vmatpush.bf16.msra.mxu0 0
  %3065 = vmatpush.bf16.msra.mxu0 0
  %3066 = vmatpush.bf16.msra.mxu0 0
  %3067 = vmatpush.bf16.msra.mxu0 %v3058
  %3068 = vmatmul.bf16.gmra.mxu0 %v3054
  %v3069 = vpop.f32.mrf.mxu0
  %v3070 = vadd.f32 0.0, %v3069
  %v3071 = vpop.f32.mrf.mxu0
  %v3072 = vadd.f32 0.0, %v3071
  %3073 = vdwg.mxu0
  %v3076 = vunpack.c.l.b16 %v3034
  %v3077 = vunpack.c.l.b16 %v3035
  %v3078 = vpack.c.b16 %v3077, %v3076
  %v3080 = vsel %vm2015, %v3078, 0
  %v3083 = vsel %vm3056, %v178, 0
  %3085 = vmatpush.bf16.msra.mxu0 0
  %3086 = vmatpush.bf16.msra.mxu0 0
  %3087 = vmatpush.bf16.msra.mxu0 0
  %3088 = vmatpush.bf16.msra.mxu0 0
  %3089 = vmatpush.bf16.msra.mxu0 0
  %3090 = vmatpush.bf16.msra.mxu0 0
  %3091 = vmatpush.bf16.msra.mxu0 0
  %3092 = vmatpush.bf16.msra.mxu0 %v3083
  %3093 = vmatmul.bf16.gmra.mxu0 %v3080
  %v3094 = vpop.f32.mrf.mxu0
  %v3095 = vadd.f32 0.0, %v3094
  %v3096 = vpop.f32.mrf.mxu0
  %v3097 = vadd.f32 0.0, %v3096
  %3098 = vdwg.mxu0
  %v3101 = vunpack.c.l.b16 %v3036
  %v3102 = vunpack.c.l.b16 %v3037
  %v3103 = vpack.c.b16 %v3102, %v3101
  %v3105 = vsel %vm2015, %v3103, 0
  %v3108 = vsel %vm3056, %v179, 0
  %3110 = vmatpush.bf16.msra.mxu0 0
  %3111 = vmatpush.bf16.msra.mxu0 0
  %3112 = vmatpush.bf16.msra.mxu0 0
  %3113 = vmatpush.bf16.msra.mxu0 0
  %3114 = vmatpush.bf16.msra.mxu0 0
  %3115 = vmatpush.bf16.msra.mxu0 0
  %3116 = vmatpush.bf16.msra.mxu0 0
  %3117 = vmatpush.bf16.msra.mxu0 %v3108
  %3118 = vmatmul.bf16.gmra.mxu0 %v3105
  %v3119 = vpop.f32.mrf.mxu0
  %v3120 = vadd.f32 0.0, %v3119
  %v3121 = vpop.f32.mrf.mxu0
  %v3122 = vadd.f32 0.0, %v3121
  %3123 = vdwg.mxu0
  %v3126 = vunpack.c.l.b16 %v3038
  %v3127 = vunpack.c.l.b16 %v3039
  %v3128 = vpack.c.b16 %v3127, %v3126
  %v3130 = vsel %vm2015, %v3128, 0
  %v3133 = vsel %vm3056, %v180, 0
  %3135 = vmatpush.bf16.msra.mxu0 0
  %3136 = vmatpush.bf16.msra.mxu0 0
  %3137 = vmatpush.bf16.msra.mxu0 0
  %3138 = vmatpush.bf16.msra.mxu0 0
  %3139 = vmatpush.bf16.msra.mxu0 0
  %3140 = vmatpush.bf16.msra.mxu0 0
  %3141 = vmatpush.bf16.msra.mxu0 0
  %3142 = vmatpush.bf16.msra.mxu0 %v3133
  %3143 = vmatmul.bf16.gmra.mxu0 %v3130
  %v3144 = vpop.f32.mrf.mxu0
  %v3145 = vadd.f32 0.0, %v3144
  %v3146 = vpop.f32.mrf.mxu0
  %v3147 = vadd.f32 0.0, %v3146
  %3148 = vdwg.mxu0
  %v3151 = vunpack.c.l.b16 %v3040
  %v3152 = vunpack.c.l.b16 %v3041
  %v3153 = vpack.c.b16 %v3152, %v3151
  %v3155 = vsel %vm2015, %v3153, 0
  %3157 = vmatpush.bf16.msra.mxu0 0
  %3158 = vmatpush.bf16.msra.mxu0 0
  %3159 = vmatpush.bf16.msra.mxu0 0
  %3160 = vmatpush.bf16.msra.mxu0 0
  %3161 = vmatpush.bf16.msra.mxu0 0
  %3162 = vmatpush.bf16.msra.mxu0 0
  %3163 = vmatpush.bf16.msra.mxu0 0
  %3164 = vmatpush.bf16.msra.mxu0 %v3058
  %3165 = vmatmul.bf16.gmra.mxu0 %v3155
  %v3166 = vpop.f32.mrf.mxu0
  %v3167 = vadd.f32 0.0, %v3166
  %v3168 = vpop.f32.mrf.mxu0
  %v3169 = vadd.f32 0.0, %v3168
  %3170 = vdwg.mxu0
  %v3173 = vunpack.c.l.b16 %v3042
  %v3174 = vunpack.c.l.b16 %v3043
  %v3175 = vpack.c.b16 %v3174, %v3173
  %v3177 = vsel %vm2015, %v3175, 0
  %3179 = vmatpush.bf16.msra.mxu0 0
  %3180 = vmatpush.bf16.msra.mxu0 0
  %3181 = vmatpush.bf16.msra.mxu0 0
  %3182 = vmatpush.bf16.msra.mxu0 0
  %3183 = vmatpush.bf16.msra.mxu0 0
  %3184 = vmatpush.bf16.msra.mxu0 0
  %3185 = vmatpush.bf16.msra.mxu0 0
  %3186 = vmatpush.bf16.msra.mxu0 %v3083
  %3187 = vmatmul.bf16.gmra.mxu0 %v3177
  %v3188 = vpop.f32.mrf.mxu0
  %v3189 = vadd.f32 0.0, %v3188
  %v3190 = vpop.f32.mrf.mxu0
  %v3191 = vadd.f32 0.0, %v3190
  %3192 = vdwg.mxu0
  %v3195 = vunpack.c.l.b16 %v3044
  %v3196 = vunpack.c.l.b16 %v3045
  %v3197 = vpack.c.b16 %v3196, %v3195
  %v3199 = vsel %vm2015, %v3197, 0
  %3201 = vmatpush.bf16.msra.mxu0 0
  %3202 = vmatpush.bf16.msra.mxu0 0
  %3203 = vmatpush.bf16.msra.mxu0 0
  %3204 = vmatpush.bf16.msra.mxu0 0
  %3205 = vmatpush.bf16.msra.mxu0 0
  %3206 = vmatpush.bf16.msra.mxu0 0
  %3207 = vmatpush.bf16.msra.mxu0 0
  %3208 = vmatpush.bf16.msra.mxu0 %v3108
  %3209 = vmatmul.bf16.gmra.mxu0 %v3199
  %v3210 = vpop.f32.mrf.mxu0
  %v3211 = vadd.f32 0.0, %v3210
  %v3212 = vpop.f32.mrf.mxu0
  %v3213 = vadd.f32 0.0, %v3212
  %3214 = vdwg.mxu0
  %v3217 = vunpack.c.l.b16 %v3046
  %v3218 = vunpack.c.l.b16 %v3047
  %v3219 = vpack.c.b16 %v3218, %v3217
  %v3221 = vsel %vm2015, %v3219, 0
  %3223 = vmatpush.bf16.msra.mxu0 0
  %3224 = vmatpush.bf16.msra.mxu0 0
  %3225 = vmatpush.bf16.msra.mxu0 0
  %3226 = vmatpush.bf16.msra.mxu0 0
  %3227 = vmatpush.bf16.msra.mxu0 0
  %3228 = vmatpush.bf16.msra.mxu0 0
  %3229 = vmatpush.bf16.msra.mxu0 0
  %3230 = vmatpush.bf16.msra.mxu0 %v3133
  %3231 = vmatmul.bf16.gmra.mxu0 %v3221
  %v3232 = vpop.f32.mrf.mxu0
  %v3233 = vadd.f32 0.0, %v3232
  %v3234 = vpop.f32.mrf.mxu0
  %v3235 = vadd.f32 0.0, %v3234
  %3236 = vdwg.mxu0
  %v3237 = vadd.f32 %v3070, %v3095
  %v3238 = vadd.f32 %v3072, %v3097
  %v3239 = vadd.f32 %v3167, %v3189
  %v3240 = vadd.f32 %v3169, %v3191
  %v3241 = vadd.f32 %v3237, %v3120
  %v3242 = vadd.f32 %v3238, %v3122
  %v3243 = vadd.f32 %v3239, %v3211
  %v3244 = vadd.f32 %v3240, %v3213
  %v3245 = vadd.f32 %v3241, %v3145
  %v3246 = vadd.f32 %v3242, %v3147
  %v3247 = vadd.f32 %v3243, %v3233
  %v3248 = vadd.f32 %v3244, %v3235
  %v3250 = vperm.slane %v181, 0
  %v3252 = vadd.f32 %v3245, %v3250
  %v3253 = vadd.f32 %v3246, %v3250
  %v3254 = vadd.f32 %v3247, %v3250
  %v3255 = vadd.f32 %v3248, %v3250
  %v3256 = vadd.f32 %v772, %v3252
  %v3257 = vadd.f32 %v773, %v3253
  %v3258 = vadd.f32 %v772, %v3254
  %v3259 = vadd.f32 %v773, %v3255
  %v3260 = vsel %vm374, %v3256, 0.0
  %3261 = vadd.xlane.f32.xlu0 %v3260
  %v3262 = vpop.xlane.xlu0 %3261
  %v3263 = vsel %vm374, %v3257, 0.0
  %3264 = vadd.xlane.f32.xlu0 %v3263
  %v3265 = vpop.xlane.xlu0 %3264
  %v3266 = vsel %vm374, %v3258, 0.0
  %3267 = vadd.xlane.f32.xlu0 %v3266
  %v3268 = vpop.xlane.xlu0 %3267
  %v3269 = vsel %vm374, %v3259, 0.0
  %3270 = vadd.xlane.f32.xlu0 %v3269
  %v3271 = vpop.xlane.xlu0 %3270
  %v3272 = vmul.f32 %v3262, %v429
  %v3273 = vmul.f32 %v3265, %v429
  %v3274 = vmul.f32 %v3268, %v429
  %v3275 = vmul.f32 %v3271, %v429
  %v3276 = vsub.f32 %v3256, %v3272
  %v3277 = vsub.f32 %v3257, %v3273
  %v3278 = vsub.f32 %v3258, %v3274
  %v3279 = vsub.f32 %v3259, %v3275
  %v3280 = vmul.f32 %v3276, %v3276
  %v3281 = vmul.f32 %v3277, %v3277
  %v3282 = vmul.f32 %v3278, %v3278
  %v3283 = vmul.f32 %v3279, %v3279
  %v3284 = vsel %vm374, %v3280, 0.0
  %3285 = vadd.xlane.f32.xlu0 %v3284
  %v3286 = vpop.xlane.xlu0 %3285
  %v3287 = vsel %vm374, %v3281, 0.0
  %3288 = vadd.xlane.f32.xlu0 %v3287
  %v3289 = vpop.xlane.xlu0 %3288
  %v3290 = vsel %vm374, %v3282, 0.0
  %3291 = vadd.xlane.f32.xlu0 %v3290
  %v3292 = vpop.xlane.xlu0 %3291
  %v3293 = vsel %vm374, %v3283, 0.0
  %3294 = vadd.xlane.f32.xlu0 %v3293
  %v3295 = vpop.xlane.xlu0 %3294
  %v3296 = vmul.f32 %v3286, %v429
  %v3297 = vmul.f32 %v3289, %v429
  %v3298 = vmul.f32 %v3292, %v429
  %v3299 = vmul.f32 %v3295, %v429
  %v3300 = vadd.f32 %v3296, 1e-05
  %v3301 = vadd.f32 %v3297, 1e-05
  %v3302 = vadd.f32 %v3298, 1e-05
  %v3303 = vadd.f32 %v3299, 1e-05
  %v3304 = vrsqrt.pop %v3300
  %v3305 = vmul.f32 %v3304, %v3300
  %v3306 = vmul.f32 %v3305, %v3304
  %v3307 = vmul.f32 0.5, %v3306
  %v3308 = vsub.f32 1.5, %v3307
  %v3309 = vmul.f32 %v3304, %v3308
  %vm3310 = vweird.f32 %v3300
  %vm3311 = vweird.f32 %v3304
  %vm3312 = vmor %vm3310, %vm3311
  %v3313 = vsel %vm3312, %v3304, %v3309
  %v3314 = vrsqrt.pop %v3301
  %v3315 = vmul.f32 %v3314, %v3301
  %v3316 = vmul.f32 %v3315, %v3314
  %v3317 = vmul.f32 0.5, %v3316
  %v3318 = vsub.f32 1.5, %v3317
  %v3319 = vmul.f32 %v3314, %v3318
  %vm3320 = vweird.f32 %v3301
  %vm3321 = vweird.f32 %v3314
  %vm3322 = vmor %vm3320, %vm3321
  %v3323 = vsel %vm3322, %v3314, %v3319
  %v3324 = vrsqrt.pop %v3302
  %v3325 = vmul.f32 %v3324, %v3302
  %v3326 = vmul.f32 %v3325, %v3324
  %v3327 = vmul.f32 0.5, %v3326
  %v3328 = vsub.f32 1.5, %v3327
  %v3329 = vmul.f32 %v3324, %v3328
  %vm3330 = vweird.f32 %v3302
  %vm3331 = vweird.f32 %v3324
  %vm3332 = vmor %vm3330, %vm3331
  %v3333 = vsel %vm3332, %v3324, %v3329
  %v3334 = vrsqrt.pop %v3303
  %v3335 = vmul.f32 %v3334, %v3303
  %v3336 = vmul.f32 %v3335, %v3334
  %v3337 = vmul.f32 0.5, %v3336
  %v3338 = vsub.f32 1.5, %v3337
  %v3339 = vmul.f32 %v3334, %v3338
  %vm3340 = vweird.f32 %v3303
  %vm3341 = vweird.f32 %v3334
  %vm3342 = vmor %vm3340, %vm3341
  %v3343 = vsel %vm3342, %v3334, %v3339
  %v3344 = vmul.f32 %v3276, %v3313
  %v3345 = vmul.f32 %v3277, %v3323
  %v3346 = vmul.f32 %v3278, %v3333
  %v3347 = vmul.f32 %v3279, %v3343
  %v3349 = vperm.slane %v182, 0
  %v3351 = vmul.f32 %v3344, %v3349
  %v3352 = vmul.f32 %v3345, %v3349
  %v3353 = vmul.f32 %v3346, %v3349
  %v3354 = vmul.f32 %v3347, %v3349
  %v3356 = vperm.slane %v183, 0
  %v3358 = vadd.f32 %v3351, %v3356
  %v3359 = vadd.f32 %v3352, %v3356
  %v3360 = vadd.f32 %v3353, %v3356
  %v3361 = vadd.f32 %v3354, %v3356
  %v3362 = vpack.c.bf16 %v3359, %v3358
  %v3363 = vpack.c.bf16 %v3361, %v3360
  %v3365 = vperm.slane %v188, 0
  %v3371 = vunpack.c.l.b16 %v184
  %v3372 = vunpack.c.l.b16 %v185
  %v3373 = vunpack.c.l.b16 %v186
  %v3374 = vunpack.c.l.b16 %v187
  %v3375 = vpack.c.b16 %v3372, %v3371
  %v3376 = vpack.c.b16 %v3374, %v3373
  %v3380 = vsel %vm374, %v3362, 0
  %v3383 = vsel %vm374, %v3363, 0
  %3385 = vmatpush.bf16.msra.mxu0 0
  %3386 = vmatpush.bf16.msra.mxu0 0
  %3387 = vmatpush.bf16.msra.mxu0 0
  %3388 = vmatpush.bf16.msra.mxu0 0
  %3389 = vmatpush.bf16.msra.mxu0 0
  %3390 = vmatpush.bf16.msra.mxu0 0
  %3391 = vmatpush.bf16.msra.mxu0 %v3376
  %3392 = vmatpush.bf16.msra.mxu0 %v3375
  %3393 = vmatmul.bf16.gmra.mxu0 %v3380
  %v3394 = vpop.f32.mrf.mxu0
  %v3395 = vadd.f32 %v3365, %v3394
  %v3396 = vpop.f32.mrf.mxu0
  %v3397 = vadd.f32 %v3365, %v3396
  %3398 = vmatmul.bf16.gmra.mxu0 %v3383
  %v3399 = vpop.f32.mrf.mxu0
  %v3400 = vadd.f32 %v3365, %v3399
  %v3401 = vpop.f32.mrf.mxu0
  %v3402 = vadd.f32 %v3365, %v3401
  %3403 = vdwg.mxu0
  %v3404 = vmul.f32 %v3395, 0.5
  %v3405 = vmul.f32 %v3397, 0.5
  %v3406 = vmul.f32 %v3400, 0.5
  %v3407 = vmul.f32 %v3402, 0.5
  %v3408 = vmul.f32 %v3395, 0.70710677
  %v3409 = vmul.f32 %v3397, 0.70710677
  %v3410 = vmul.f32 %v3400, 0.70710677
  %v3411 = vmul.f32 %v3402, 0.70710677
  %v3412 = vmul.f32 %v3408, %v3408
  %v3413 = vmin.f32 16.0, %v3412
  %v3414 = vmul.f32 %v3413, 2.1237322e-06
  %v3415 = vadd.f32 %v3414, 0.00028619796
  %v3416 = vmul.f32 %v3413, %v3415
  %v3417 = vadd.f32 %v3416, 0.0036580483
  %v3418 = vmul.f32 %v3413, %v3417
  %v3419 = vadd.f32 %v3418, 0.05243302
  %v3420 = vmul.f32 %v3413, %v3419
  %v3421 = vadd.f32 %v3420, 0.18741608
  %v3422 = vmul.f32 %v3413, %v3421
  %v3423 = vadd.f32 %v3422, 1.1283791
  %v3424 = vmul.f32 %v3408, %v3423
  %v3425 = vmul.f32 %v3413, 3.8918573e-05
  %v3426 = vadd.f32 %v3425, 0.001143296
  %v3427 = vmul.f32 %v3413, %v3426
  %v3428 = vadd.f32 %v3427, 0.014752088
  %v3429 = vmul.f32 %v3413, %v3428
  %v3430 = vadd.f32 %v3429, 0.112945676
  %v3431 = vmul.f32 %v3413, %v3430
  %v3432 = vadd.f32 %v3431, 0.4994258
  %v3433 = vmul.f32 %v3413, %v3432
  %v3434 = vadd.f32 %v3433, 1.0
  %v3435 = vrcp.pop %v3434
  %v3436 = vmul.f32 %v3434, %v3435
  %v3437 = vsub.f32 1.0, %v3436
  %v3438 = vmul.f32 %v3435, %v3437
  %v3439 = vadd.f32 %v3435, %v3438
  %vm3440 = vweird.f32 %v3434
  %vm3441 = vweird.f32 %v3435
  %vm3442 = vmor %vm3440, %vm3441
  %v3443 = vsel %vm3442, %v3435, %v3439
  %v3444 = vand.u32 2147483647, %v3434
  %vm3445 = vcmp.eq.f32.partialorder %v3444, 8.507059e+37
  %v3446 = vand.u32 %v3434, 2147483648
  %v3447 = vor.u32 1.1754944e-38, %v3446
  %v3448 = vsel %vm3445, %v3447, %v3443
  %v3449 = vmul.f32 %v3424, %v3448
  %v3450 = vmin.f32 %v3449, 1.0
  %v3451 = vmax.f32 %v3450, -1.0
  %v3452 = vmul.f32 %v3409, %v3409
  %v3453 = vmin.f32 16.0, %v3452
  %v3454 = vmul.f32 %v3453, 2.1237322e-06
  %v3455 = vadd.f32 %v3454, 0.00028619796
  %v3456 = vmul.f32 %v3453, %v3455
  %v3457 = vadd.f32 %v3456, 0.0036580483
  %v3458 = vmul.f32 %v3453, %v3457
  %v3459 = vadd.f32 %v3458, 0.05243302
  %v3460 = vmul.f32 %v3453, %v3459
  %v3461 = vadd.f32 %v3460, 0.18741608
  %v3462 = vmul.f32 %v3453, %v3461
  %v3463 = vadd.f32 %v3462, 1.1283791
  %v3464 = vmul.f32 %v3409, %v3463
  %v3465 = vmul.f32 %v3453, 3.8918573e-05
  %v3466 = vadd.f32 %v3465, 0.001143296
  %v3467 = vmul.f32 %v3453, %v3466
  %v3468 = vadd.f32 %v3467, 0.014752088
  %v3469 = vmul.f32 %v3453, %v3468
  %v3470 = vadd.f32 %v3469, 0.112945676
  %v3471 = vmul.f32 %v3453, %v3470
  %v3472 = vadd.f32 %v3471, 0.4994258
  %v3473 = vmul.f32 %v3453, %v3472
  %v3474 = vadd.f32 %v3473, 1.0
  %v3475 = vrcp.pop %v3474
  %v3476 = vmul.f32 %v3474, %v3475
  %v3477 = vsub.f32 1.0, %v3476
  %v3478 = vmul.f32 %v3475, %v3477
  %v3479 = vadd.f32 %v3475, %v3478
  %vm3480 = vweird.f32 %v3474
  %vm3481 = vweird.f32 %v3475
  %vm3482 = vmor %vm3480, %vm3481
  %v3483 = vsel %vm3482, %v3475, %v3479
  %v3484 = vand.u32 2147483647, %v3474
  %vm3485 = vcmp.eq.f32.partialorder %v3484, 8.507059e+37
  %v3486 = vand.u32 %v3474, 2147483648
  %v3487 = vor.u32 1.1754944e-38, %v3486
  %v3488 = vsel %vm3485, %v3487, %v3483
  %v3489 = vmul.f32 %v3464, %v3488
  %v3490 = vmin.f32 %v3489, 1.0
  %v3491 = vmax.f32 %v3490, -1.0
  %v3492 = vmul.f32 %v3410, %v3410
  %v3493 = vmin.f32 16.0, %v3492
  %v3494 = vmul.f32 %v3493, 2.1237322e-06
  %v3495 = vadd.f32 %v3494, 0.00028619796
  %v3496 = vmul.f32 %v3493, %v3495
  %v3497 = vadd.f32 %v3496, 0.0036580483
  %v3498 = vmul.f32 %v3493, %v3497
  %v3499 = vadd.f32 %v3498, 0.05243302
  %v3500 = vmul.f32 %v3493, %v3499
  %v3501 = vadd.f32 %v3500, 0.18741608
  %v3502 = vmul.f32 %v3493, %v3501
  %v3503 = vadd.f32 %v3502, 1.1283791
  %v3504 = vmul.f32 %v3410, %v3503
  %v3505 = vmul.f32 %v3493, 3.8918573e-05
  %v3506 = vadd.f32 %v3505, 0.001143296
  %v3507 = vmul.f32 %v3493, %v3506
  %v3508 = vadd.f32 %v3507, 0.014752088
  %v3509 = vmul.f32 %v3493, %v3508
  %v3510 = vadd.f32 %v3509, 0.112945676
  %v3511 = vmul.f32 %v3493, %v3510
  %v3512 = vadd.f32 %v3511, 0.4994258
  %v3513 = vmul.f32 %v3493, %v3512
  %v3514 = vadd.f32 %v3513, 1.0
  %v3515 = vrcp.pop %v3514
  %v3516 = vmul.f32 %v3514, %v3515
  %v3517 = vsub.f32 1.0, %v3516
  %v3518 = vmul.f32 %v3515, %v3517
  %v3519 = vadd.f32 %v3515, %v3518
  %vm3520 = vweird.f32 %v3514
  %vm3521 = vweird.f32 %v3515
  %vm3522 = vmor %vm3520, %vm3521
  %v3523 = vsel %vm3522, %v3515, %v3519
  %v3524 = vand.u32 2147483647, %v3514
  %vm3525 = vcmp.eq.f32.partialorder %v3524, 8.507059e+37
  %v3526 = vand.u32 %v3514, 2147483648
  %v3527 = vor.u32 1.1754944e-38, %v3526
  %v3528 = vsel %vm3525, %v3527, %v3523
  %v3529 = vmul.f32 %v3504, %v3528
  %v3530 = vmin.f32 %v3529, 1.0
  %v3531 = vmax.f32 %v3530, -1.0
  %v3532 = vmul.f32 %v3411, %v3411
  %v3533 = vmin.f32 16.0, %v3532
  %v3534 = vmul.f32 %v3533, 2.1237322e-06
  %v3535 = vadd.f32 %v3534, 0.00028619796
  %v3536 = vmul.f32 %v3533, %v3535
  %v3537 = vadd.f32 %v3536, 0.0036580483
  %v3538 = vmul.f32 %v3533, %v3537
  %v3539 = vadd.f32 %v3538, 0.05243302
  %v3540 = vmul.f32 %v3533, %v3539
  %v3541 = vadd.f32 %v3540, 0.18741608
  %v3542 = vmul.f32 %v3533, %v3541
  %v3543 = vadd.f32 %v3542, 1.1283791
  %v3544 = vmul.f32 %v3411, %v3543
  %v3545 = vmul.f32 %v3533, 3.8918573e-05
  %v3546 = vadd.f32 %v3545, 0.001143296
  %v3547 = vmul.f32 %v3533, %v3546
  %v3548 = vadd.f32 %v3547, 0.014752088
  %v3549 = vmul.f32 %v3533, %v3548
  %v3550 = vadd.f32 %v3549, 0.112945676
  %v3551 = vmul.f32 %v3533, %v3550
  %v3552 = vadd.f32 %v3551, 0.4994258
  %v3553 = vmul.f32 %v3533, %v3552
  %v3554 = vadd.f32 %v3553, 1.0
  %v3555 = vrcp.pop %v3554
  %v3556 = vmul.f32 %v3554, %v3555
  %v3557 = vsub.f32 1.0, %v3556
  %v3558 = vmul.f32 %v3555, %v3557
  %v3559 = vadd.f32 %v3555, %v3558
  %vm3560 = vweird.f32 %v3554
  %vm3561 = vweird.f32 %v3555
  %vm3562 = vmor %vm3560, %vm3561
  %v3563 = vsel %vm3562, %v3555, %v3559
  %v3564 = vand.u32 2147483647, %v3554
  %vm3565 = vcmp.eq.f32.partialorder %v3564, 8.507059e+37
  %v3566 = vand.u32 %v3554, 2147483648
  %v3567 = vor.u32 1.1754944e-38, %v3566
  %v3568 = vsel %vm3565, %v3567, %v3563
  %v3569 = vmul.f32 %v3544, %v3568
  %v3570 = vmin.f32 %v3569, 1.0
  %v3571 = vmax.f32 %v3570, -1.0
  %v3572 = vadd.f32 %v3451, 1.0
  %v3573 = vadd.f32 %v3491, 1.0
  %v3574 = vadd.f32 %v3531, 1.0
  %v3575 = vadd.f32 %v3571, 1.0
  %v3576 = vmul.f32 %v3404, %v3572
  %v3577 = vmul.f32 %v3405, %v3573
  %v3578 = vmul.f32 %v3406, %v3574
  %v3579 = vmul.f32 %v3407, %v3575
  %v3580 = vpack.c.bf16 %v3577, %v3576
  %v3581 = vpack.c.bf16 %v3579, %v3578
  %v3583 = vperm.slane %v205, 0
  %v3601 = vunpack.c.l.b16 %v189
  %v3602 = vunpack.c.l.b16 %v190
  %v3603 = vunpack.c.l.b16 %v191
  %v3604 = vunpack.c.l.b16 %v192
  %v3605 = vunpack.c.l.b16 %v193
  %v3606 = vunpack.c.l.b16 %v194
  %v3607 = vunpack.c.l.b16 %v195
  %v3608 = vunpack.c.l.b16 %v196
  %v3609 = vunpack.c.l.b16 %v197
  %v3610 = vunpack.c.l.b16 %v198
  %v3611 = vunpack.c.l.b16 %v199
  %v3612 = vunpack.c.l.b16 %v200
  %v3613 = vunpack.c.l.b16 %v201
  %v3614 = vunpack.c.l.b16 %v202
  %v3615 = vunpack.c.l.b16 %v203
  %v3616 = vunpack.c.l.b16 %v204
  %v3617 = vpack.c.b16 %v3602, %v3601
  %v3618 = vpack.c.b16 %v3604, %v3603
  %v3619 = vpack.c.b16 %v3606, %v3605
  %v3620 = vpack.c.b16 %v3608, %v3607
  %v3621 = vpack.c.b16 %v3610, %v3609
  %v3622 = vpack.c.b16 %v3612, %v3611
  %v3623 = vpack.c.b16 %v3614, %v3613
  %v3624 = vpack.c.b16 %v3616, %v3615
  %3633 = vmatpush.bf16.msra.mxu0 %v3624
  %3634 = vmatpush.bf16.msra.mxu0 %v3623
  %3635 = vmatpush.bf16.msra.mxu0 %v3622
  %3636 = vmatpush.bf16.msra.mxu0 %v3621
  %3637 = vmatpush.bf16.msra.mxu0 %v3620
  %3638 = vmatpush.bf16.msra.mxu0 %v3619
  %3639 = vmatpush.bf16.msra.mxu0 %v3618
  %3640 = vmatpush.bf16.msra.mxu0 %v3617
  %3641 = vmatmul.bf16.gmra.mxu0 %v3580
  %v3642 = vpop.f32.mrf.mxu0
  %v3643 = vadd.f32 %v3583, %v3642
  %v3644 = vpop.f32.mrf.mxu0
  %v3645 = vadd.f32 %v3583, %v3644
  %3646 = vmatmul.bf16.gmra.mxu0 %v3581
  %v3647 = vpop.f32.mrf.mxu0
  %v3648 = vadd.f32 %v3583, %v3647
  %v3649 = vpop.f32.mrf.mxu0
  %v3650 = vadd.f32 %v3583, %v3649
  %3651 = vdwg.mxu0
  %v3652 = vadd.f32 %v3256, %v3643
  %v3653 = vadd.f32 %v3257, %v3645
  %v3654 = vadd.f32 %v3258, %v3648
  %v3655 = vadd.f32 %v3259, %v3650
  %v3656 = vsel %vm374, %v3652, 0.0
  %3657 = vadd.xlane.f32.xlu0 %v3656
  %v3658 = vpop.xlane.xlu0 %3657
  %v3659 = vsel %vm374, %v3653, 0.0
  %3660 = vadd.xlane.f32.xlu0 %v3659
  %v3661 = vpop.xlane.xlu0 %3660
  %v3662 = vsel %vm374, %v3654, 0.0
  %3663 = vadd.xlane.f32.xlu0 %v3662
  %v3664 = vpop.xlane.xlu0 %3663
  %v3665 = vsel %vm374, %v3655, 0.0
  %3666 = vadd.xlane.f32.xlu0 %v3665
  %v3667 = vpop.xlane.xlu0 %3666
  %v3668 = vmul.f32 %v3658, %v429
  %v3669 = vmul.f32 %v3661, %v429
  %v3670 = vmul.f32 %v3664, %v429
  %v3671 = vmul.f32 %v3667, %v429
  %v3672 = vsub.f32 %v3652, %v3668
  %v3673 = vsub.f32 %v3653, %v3669
  %v3674 = vsub.f32 %v3654, %v3670
  %v3675 = vsub.f32 %v3655, %v3671
  %v3676 = vmul.f32 %v3672, %v3672
  %v3677 = vmul.f32 %v3673, %v3673
  %v3678 = vmul.f32 %v3674, %v3674
  %v3679 = vmul.f32 %v3675, %v3675
  %v3680 = vsel %vm374, %v3676, 0.0
  %3681 = vadd.xlane.f32.xlu0 %v3680
  %v3682 = vpop.xlane.xlu0 %3681
  %v3683 = vsel %vm374, %v3677, 0.0
  %3684 = vadd.xlane.f32.xlu0 %v3683
  %v3685 = vpop.xlane.xlu0 %3684
  %v3686 = vsel %vm374, %v3678, 0.0
  %3687 = vadd.xlane.f32.xlu0 %v3686
  %v3688 = vpop.xlane.xlu0 %3687
  %v3689 = vsel %vm374, %v3679, 0.0
  %3690 = vadd.xlane.f32.xlu0 %v3689
  %v3691 = vpop.xlane.xlu0 %3690
  %v3692 = vmul.f32 %v3682, %v429
  %v3693 = vmul.f32 %v3685, %v429
  %v3694 = vmul.f32 %v3688, %v429
  %v3695 = vmul.f32 %v3691, %v429
  %v3696 = vadd.f32 %v3692, 1e-05
  %v3697 = vadd.f32 %v3693, 1e-05
  %v3698 = vadd.f32 %v3694, 1e-05
  %v3699 = vadd.f32 %v3695, 1e-05
  %v3700 = vrsqrt.pop %v3696
  %v3701 = vmul.f32 %v3700, %v3696
  %v3702 = vmul.f32 %v3701, %v3700
  %v3703 = vmul.f32 0.5, %v3702
  %v3704 = vsub.f32 1.5, %v3703
  %v3705 = vmul.f32 %v3700, %v3704
  %vm3706 = vweird.f32 %v3696
  %vm3707 = vweird.f32 %v3700
  %vm3708 = vmor %vm3706, %vm3707
  %v3709 = vsel %vm3708, %v3700, %v3705
  %v3710 = vrsqrt.pop %v3697
  %v3711 = vmul.f32 %v3710, %v3697
  %v3712 = vmul.f32 %v3711, %v3710
  %v3713 = vmul.f32 0.5, %v3712
  %v3714 = vsub.f32 1.5, %v3713
  %v3715 = vmul.f32 %v3710, %v3714
  %vm3716 = vweird.f32 %v3697
  %vm3717 = vweird.f32 %v3710
  %vm3718 = vmor %vm3716, %vm3717
  %v3719 = vsel %vm3718, %v3710, %v3715
  %v3720 = vrsqrt.pop %v3698
  %v3721 = vmul.f32 %v3720, %v3698
  %v3722 = vmul.f32 %v3721, %v3720
  %v3723 = vmul.f32 0.5, %v3722
  %v3724 = vsub.f32 1.5, %v3723
  %v3725 = vmul.f32 %v3720, %v3724
  %vm3726 = vweird.f32 %v3698
  %vm3727 = vweird.f32 %v3720
  %vm3728 = vmor %vm3726, %vm3727
  %v3729 = vsel %vm3728, %v3720, %v3725
  %v3730 = vrsqrt.pop %v3699
  %v3731 = vmul.f32 %v3730, %v3699
  %v3732 = vmul.f32 %v3731, %v3730
  %v3733 = vmul.f32 0.5, %v3732
  %v3734 = vsub.f32 1.5, %v3733
  %v3735 = vmul.f32 %v3730, %v3734
  %vm3736 = vweird.f32 %v3699
  %vm3737 = vweird.f32 %v3730
  %vm3738 = vmor %vm3736, %vm3737
  %v3739 = vsel %vm3738, %v3730, %v3735
  %v3740 = vmul.f32 %v3672, %v3709
  %v3741 = vmul.f32 %v3673, %v3719
  %v3742 = vmul.f32 %v3674, %v3729
  %v3743 = vmul.f32 %v3675, %v3739
  %v3745 = vperm.slane %v206, 0
  %v3747 = vmul.f32 %v1110, %v3745
  %v3748 = vmul.f32 %v1111, %v3745
  %v3749 = vmul.f32 %v1112, %v3745
  %v3750 = vmul.f32 %v1113, %v3745
  %v3751 = vmul.f32 %v1114, %v3745
  %v3752 = vmul.f32 %v1115, %v3745
  %v3753 = vmul.f32 %v1116, %v3745
  %v3754 = vmul.f32 %v1117, %v3745
  %v3755 = vmul.f32 %v3740, %v3745
  %v3756 = vmul.f32 %v3741, %v3745
  %v3757 = vmul.f32 %v1118, %v3745
  %v3758 = vmul.f32 %v1119, %v3745
  %v3759 = vmul.f32 %v1120, %v3745
  %v3760 = vmul.f32 %v1121, %v3745
  %v3761 = vmul.f32 %v1122, %v3745
  %v3762 = vmul.f32 %v1123, %v3745
  %v3763 = vmul.f32 %v1124, %v3745
  %v3764 = vmul.f32 %v1125, %v3745
  %v3765 = vmul.f32 %v3742, %v3745
  %v3766 = vmul.f32 %v3743, %v3745
  %v3768 = vperm.slane %v207, 0
  %v3770 = vadd.f32 %v3747, %v3768
  %v3771 = vadd.f32 %v3748, %v3768
  %v3772 = vadd.f32 %v3749, %v3768
  %v3773 = vadd.f32 %v3750, %v3768
  %v3774 = vadd.f32 %v3751, %v3768
  %v3775 = vadd.f32 %v3752, %v3768
  %v3776 = vadd.f32 %v3753, %v3768
  %v3777 = vadd.f32 %v3754, %v3768
  %v3778 = vadd.f32 %v3755, %v3768
  %v3779 = vadd.f32 %v3756, %v3768
  %v3780 = vadd.f32 %v3757, %v3768
  %v3781 = vadd.f32 %v3758, %v3768
  %v3782 = vadd.f32 %v3759, %v3768
  %v3783 = vadd.f32 %v3760, %v3768
  %v3784 = vadd.f32 %v3761, %v3768
  %v3785 = vadd.f32 %v3762, %v3768
  %v3786 = vadd.f32 %v3763, %v3768
  %v3787 = vadd.f32 %v3764, %v3768
  %v3788 = vadd.f32 %v3765, %v3768
  %v3789 = vadd.f32 %v3766, %v3768
  %v3790 = vpack.c.bf16 %v3652, %v3652
  %v3791 = vpack.c.bf16 %v3653, %v3653
  %v3792 = vpack.c.bf16 %v3654, %v3654
  %v3793 = vpack.c.bf16 %v3655, %v3655
  %v3796 = vunpack.c.l.b16 %v3790
  %v3797 = vunpack.c.l.b16 %v3791
  %v3798 = vpack.c.b16 %v3797, %v3796
  %v3803 = vunpack.c.l.b16 %v208
  %v3804 = vunpack.c.l.b16 %v209
  %v3805 = vunpack.c.l.b16 %v210
  %v3806 = vunpack.c.l.b16 %v211
  %v3807 = vpack.c.b16 %v3804, %v3803
  %v3808 = vpack.c.b16 %v3806, %v3805
  %v3812 = vsel %vm374, %v3798, 0
  %3814 = vmatpush.bf16.msra.mxu0 0
  %3815 = vmatpush.bf16.msra.mxu0 0
  %3816 = vmatpush.bf16.msra.mxu0 0
  %3817 = vmatpush.bf16.msra.mxu0 0
  %3818 = vmatpush.bf16.msra.mxu0 0
  %3819 = vmatpush.bf16.msra.mxu0 0
  %3820 = vmatpush.bf16.msra.mxu0 %v3808
  %3821 = vmatpush.bf16.msra.mxu0 %v3807
  %3822 = vmatmul.bf16.gmra.mxu0 %v3812
  %v3823 = vpop.f32.mrf.mxu0
  %v3824 = vadd.f32 0.0, %v3823
  %v3825 = vpop.f32.mrf.mxu0
  %v3826 = vadd.f32 0.0, %v3825
  %3827 = vdwg.mxu0
  %v3832 = vunpack.c.l.b16 %v212
  %v3833 = vunpack.c.l.b16 %v213
  %v3834 = vunpack.c.l.b16 %v214
  %v3835 = vunpack.c.l.b16 %v215
  %v3836 = vpack.c.b16 %v3833, %v3832
  %v3837 = vpack.c.b16 %v3835, %v3834
  %3840 = vmatpush.bf16.msra.mxu0 0
  %3841 = vmatpush.bf16.msra.mxu0 0
  %3842 = vmatpush.bf16.msra.mxu0 0
  %3843 = vmatpush.bf16.msra.mxu0 0
  %3844 = vmatpush.bf16.msra.mxu0 0
  %3845 = vmatpush.bf16.msra.mxu0 0
  %3846 = vmatpush.bf16.msra.mxu0 %v3837
  %3847 = vmatpush.bf16.msra.mxu0 %v3836
  %3848 = vmatmul.bf16.gmra.mxu0 %v3812
  %v3849 = vpop.f32.mrf.mxu0
  %v3850 = vadd.f32 0.0, %v3849
  %v3851 = vpop.f32.mrf.mxu0
  %v3852 = vadd.f32 0.0, %v3851
  %3853 = vdwg.mxu0
  %v3858 = vunpack.c.l.b16 %v216
  %v3859 = vunpack.c.l.b16 %v217
  %v3860 = vunpack.c.l.b16 %v218
  %v3861 = vunpack.c.l.b16 %v219
  %v3862 = vpack.c.b16 %v3859, %v3858
  %v3863 = vpack.c.b16 %v3861, %v3860
  %3866 = vmatpush.bf16.msra.mxu0 0
  %3867 = vmatpush.bf16.msra.mxu0 0
  %3868 = vmatpush.bf16.msra.mxu0 0
  %3869 = vmatpush.bf16.msra.mxu0 0
  %3870 = vmatpush.bf16.msra.mxu0 0
  %3871 = vmatpush.bf16.msra.mxu0 0
  %3872 = vmatpush.bf16.msra.mxu0 %v3863
  %3873 = vmatpush.bf16.msra.mxu0 %v3862
  %3874 = vmatmul.bf16.gmra.mxu0 %v3812
  %v3875 = vpop.f32.mrf.mxu0
  %v3876 = vadd.f32 0.0, %v3875
  %v3877 = vpop.f32.mrf.mxu0
  %v3878 = vadd.f32 0.0, %v3877
  %3879 = vdwg.mxu0
  %v3884 = vunpack.c.l.b16 %v220
  %v3885 = vunpack.c.l.b16 %v221
  %v3886 = vunpack.c.l.b16 %v222
  %v3887 = vunpack.c.l.b16 %v223
  %v3888 = vpack.c.b16 %v3885, %v3884
  %v3889 = vpack.c.b16 %v3887, %v3886
  %3892 = vmatpush.bf16.msra.mxu0 0
  %3893 = vmatpush.bf16.msra.mxu0 0
  %3894 = vmatpush.bf16.msra.mxu0 0
  %3895 = vmatpush.bf16.msra.mxu0 0
  %3896 = vmatpush.bf16.msra.mxu0 0
  %3897 = vmatpush.bf16.msra.mxu0 0
  %3898 = vmatpush.bf16.msra.mxu0 %v3889
  %3899 = vmatpush.bf16.msra.mxu0 %v3888
  %3900 = vmatmul.bf16.gmra.mxu0 %v3812
  %v3901 = vpop.f32.mrf.mxu0
  %v3902 = vadd.f32 0.0, %v3901
  %v3903 = vpop.f32.mrf.mxu0
  %v3904 = vadd.f32 0.0, %v3903
  %3905 = vdwg.mxu0
  %v3908 = vunpack.c.l.b16 %v3792
  %v3909 = vunpack.c.l.b16 %v3793
  %v3910 = vpack.c.b16 %v3909, %v3908
  %v3912 = vsel %vm374, %v3910, 0
  %3914 = vmatpush.bf16.msra.mxu0 0
  %3915 = vmatpush.bf16.msra.mxu0 0
  %3916 = vmatpush.bf16.msra.mxu0 0
  %3917 = vmatpush.bf16.msra.mxu0 0
  %3918 = vmatpush.bf16.msra.mxu0 0
  %3919 = vmatpush.bf16.msra.mxu0 0
  %3920 = vmatpush.bf16.msra.mxu0 %v3808
  %3921 = vmatpush.bf16.msra.mxu0 %v3807
  %3922 = vmatmul.bf16.gmra.mxu0 %v3912
  %v3923 = vpop.f32.mrf.mxu0
  %v3924 = vadd.f32 0.0, %v3923
  %v3925 = vpop.f32.mrf.mxu0
  %v3926 = vadd.f32 0.0, %v3925
  %3927 = vdwg.mxu0
  %3928 = vmatpush.bf16.msra.mxu0 0
  %3929 = vmatpush.bf16.msra.mxu0 0
  %3930 = vmatpush.bf16.msra.mxu0 0
  %3931 = vmatpush.bf16.msra.mxu0 0
  %3932 = vmatpush.bf16.msra.mxu0 0
  %3933 = vmatpush.bf16.msra.mxu0 0
  %3934 = vmatpush.bf16.msra.mxu0 %v3837
  %3935 = vmatpush.bf16.msra.mxu0 %v3836
  %3936 = vmatmul.bf16.gmra.mxu0 %v3912
  %v3937 = vpop.f32.mrf.mxu0
  %v3938 = vadd.f32 0.0, %v3937
  %v3939 = vpop.f32.mrf.mxu0
  %v3940 = vadd.f32 0.0, %v3939
  %3941 = vdwg.mxu0
  %3942 = vmatpush.bf16.msra.mxu0 0
  %3943 = vmatpush.bf16.msra.mxu0 0
  %3944 = vmatpush.bf16.msra.mxu0 0
  %3945 = vmatpush.bf16.msra.mxu0 0
  %3946 = vmatpush.bf16.msra.mxu0 0
  %3947 = vmatpush.bf16.msra.mxu0 0
  %3948 = vmatpush.bf16.msra.mxu0 %v3863
  %3949 = vmatpush.bf16.msra.mxu0 %v3862
  %3950 = vmatmul.bf16.gmra.mxu0 %v3912
  %v3951 = vpop.f32.mrf.mxu0
  %v3952 = vadd.f32 0.0, %v3951
  %v3953 = vpop.f32.mrf.mxu0
  %v3954 = vadd.f32 0.0, %v3953
  %3955 = vdwg.mxu0
  %3956 = vmatpush.bf16.msra.mxu0 0
  %3957 = vmatpush.bf16.msra.mxu0 0
  %3958 = vmatpush.bf16.msra.mxu0 0
  %3959 = vmatpush.bf16.msra.mxu0 0
  %3960 = vmatpush.bf16.msra.mxu0 0
  %3961 = vmatpush.bf16.msra.mxu0 0
  %3962 = vmatpush.bf16.msra.mxu0 %v3889
  %3963 = vmatpush.bf16.msra.mxu0 %v3888
  %3964 = vmatmul.bf16.gmra.mxu0 %v3912
  %v3965 = vpop.f32.mrf.mxu0
  %v3966 = vadd.f32 0.0, %v3965
  %v3967 = vpop.f32.mrf.mxu0
  %v3968 = vadd.f32 0.0, %v3967
  %3969 = vdwg.mxu0
  %v3970 = vpack.c.bf16 %v3770, %v3770
  %v3971 = vpack.c.bf16 %v3771, %v3771
  %v3972 = vpack.c.bf16 %v3772, %v3772
  %v3973 = vpack.c.bf16 %v3773, %v3773
  %v3974 = vpack.c.bf16 %v3774, %v3774
  %v3975 = vpack.c.bf16 %v3775, %v3775
  %v3976 = vpack.c.bf16 %v3776, %v3776
  %v3977 = vpack.c.bf16 %v3777, %v3777
  %v3978 = vpack.c.bf16 %v3778, %v3778
  %v3979 = vpack.c.bf16 %v3779, %v3779
  %v3980 = vpack.c.bf16 %v3780, %v3780
  %v3981 = vpack.c.bf16 %v3781, %v3781
  %v3982 = vpack.c.bf16 %v3782, %v3782
  %v3983 = vpack.c.bf16 %v3783, %v3783
  %v3984 = vpack.c.bf16 %v3784, %v3784
  %v3985 = vpack.c.bf16 %v3785, %v3785
  %v3986 = vpack.c.bf16 %v3786, %v3786
  %v3987 = vpack.c.bf16 %v3787, %v3787
  %v3988 = vpack.c.bf16 %v3788, %v3788
  %v3989 = vpack.c.bf16 %v3789, %v3789
  %v4000 = vunpack.c.l.b16 %v3970
  %v4001 = vunpack.c.l.b16 %v3971
  %v4002 = vunpack.c.l.b16 %v3972
  %v4003 = vunpack.c.l.b16 %v3973
  %v4004 = vunpack.c.l.b16 %v3974
  %v4005 = vunpack.c.l.b16 %v3975
  %v4006 = vunpack.c.l.b16 %v3976
  %v4007 = vunpack.c.l.b16 %v3977
  %v4008 = vunpack.c.l.b16 %v3978
  %v4009 = vunpack.c.l.b16 %v3979
  %v4010 = vpack.c.b16 %v4001, %v4000
  %v4011 = vpack.c.b16 %v4003, %v4002
  %v4012 = vpack.c.b16 %v4005, %v4004
  %v4013 = vpack.c.b16 %v4007, %v4006
  %v4014 = vpack.c.b16 %v4009, %v4008
  %v4019 = vunpack.c.l.b16 %v224
  %v4020 = vunpack.c.l.b16 %v225
  %v4021 = vunpack.c.l.b16 %v226
  %v4022 = vunpack.c.l.b16 %v227
  %v4023 = vpack.c.b16 %v4020, %v4019
  %v4024 = vpack.c.b16 %v4022, %v4021
  %v4028 = vsel %vm374, %v4010, 0
  %v4031 = vsel %vm374, %v4011, 0
  %v4034 = vsel %vm374, %v4012, 0
  %v4037 = vsel %vm374, %v4013, 0
  %v4040 = vsel %vm374, %v4014, 0
  %4042 = vmatpush.bf16.msra.mxu0 0
  %4043 = vmatpush.bf16.msra.mxu0 0
  %4044 = vmatpush.bf16.msra.mxu0 0
  %4045 = vmatpush.bf16.msra.mxu0 0
  %4046 = vmatpush.bf16.msra.mxu0 0
  %4047 = vmatpush.bf16.msra.mxu0 0
  %4048 = vmatpush.bf16.msra.mxu0 %v4024
  %4049 = vmatpush.bf16.msra.mxu0 %v4023
  %4050 = vmatmul.bf16.gmra.mxu0 %v4028
  %v4051 = vpop.f32.mrf.mxu0
  %v4052 = vadd.f32 0.0, %v4051
  %v4053 = vpop.f32.mrf.mxu0
  %v4054 = vadd.f32 0.0, %v4053
  %4055 = vmatmul.bf16.gmra.mxu0 %v4031
  %v4056 = vpop.f32.mrf.mxu0
  %v4057 = vadd.f32 0.0, %v4056
  %v4058 = vpop.f32.mrf.mxu0
  %v4059 = vadd.f32 0.0, %v4058
  %4060 = vmatmul.bf16.gmra.mxu0 %v4034
  %v4061 = vpop.f32.mrf.mxu0
  %v4062 = vadd.f32 0.0, %v4061
  %v4063 = vpop.f32.mrf.mxu0
  %v4064 = vadd.f32 0.0, %v4063
  %4065 = vmatmul.bf16.gmra.mxu0 %v4037
  %v4066 = vpop.f32.mrf.mxu0
  %v4067 = vadd.f32 0.0, %v4066
  %v4068 = vpop.f32.mrf.mxu0
  %v4069 = vadd.f32 0.0, %v4068
  %4070 = vmatmul.bf16.gmra.mxu0 %v4040
  %v4071 = vpop.f32.mrf.mxu0
  %v4072 = vadd.f32 0.0, %v4071
  %v4073 = vpop.f32.mrf.mxu0
  %v4074 = vadd.f32 0.0, %v4073
  %4075 = vdwg.mxu0
  %v4080 = vunpack.c.l.b16 %v228
  %v4081 = vunpack.c.l.b16 %v229
  %v4082 = vunpack.c.l.b16 %v230
  %v4083 = vunpack.c.l.b16 %v231
  %v4084 = vpack.c.b16 %v4081, %v4080
  %v4085 = vpack.c.b16 %v4083, %v4082
  %4088 = vmatpush.bf16.msra.mxu0 0
  %4089 = vmatpush.bf16.msra.mxu0 0
  %4090 = vmatpush.bf16.msra.mxu0 0
  %4091 = vmatpush.bf16.msra.mxu0 0
  %4092 = vmatpush.bf16.msra.mxu0 0
  %4093 = vmatpush.bf16.msra.mxu0 0
  %4094 = vmatpush.bf16.msra.mxu0 %v4085
  %4095 = vmatpush.bf16.msra.mxu0 %v4084
  %4096 = vmatmul.bf16.gmra.mxu0 %v4028
  %v4097 = vpop.f32.mrf.mxu0
  %v4098 = vadd.f32 0.0, %v4097
  %v4099 = vpop.f32.mrf.mxu0
  %v4100 = vadd.f32 0.0, %v4099
  %4101 = vmatmul.bf16.gmra.mxu0 %v4031
  %v4102 = vpop.f32.mrf.mxu0
  %v4103 = vadd.f32 0.0, %v4102
  %v4104 = vpop.f32.mrf.mxu0
  %v4105 = vadd.f32 0.0, %v4104
  %4106 = vmatmul.bf16.gmra.mxu0 %v4034
  %v4107 = vpop.f32.mrf.mxu0
  %v4108 = vadd.f32 0.0, %v4107
  %v4109 = vpop.f32.mrf.mxu0
  %v4110 = vadd.f32 0.0, %v4109
  %4111 = vmatmul.bf16.gmra.mxu0 %v4037
  %v4112 = vpop.f32.mrf.mxu0
  %v4113 = vadd.f32 0.0, %v4112
  %v4114 = vpop.f32.mrf.mxu0
  %v4115 = vadd.f32 0.0, %v4114
  %4116 = vmatmul.bf16.gmra.mxu0 %v4040
  %v4117 = vpop.f32.mrf.mxu0
  %v4118 = vadd.f32 0.0, %v4117
  %v4119 = vpop.f32.mrf.mxu0
  %v4120 = vadd.f32 0.0, %v4119
  %4121 = vdwg.mxu0
  %v4126 = vunpack.c.l.b16 %v232
  %v4127 = vunpack.c.l.b16 %v233
  %v4128 = vunpack.c.l.b16 %v234
  %v4129 = vunpack.c.l.b16 %v235
  %v4130 = vpack.c.b16 %v4127, %v4126
  %v4131 = vpack.c.b16 %v4129, %v4128
  %4134 = vmatpush.bf16.msra.mxu0 0
  %4135 = vmatpush.bf16.msra.mxu0 0
  %4136 = vmatpush.bf16.msra.mxu0 0
  %4137 = vmatpush.bf16.msra.mxu0 0
  %4138 = vmatpush.bf16.msra.mxu0 0
  %4139 = vmatpush.bf16.msra.mxu0 0
  %4140 = vmatpush.bf16.msra.mxu0 %v4131
  %4141 = vmatpush.bf16.msra.mxu0 %v4130
  %4142 = vmatmul.bf16.gmra.mxu0 %v4028
  %v4143 = vpop.f32.mrf.mxu0
  %v4144 = vadd.f32 0.0, %v4143
  %v4145 = vpop.f32.mrf.mxu0
  %v4146 = vadd.f32 0.0, %v4145
  %4147 = vmatmul.bf16.gmra.mxu0 %v4031
  %v4148 = vpop.f32.mrf.mxu0
  %v4149 = vadd.f32 0.0, %v4148
  %v4150 = vpop.f32.mrf.mxu0
  %v4151 = vadd.f32 0.0, %v4150
  %4152 = vmatmul.bf16.gmra.mxu0 %v4034
  %v4153 = vpop.f32.mrf.mxu0
  %v4154 = vadd.f32 0.0, %v4153
  %v4155 = vpop.f32.mrf.mxu0
  %v4156 = vadd.f32 0.0, %v4155
  %4157 = vmatmul.bf16.gmra.mxu0 %v4037
  %v4158 = vpop.f32.mrf.mxu0
  %v4159 = vadd.f32 0.0, %v4158
  %v4160 = vpop.f32.mrf.mxu0
  %v4161 = vadd.f32 0.0, %v4160
  %4162 = vmatmul.bf16.gmra.mxu0 %v4040
  %v4163 = vpop.f32.mrf.mxu0
  %v4164 = vadd.f32 0.0, %v4163
  %v4165 = vpop.f32.mrf.mxu0
  %v4166 = vadd.f32 0.0, %v4165
  %4167 = vdwg.mxu0
  %v4172 = vunpack.c.l.b16 %v236
  %v4173 = vunpack.c.l.b16 %v237
  %v4174 = vunpack.c.l.b16 %v238
  %v4175 = vunpack.c.l.b16 %v239
  %v4176 = vpack.c.b16 %v4173, %v4172
  %v4177 = vpack.c.b16 %v4175, %v4174
  %4180 = vmatpush.bf16.msra.mxu0 0
  %4181 = vmatpush.bf16.msra.mxu0 0
  %4182 = vmatpush.bf16.msra.mxu0 0
  %4183 = vmatpush.bf16.msra.mxu0 0
  %4184 = vmatpush.bf16.msra.mxu0 0
  %4185 = vmatpush.bf16.msra.mxu0 0
  %4186 = vmatpush.bf16.msra.mxu0 %v4177
  %4187 = vmatpush.bf16.msra.mxu0 %v4176
  %4188 = vmatmul.bf16.gmra.mxu0 %v4028
  %v4189 = vpop.f32.mrf.mxu0
  %v4190 = vadd.f32 0.0, %v4189
  %v4191 = vpop.f32.mrf.mxu0
  %v4192 = vadd.f32 0.0, %v4191
  %4193 = vmatmul.bf16.gmra.mxu0 %v4031
  %v4194 = vpop.f32.mrf.mxu0
  %v4195 = vadd.f32 0.0, %v4194
  %v4196 = vpop.f32.mrf.mxu0
  %v4197 = vadd.f32 0.0, %v4196
  %4198 = vmatmul.bf16.gmra.mxu0 %v4034
  %v4199 = vpop.f32.mrf.mxu0
  %v4200 = vadd.f32 0.0, %v4199
  %v4201 = vpop.f32.mrf.mxu0
  %v4202 = vadd.f32 0.0, %v4201
  %4203 = vmatmul.bf16.gmra.mxu0 %v4037
  %v4204 = vpop.f32.mrf.mxu0
  %v4205 = vadd.f32 0.0, %v4204
  %v4206 = vpop.f32.mrf.mxu0
  %v4207 = vadd.f32 0.0, %v4206
  %4208 = vmatmul.bf16.gmra.mxu0 %v4040
  %v4209 = vpop.f32.mrf.mxu0
  %v4210 = vadd.f32 0.0, %v4209
  %v4211 = vpop.f32.mrf.mxu0
  %v4212 = vadd.f32 0.0, %v4211
  %4213 = vdwg.mxu0
  %v4224 = vunpack.c.l.b16 %v3980
  %v4225 = vunpack.c.l.b16 %v3981
  %v4226 = vunpack.c.l.b16 %v3982
  %v4227 = vunpack.c.l.b16 %v3983
  %v4228 = vunpack.c.l.b16 %v3984
  %v4229 = vunpack.c.l.b16 %v3985
  %v4230 = vunpack.c.l.b16 %v3986
  %v4231 = vunpack.c.l.b16 %v3987
  %v4232 = vunpack.c.l.b16 %v3988
  %v4233 = vunpack.c.l.b16 %v3989
  %v4234 = vpack.c.b16 %v4225, %v4224
  %v4235 = vpack.c.b16 %v4227, %v4226
  %v4236 = vpack.c.b16 %v4229, %v4228
  %v4237 = vpack.c.b16 %v4231, %v4230
  %v4238 = vpack.c.b16 %v4233, %v4232
  %v4240 = vsel %vm374, %v4234, 0
  %v4243 = vsel %vm374, %v4235, 0
  %v4246 = vsel %vm374, %v4236, 0
  %v4249 = vsel %vm374, %v4237, 0
  %v4252 = vsel %vm374, %v4238, 0
  %4254 = vmatpush.bf16.msra.mxu0 0
  %4255 = vmatpush.bf16.msra.mxu0 0
  %4256 = vmatpush.bf16.msra.mxu0 0
  %4257 = vmatpush.bf16.msra.mxu0 0
  %4258 = vmatpush.bf16.msra.mxu0 0
  %4259 = vmatpush.bf16.msra.mxu0 0
  %4260 = vmatpush.bf16.msra.mxu0 %v4024
  %4261 = vmatpush.bf16.msra.mxu0 %v4023
  %4262 = vmatmul.bf16.gmra.mxu0 %v4240
  %v4263 = vpop.f32.mrf.mxu0
  %v4264 = vadd.f32 0.0, %v4263
  %v4265 = vpop.f32.mrf.mxu0
  %v4266 = vadd.f32 0.0, %v4265
  %4267 = vmatmul.bf16.gmra.mxu0 %v4243
  %v4268 = vpop.f32.mrf.mxu0
  %v4269 = vadd.f32 0.0, %v4268
  %v4270 = vpop.f32.mrf.mxu0
  %v4271 = vadd.f32 0.0, %v4270
  %4272 = vmatmul.bf16.gmra.mxu0 %v4246
  %v4273 = vpop.f32.mrf.mxu0
  %v4274 = vadd.f32 0.0, %v4273
  %v4275 = vpop.f32.mrf.mxu0
  %v4276 = vadd.f32 0.0, %v4275
  %4277 = vmatmul.bf16.gmra.mxu0 %v4249
  %v4278 = vpop.f32.mrf.mxu0
  %v4279 = vadd.f32 0.0, %v4278
  %v4280 = vpop.f32.mrf.mxu0
  %v4281 = vadd.f32 0.0, %v4280
  %4282 = vmatmul.bf16.gmra.mxu0 %v4252
  %v4283 = vpop.f32.mrf.mxu0
  %v4284 = vadd.f32 0.0, %v4283
  %v4285 = vpop.f32.mrf.mxu0
  %v4286 = vadd.f32 0.0, %v4285
  %4287 = vdwg.mxu0
  %4288 = vmatpush.bf16.msra.mxu0 0
  %4289 = vmatpush.bf16.msra.mxu0 0
  %4290 = vmatpush.bf16.msra.mxu0 0
  %4291 = vmatpush.bf16.msra.mxu0 0
  %4292 = vmatpush.bf16.msra.mxu0 0
  %4293 = vmatpush.bf16.msra.mxu0 0
  %4294 = vmatpush.bf16.msra.mxu0 %v4085
  %4295 = vmatpush.bf16.msra.mxu0 %v4084
  %4296 = vmatmul.bf16.gmra.mxu0 %v4240
  %v4297 = vpop.f32.mrf.mxu0
  %v4298 = vadd.f32 0.0, %v4297
  %v4299 = vpop.f32.mrf.mxu0
  %v4300 = vadd.f32 0.0, %v4299
  %4301 = vmatmul.bf16.gmra.mxu0 %v4243
  %v4302 = vpop.f32.mrf.mxu0
  %v4303 = vadd.f32 0.0, %v4302
  %v4304 = vpop.f32.mrf.mxu0
  %v4305 = vadd.f32 0.0, %v4304
  %4306 = vmatmul.bf16.gmra.mxu0 %v4246
  %v4307 = vpop.f32.mrf.mxu0
  %v4308 = vadd.f32 0.0, %v4307
  %v4309 = vpop.f32.mrf.mxu0
  %v4310 = vadd.f32 0.0, %v4309
  %4311 = vmatmul.bf16.gmra.mxu0 %v4249
  %v4312 = vpop.f32.mrf.mxu0
  %v4313 = vadd.f32 0.0, %v4312
  %v4314 = vpop.f32.mrf.mxu0
  %v4315 = vadd.f32 0.0, %v4314
  %4316 = vmatmul.bf16.gmra.mxu0 %v4252
  %v4317 = vpop.f32.mrf.mxu0
  %v4318 = vadd.f32 0.0, %v4317
  %v4319 = vpop.f32.mrf.mxu0
  %v4320 = vadd.f32 0.0, %v4319
  %4321 = vdwg.mxu0
  %4322 = vmatpush.bf16.msra.mxu0 0
  %4323 = vmatpush.bf16.msra.mxu0 0
  %4324 = vmatpush.bf16.msra.mxu0 0
  %4325 = vmatpush.bf16.msra.mxu0 0
  %4326 = vmatpush.bf16.msra.mxu0 0
  %4327 = vmatpush.bf16.msra.mxu0 0
  %4328 = vmatpush.bf16.msra.mxu0 %v4131
  %4329 = vmatpush.bf16.msra.mxu0 %v4130
  %4330 = vmatmul.bf16.gmra.mxu0 %v4240
  %v4331 = vpop.f32.mrf.mxu0
  %v4332 = vadd.f32 0.0, %v4331
  %v4333 = vpop.f32.mrf.mxu0
  %v4334 = vadd.f32 0.0, %v4333
  %4335 = vmatmul.bf16.gmra.mxu0 %v4243
  %v4336 = vpop.f32.mrf.mxu0
  %v4337 = vadd.f32 0.0, %v4336
  %v4338 = vpop.f32.mrf.mxu0
  %v4339 = vadd.f32 0.0, %v4338
  %4340 = vmatmul.bf16.gmra.mxu0 %v4246
  %v4341 = vpop.f32.mrf.mxu0
  %v4342 = vadd.f32 0.0, %v4341
  %v4343 = vpop.f32.mrf.mxu0
  %v4344 = vadd.f32 0.0, %v4343
  %4345 = vmatmul.bf16.gmra.mxu0 %v4249
  %v4346 = vpop.f32.mrf.mxu0
  %v4347 = vadd.f32 0.0, %v4346
  %v4348 = vpop.f32.mrf.mxu0
  %v4349 = vadd.f32 0.0, %v4348
  %4350 = vmatmul.bf16.gmra.mxu0 %v4252
  %v4351 = vpop.f32.mrf.mxu0
  %v4352 = vadd.f32 0.0, %v4351
  %v4353 = vpop.f32.mrf.mxu0
  %v4354 = vadd.f32 0.0, %v4353
  %4355 = vdwg.mxu0
  %4356 = vmatpush.bf16.msra.mxu0 0
  %4357 = vmatpush.bf16.msra.mxu0 0
  %4358 = vmatpush.bf16.msra.mxu0 0
  %4359 = vmatpush.bf16.msra.mxu0 0
  %4360 = vmatpush.bf16.msra.mxu0 0
  %4361 = vmatpush.bf16.msra.mxu0 0
  %4362 = vmatpush.bf16.msra.mxu0 %v4177
  %4363 = vmatpush.bf16.msra.mxu0 %v4176
  %4364 = vmatmul.bf16.gmra.mxu0 %v4240
  %v4365 = vpop.f32.mrf.mxu0
  %v4366 = vadd.f32 0.0, %v4365
  %v4367 = vpop.f32.mrf.mxu0
  %v4368 = vadd.f32 0.0, %v4367
  %4369 = vmatmul.bf16.gmra.mxu0 %v4243
  %v4370 = vpop.f32.mrf.mxu0
  %v4371 = vadd.f32 0.0, %v4370
  %v4372 = vpop.f32.mrf.mxu0
  %v4373 = vadd.f32 0.0, %v4372
  %4374 = vmatmul.bf16.gmra.mxu0 %v4246
  %v4375 = vpop.f32.mrf.mxu0
  %v4376 = vadd.f32 0.0, %v4375
  %v4377 = vpop.f32.mrf.mxu0
  %v4378 = vadd.f32 0.0, %v4377
  %4379 = vmatmul.bf16.gmra.mxu0 %v4249
  %v4380 = vpop.f32.mrf.mxu0
  %v4381 = vadd.f32 0.0, %v4380
  %v4382 = vpop.f32.mrf.mxu0
  %v4383 = vadd.f32 0.0, %v4382
  %4384 = vmatmul.bf16.gmra.mxu0 %v4252
  %v4385 = vpop.f32.mrf.mxu0
  %v4386 = vadd.f32 0.0, %v4385
  %v4387 = vpop.f32.mrf.mxu0
  %v4388 = vadd.f32 0.0, %v4387
  %4389 = vdwg.mxu0
  %v4394 = vunpack.c.l.b16 %v240
  %v4395 = vunpack.c.l.b16 %v241
  %v4396 = vunpack.c.l.b16 %v242
  %v4397 = vunpack.c.l.b16 %v243
  %v4398 = vpack.c.b16 %v4395, %v4394
  %v4399 = vpack.c.b16 %v4397, %v4396
  %4402 = vmatpush.bf16.msra.mxu0 0
  %4403 = vmatpush.bf16.msra.mxu0 0
  %4404 = vmatpush.bf16.msra.mxu0 0
  %4405 = vmatpush.bf16.msra.mxu0 0
  %4406 = vmatpush.bf16.msra.mxu0 0
  %4407 = vmatpush.bf16.msra.mxu0 0
  %4408 = vmatpush.bf16.msra.mxu0 %v4399
  %4409 = vmatpush.bf16.msra.mxu0 %v4398
  %4410 = vmatmul.bf16.gmra.mxu0 %v4028
  %v4411 = vpop.f32.mrf.mxu0
  %v4412 = vadd.f32 0.0, %v4411
  %v4413 = vpop.f32.mrf.mxu0
  %v4414 = vadd.f32 0.0, %v4413
  %4415 = vmatmul.bf16.gmra.mxu0 %v4031
  %v4416 = vpop.f32.mrf.mxu0
  %v4417 = vadd.f32 0.0, %v4416
  %v4418 = vpop.f32.mrf.mxu0
  %v4419 = vadd.f32 0.0, %v4418
  %4420 = vmatmul.bf16.gmra.mxu0 %v4034
  %v4421 = vpop.f32.mrf.mxu0
  %v4422 = vadd.f32 0.0, %v4421
  %v4423 = vpop.f32.mrf.mxu0
  %v4424 = vadd.f32 0.0, %v4423
  %4425 = vmatmul.bf16.gmra.mxu0 %v4037
  %v4426 = vpop.f32.mrf.mxu0
  %v4427 = vadd.f32 0.0, %v4426
  %v4428 = vpop.f32.mrf.mxu0
  %v4429 = vadd.f32 0.0, %v4428
  %4430 = vmatmul.bf16.gmra.mxu0 %v4040
  %v4431 = vpop.f32.mrf.mxu0
  %v4432 = vadd.f32 0.0, %v4431
  %v4433 = vpop.f32.mrf.mxu0
  %v4434 = vadd.f32 0.0, %v4433
  %4435 = vdwg.mxu0
  %v4440 = vunpack.c.l.b16 %v244
  %v4441 = vunpack.c.l.b16 %v245
  %v4442 = vunpack.c.l.b16 %v246
  %v4443 = vunpack.c.l.b16 %v247
  %v4444 = vpack.c.b16 %v4441, %v4440
  %v4445 = vpack.c.b16 %v4443, %v4442
  %4448 = vmatpush.bf16.msra.mxu0 0
  %4449 = vmatpush.bf16.msra.mxu0 0
  %4450 = vmatpush.bf16.msra.mxu0 0
  %4451 = vmatpush.bf16.msra.mxu0 0
  %4452 = vmatpush.bf16.msra.mxu0 0
  %4453 = vmatpush.bf16.msra.mxu0 0
  %4454 = vmatpush.bf16.msra.mxu0 %v4445
  %4455 = vmatpush.bf16.msra.mxu0 %v4444
  %4456 = vmatmul.bf16.gmra.mxu0 %v4028
  %v4457 = vpop.f32.mrf.mxu0
  %v4458 = vadd.f32 0.0, %v4457
  %v4459 = vpop.f32.mrf.mxu0
  %v4460 = vadd.f32 0.0, %v4459
  %4461 = vmatmul.bf16.gmra.mxu0 %v4031
  %v4462 = vpop.f32.mrf.mxu0
  %v4463 = vadd.f32 0.0, %v4462
  %v4464 = vpop.f32.mrf.mxu0
  %v4465 = vadd.f32 0.0, %v4464
  %4466 = vmatmul.bf16.gmra.mxu0 %v4034
  %v4467 = vpop.f32.mrf.mxu0
  %v4468 = vadd.f32 0.0, %v4467
  %v4469 = vpop.f32.mrf.mxu0
  %v4470 = vadd.f32 0.0, %v4469
  %4471 = vmatmul.bf16.gmra.mxu0 %v4037
  %v4472 = vpop.f32.mrf.mxu0
  %v4473 = vadd.f32 0.0, %v4472
  %v4474 = vpop.f32.mrf.mxu0
  %v4475 = vadd.f32 0.0, %v4474
  %4476 = vmatmul.bf16.gmra.mxu0 %v4040
  %v4477 = vpop.f32.mrf.mxu0
  %v4478 = vadd.f32 0.0, %v4477
  %v4479 = vpop.f32.mrf.mxu0
  %v4480 = vadd.f32 0.0, %v4479
  %4481 = vdwg.mxu0
  %v4486 = vunpack.c.l.b16 %v248
  %v4487 = vunpack.c.l.b16 %v249
  %v4488 = vunpack.c.l.b16 %v250
  %v4489 = vunpack.c.l.b16 %v251
  %v4490 = vpack.c.b16 %v4487, %v4486
  %v4491 = vpack.c.b16 %v4489, %v4488
  %4494 = vmatpush.bf16.msra.mxu0 0
  %4495 = vmatpush.bf16.msra.mxu0 0
  %4496 = vmatpush.bf16.msra.mxu0 0
  %4497 = vmatpush.bf16.msra.mxu0 0
  %4498 = vmatpush.bf16.msra.mxu0 0
  %4499 = vmatpush.bf16.msra.mxu0 0
  %4500 = vmatpush.bf16.msra.mxu0 %v4491
  %4501 = vmatpush.bf16.msra.mxu0 %v4490
  %4502 = vmatmul.bf16.gmra.mxu0 %v4028
  %v4503 = vpop.f32.mrf.mxu0
  %v4504 = vadd.f32 0.0, %v4503
  %v4505 = vpop.f32.mrf.mxu0
  %v4506 = vadd.f32 0.0, %v4505
  %4507 = vmatmul.bf16.gmra.mxu0 %v4031
  %v4508 = vpop.f32.mrf.mxu0
  %v4509 = vadd.f32 0.0, %v4508
  %v4510 = vpop.f32.mrf.mxu0
  %v4511 = vadd.f32 0.0, %v4510
  %4512 = vmatmul.bf16.gmra.mxu0 %v4034
  %v4513 = vpop.f32.mrf.mxu0
  %v4514 = vadd.f32 0.0, %v4513
  %v4515 = vpop.f32.mrf.mxu0
  %v4516 = vadd.f32 0.0, %v4515
  %4517 = vmatmul.bf16.gmra.mxu0 %v4037
  %v4518 = vpop.f32.mrf.mxu0
  %v4519 = vadd.f32 0.0, %v4518
  %v4520 = vpop.f32.mrf.mxu0
  %v4521 = vadd.f32 0.0, %v4520
  %4522 = vmatmul.bf16.gmra.mxu0 %v4040
  %v4523 = vpop.f32.mrf.mxu0
  %v4524 = vadd.f32 0.0, %v4523
  %v4525 = vpop.f32.mrf.mxu0
  %v4526 = vadd.f32 0.0, %v4525
  %4527 = vdwg.mxu0
  %v4532 = vunpack.c.l.b16 %v252
  %v4533 = vunpack.c.l.b16 %v253
  %v4534 = vunpack.c.l.b16 %v254
  %v4535 = vunpack.c.l.b16 %v255
  %v4536 = vpack.c.b16 %v4533, %v4532
  %v4537 = vpack.c.b16 %v4535, %v4534
  %4540 = vmatpush.bf16.msra.mxu0 0
  %4541 = vmatpush.bf16.msra.mxu0 0
  %4542 = vmatpush.bf16.msra.mxu0 0
  %4543 = vmatpush.bf16.msra.mxu0 0
  %4544 = vmatpush.bf16.msra.mxu0 0
  %4545 = vmatpush.bf16.msra.mxu0 0
  %4546 = vmatpush.bf16.msra.mxu0 %v4537
  %4547 = vmatpush.bf16.msra.mxu0 %v4536
  %4548 = vmatmul.bf16.gmra.mxu0 %v4028
  %v4549 = vpop.f32.mrf.mxu0
  %v4550 = vadd.f32 0.0, %v4549
  %v4551 = vpop.f32.mrf.mxu0
  %v4552 = vadd.f32 0.0, %v4551
  %4553 = vmatmul.bf16.gmra.mxu0 %v4031
  %v4554 = vpop.f32.mrf.mxu0
  %v4555 = vadd.f32 0.0, %v4554
  %v4556 = vpop.f32.mrf.mxu0
  %v4557 = vadd.f32 0.0, %v4556
  %4558 = vmatmul.bf16.gmra.mxu0 %v4034
  %v4559 = vpop.f32.mrf.mxu0
  %v4560 = vadd.f32 0.0, %v4559
  %v4561 = vpop.f32.mrf.mxu0
  %v4562 = vadd.f32 0.0, %v4561
  %4563 = vmatmul.bf16.gmra.mxu0 %v4037
  %v4564 = vpop.f32.mrf.mxu0
  %v4565 = vadd.f32 0.0, %v4564
  %v4566 = vpop.f32.mrf.mxu0
  %v4567 = vadd.f32 0.0, %v4566
  %4568 = vmatmul.bf16.gmra.mxu0 %v4040
  %v4569 = vpop.f32.mrf.mxu0
  %v4570 = vadd.f32 0.0, %v4569
  %v4571 = vpop.f32.mrf.mxu0
  %v4572 = vadd.f32 0.0, %v4571
  %4573 = vdwg.mxu0
  %4574 = vmatpush.bf16.msra.mxu0 0
  %4575 = vmatpush.bf16.msra.mxu0 0
  %4576 = vmatpush.bf16.msra.mxu0 0
  %4577 = vmatpush.bf16.msra.mxu0 0
  %4578 = vmatpush.bf16.msra.mxu0 0
  %4579 = vmatpush.bf16.msra.mxu0 0
  %4580 = vmatpush.bf16.msra.mxu0 %v4399
  %4581 = vmatpush.bf16.msra.mxu0 %v4398
  %4582 = vmatmul.bf16.gmra.mxu0 %v4240
  %v4583 = vpop.f32.mrf.mxu0
  %v4584 = vadd.f32 0.0, %v4583
  %v4585 = vpop.f32.mrf.mxu0
  %v4586 = vadd.f32 0.0, %v4585
  %4587 = vmatmul.bf16.gmra.mxu0 %v4243
  %v4588 = vpop.f32.mrf.mxu0
  %v4589 = vadd.f32 0.0, %v4588
  %v4590 = vpop.f32.mrf.mxu0
  %v4591 = vadd.f32 0.0, %v4590
  %4592 = vmatmul.bf16.gmra.mxu0 %v4246
  %v4593 = vpop.f32.mrf.mxu0
  %v4594 = vadd.f32 0.0, %v4593
  %v4595 = vpop.f32.mrf.mxu0
  %v4596 = vadd.f32 0.0, %v4595
  %4597 = vmatmul.bf16.gmra.mxu0 %v4249
  %v4598 = vpop.f32.mrf.mxu0
  %v4599 = vadd.f32 0.0, %v4598
  %v4600 = vpop.f32.mrf.mxu0
  %v4601 = vadd.f32 0.0, %v4600
  %4602 = vmatmul.bf16.gmra.mxu0 %v4252
  %v4603 = vpop.f32.mrf.mxu0
  %v4604 = vadd.f32 0.0, %v4603
  %v4605 = vpop.f32.mrf.mxu0
  %v4606 = vadd.f32 0.0, %v4605
  %4607 = vdwg.mxu0
  %4608 = vmatpush.bf16.msra.mxu0 0
  %4609 = vmatpush.bf16.msra.mxu0 0
  %4610 = vmatpush.bf16.msra.mxu0 0
  %4611 = vmatpush.bf16.msra.mxu0 0
  %4612 = vmatpush.bf16.msra.mxu0 0
  %4613 = vmatpush.bf16.msra.mxu0 0
  %4614 = vmatpush.bf16.msra.mxu0 %v4445
  %4615 = vmatpush.bf16.msra.mxu0 %v4444
  %4616 = vmatmul.bf16.gmra.mxu0 %v4240
  %v4617 = vpop.f32.mrf.mxu0
  %v4618 = vadd.f32 0.0, %v4617
  %v4619 = vpop.f32.mrf.mxu0
  %v4620 = vadd.f32 0.0, %v4619
  %4621 = vmatmul.bf16.gmra.mxu0 %v4243
  %v4622 = vpop.f32.mrf.mxu0
  %v4623 = vadd.f32 0.0, %v4622
  %v4624 = vpop.f32.mrf.mxu0
  %v4625 = vadd.f32 0.0, %v4624
  %4626 = vmatmul.bf16.gmra.mxu0 %v4246
  %v4627 = vpop.f32.mrf.mxu0
  %v4628 = vadd.f32 0.0, %v4627
  %v4629 = vpop.f32.mrf.mxu0
  %v4630 = vadd.f32 0.0, %v4629
  %4631 = vmatmul.bf16.gmra.mxu0 %v4249
  %v4632 = vpop.f32.mrf.mxu0
  %v4633 = vadd.f32 0.0, %v4632
  %v4634 = vpop.f32.mrf.mxu0
  %v4635 = vadd.f32 0.0, %v4634
  %4636 = vmatmul.bf16.gmra.mxu0 %v4252
  %v4637 = vpop.f32.mrf.mxu0
  %v4638 = vadd.f32 0.0, %v4637
  %v4639 = vpop.f32.mrf.mxu0
  %v4640 = vadd.f32 0.0, %v4639
  %4641 = vdwg.mxu0
  %4642 = vmatpush.bf16.msra.mxu0 0
  %4643 = vmatpush.bf16.msra.mxu0 0
  %4644 = vmatpush.bf16.msra.mxu0 0
  %4645 = vmatpush.bf16.msra.mxu0 0
  %4646 = vmatpush.bf16.msra.mxu0 0
  %4647 = vmatpush.bf16.msra.mxu0 0
  %4648 = vmatpush.bf16.msra.mxu0 %v4491
  %4649 = vmatpush.bf16.msra.mxu0 %v4490
  %4650 = vmatmul.bf16.gmra.mxu0 %v4240
  %v4651 = vpop.f32.mrf.mxu0
  %v4652 = vadd.f32 0.0, %v4651
  %v4653 = vpop.f32.mrf.mxu0
  %v4654 = vadd.f32 0.0, %v4653
  %4655 = vmatmul.bf16.gmra.mxu0 %v4243
  %v4656 = vpop.f32.mrf.mxu0
  %v4657 = vadd.f32 0.0, %v4656
  %v4658 = vpop.f32.mrf.mxu0
  %v4659 = vadd.f32 0.0, %v4658
  %4660 = vmatmul.bf16.gmra.mxu0 %v4246
  %v4661 = vpop.f32.mrf.mxu0
  %v4662 = vadd.f32 0.0, %v4661
  %v4663 = vpop.f32.mrf.mxu0
  %v4664 = vadd.f32 0.0, %v4663
  %4665 = vmatmul.bf16.gmra.mxu0 %v4249
  %v4666 = vpop.f32.mrf.mxu0
  %v4667 = vadd.f32 0.0, %v4666
  %v4668 = vpop.f32.mrf.mxu0
  %v4669 = vadd.f32 0.0, %v4668
  %4670 = vmatmul.bf16.gmra.mxu0 %v4252
  %v4671 = vpop.f32.mrf.mxu0
  %v4672 = vadd.f32 0.0, %v4671
  %v4673 = vpop.f32.mrf.mxu0
  %v4674 = vadd.f32 0.0, %v4673
  %4675 = vdwg.mxu0
  %4676 = vmatpush.bf16.msra.mxu0 0
  %4677 = vmatpush.bf16.msra.mxu0 0
  %4678 = vmatpush.bf16.msra.mxu0 0
  %4679 = vmatpush.bf16.msra.mxu0 0
  %4680 = vmatpush.bf16.msra.mxu0 0
  %4681 = vmatpush.bf16.msra.mxu0 0
  %4682 = vmatpush.bf16.msra.mxu0 %v4537
  %4683 = vmatpush.bf16.msra.mxu0 %v4536
  %4684 = vmatmul.bf16.gmra.mxu0 %v4240
  %v4685 = vpop.f32.mrf.mxu0
  %v4686 = vadd.f32 0.0, %v4685
  %v4687 = vpop.f32.mrf.mxu0
  %v4688 = vadd.f32 0.0, %v4687
  %4689 = vmatmul.bf16.gmra.mxu0 %v4243
  %v4690 = vpop.f32.mrf.mxu0
  %v4691 = vadd.f32 0.0, %v4690
  %v4692 = vpop.f32.mrf.mxu0
  %v4693 = vadd.f32 0.0, %v4692
  %4694 = vmatmul.bf16.gmra.mxu0 %v4246
  %v4695 = vpop.f32.mrf.mxu0
  %v4696 = vadd.f32 0.0, %v4695
  %v4697 = vpop.f32.mrf.mxu0
  %v4698 = vadd.f32 0.0, %v4697
  %4699 = vmatmul.bf16.gmra.mxu0 %v4249
  %v4700 = vpop.f32.mrf.mxu0
  %v4701 = vadd.f32 0.0, %v4700
  %v4702 = vpop.f32.mrf.mxu0
  %v4703 = vadd.f32 0.0, %v4702
  %4704 = vmatmul.bf16.gmra.mxu0 %v4252
  %v4705 = vpop.f32.mrf.mxu0
  %v4706 = vadd.f32 0.0, %v4705
  %v4707 = vpop.f32.mrf.mxu0
  %v4708 = vadd.f32 0.0, %v4707
  %4709 = vdwg.mxu0
  %v4710 = vpack.c.bf16 %v3824, %v3824
  %v4711 = vpack.c.bf16 %v3826, %v3826
  %v4712 = vpack.c.bf16 %v3850, %v3850
  %v4713 = vpack.c.bf16 %v3852, %v3852
  %v4714 = vpack.c.bf16 %v3876, %v3876
  %v4715 = vpack.c.bf16 %v3878, %v3878
  %v4716 = vpack.c.bf16 %v3902, %v3902
  %v4717 = vpack.c.bf16 %v3904, %v3904
  %v4718 = vpack.c.bf16 %v3924, %v3924
  %v4719 = vpack.c.bf16 %v3926, %v3926
  %v4720 = vpack.c.bf16 %v3938, %v3938
  %v4721 = vpack.c.bf16 %v3940, %v3940
  %v4722 = vpack.c.bf16 %v3952, %v3952
  %v4723 = vpack.c.bf16 %v3954, %v3954
  %v4724 = vpack.c.bf16 %v3966, %v3966
  %v4725 = vpack.c.bf16 %v3968, %v3968
  %v4726 = vpack.c.bf16 %v4052, %v4052
  %v4727 = vpack.c.bf16 %v4054, %v4054
  %v4728 = vpack.c.bf16 %v4057, %v4057
  %v4729 = vpack.c.bf16 %v4059, %v4059
  %v4730 = vpack.c.bf16 %v4062, %v4062
  %v4731 = vpack.c.bf16 %v4064, %v4064
  %v4732 = vpack.c.bf16 %v4067, %v4067
  %v4733 = vpack.c.bf16 %v4069, %v4069
  %v4734 = vpack.c.bf16 %v4072, %v4072
  %v4735 = vpack.c.bf16 %v4074, %v4074
  %v4736 = vpack.c.bf16 %v4098, %v4098
  %v4737 = vpack.c.bf16 %v4100, %v4100
  %v4738 = vpack.c.bf16 %v4103, %v4103
  %v4739 = vpack.c.bf16 %v4105, %v4105
  %v4740 = vpack.c.bf16 %v4108, %v4108
  %v4741 = vpack.c.bf16 %v4110, %v4110
  %v4742 = vpack.c.bf16 %v4113, %v4113
  %v4743 = vpack.c.bf16 %v4115, %v4115
  %v4744 = vpack.c.bf16 %v4118, %v4118
  %v4745 = vpack.c.bf16 %v4120, %v4120
  %v4746 = vpack.c.bf16 %v4144, %v4144
  %v4747 = vpack.c.bf16 %v4146, %v4146
  %v4748 = vpack.c.bf16 %v4149, %v4149
  %v4749 = vpack.c.bf16 %v4151, %v4151
  %v4750 = vpack.c.bf16 %v4154, %v4154
  %v4751 = vpack.c.bf16 %v4156, %v4156
  %v4752 = vpack.c.bf16 %v4159, %v4159
  %v4753 = vpack.c.bf16 %v4161, %v4161
  %v4754 = vpack.c.bf16 %v4164, %v4164
  %v4755 = vpack.c.bf16 %v4166, %v4166
  %v4756 = vpack.c.bf16 %v4190, %v4190
  %v4757 = vpack.c.bf16 %v4192, %v4192
  %v4758 = vpack.c.bf16 %v4195, %v4195
  %v4759 = vpack.c.bf16 %v4197, %v4197
  %v4760 = vpack.c.bf16 %v4200, %v4200
  %v4761 = vpack.c.bf16 %v4202, %v4202
  %v4762 = vpack.c.bf16 %v4205, %v4205
  %v4763 = vpack.c.bf16 %v4207, %v4207
  %v4764 = vpack.c.bf16 %v4210, %v4210
  %v4765 = vpack.c.bf16 %v4212, %v4212
  %v4766 = vpack.c.bf16 %v4264, %v4264
  %v4767 = vpack.c.bf16 %v4266, %v4266
  %v4768 = vpack.c.bf16 %v4269, %v4269
  %v4769 = vpack.c.bf16 %v4271, %v4271
  %v4770 = vpack.c.bf16 %v4274, %v4274
  %v4771 = vpack.c.bf16 %v4276, %v4276
  %v4772 = vpack.c.bf16 %v4279, %v4279
  %v4773 = vpack.c.bf16 %v4281, %v4281
  %v4774 = vpack.c.bf16 %v4284, %v4284
  %v4775 = vpack.c.bf16 %v4286, %v4286
  %v4776 = vpack.c.bf16 %v4298, %v4298
  %v4777 = vpack.c.bf16 %v4300, %v4300
  %v4778 = vpack.c.bf16 %v4303, %v4303
  %v4779 = vpack.c.bf16 %v4305, %v4305
  %v4780 = vpack.c.bf16 %v4308, %v4308
  %v4781 = vpack.c.bf16 %v4310, %v4310
  %v4782 = vpack.c.bf16 %v4313, %v4313
  %v4783 = vpack.c.bf16 %v4315, %v4315
  %v4784 = vpack.c.bf16 %v4318, %v4318
  %v4785 = vpack.c.bf16 %v4320, %v4320
  %v4786 = vpack.c.bf16 %v4332, %v4332
  %v4787 = vpack.c.bf16 %v4334, %v4334
  %v4788 = vpack.c.bf16 %v4337, %v4337
  %v4789 = vpack.c.bf16 %v4339, %v4339
  %v4790 = vpack.c.bf16 %v4342, %v4342
  %v4791 = vpack.c.bf16 %v4344, %v4344
  %v4792 = vpack.c.bf16 %v4347, %v4347
  %v4793 = vpack.c.bf16 %v4349, %v4349
  %v4794 = vpack.c.bf16 %v4352, %v4352
  %v4795 = vpack.c.bf16 %v4354, %v4354
  %v4796 = vpack.c.bf16 %v4366, %v4366
  %v4797 = vpack.c.bf16 %v4368, %v4368
  %v4798 = vpack.c.bf16 %v4371, %v4371
  %v4799 = vpack.c.bf16 %v4373, %v4373
  %v4800 = vpack.c.bf16 %v4376, %v4376
  %v4801 = vpack.c.bf16 %v4378, %v4378
  %v4802 = vpack.c.bf16 %v4381, %v4381
  %v4803 = vpack.c.bf16 %v4383, %v4383
  %v4804 = vpack.c.bf16 %v4386, %v4386
  %v4805 = vpack.c.bf16 %v4388, %v4388
  %v4808 = vunpack.c.l.b16 %v4710
  %v4809 = vunpack.c.l.b16 %v4711
  %v4810 = vpack.c.b16 %v4809, %v4808
  %v4821 = vunpack.c.l.b16 %v4726
  %v4822 = vunpack.c.l.b16 %v4727
  %v4823 = vunpack.c.l.b16 %v4728
  %v4824 = vunpack.c.l.b16 %v4729
  %v4825 = vunpack.c.l.b16 %v4730
  %v4826 = vunpack.c.l.b16 %v4731
  %v4827 = vunpack.c.l.b16 %v4732
  %v4828 = vunpack.c.l.b16 %v4733
  %v4829 = vunpack.c.l.b16 %v4734
  %v4830 = vunpack.c.l.b16 %v4735
  %v4831 = vpack.c.b16 %v4822, %v4821
  %v4832 = vpack.c.b16 %v4824, %v4823
  %v4833 = vpack.c.b16 %v4826, %v4825
  %v4834 = vpack.c.b16 %v4828, %v4827
  %v4835 = vpack.c.b16 %v4830, %v4829
  %v4837 = vsel %vm2015, %v4810, 0
  %v4840 = vsel %vm2015, %v4831, 0
  %v4843 = vsel %vm2015, %v4832, 0
  %v4846 = vsel %vm2015, %v4833, 0
  %v4849 = vsel %vm2015, %v4834, 0
  %v4852 = vsel %vm2015, %v4835, 0
  %4854 = vmatpush.bf16.xpose.msra.mxu0 0
  %4855 = vmatpush.bf16.xpose.msra.mxu0 0
  %4856 = vmatpush.bf16.xpose.msra.mxu0 0
  %4857 = vmatpush.bf16.xpose.msra.mxu0 %v4852
  %4858 = vmatpush.bf16.xpose.msra.mxu0 %v4849
  %4859 = vmatpush.bf16.xpose.msra.mxu0 %v4846
  %4860 = vmatpush.bf16.xpose.msra.mxu0 %v4843
  %4861 = vmatpush.bf16.xpose.msra.mxu0 %v4840
  %4862 = vmatmul.bf16.gmra.mxu0 %v4837
  %v4863 = vpop.f32.mrf.mxu0
  %v4864 = vadd.f32 0.0, %v4863
  %v4865 = vpop.f32.mrf.mxu0
  %v4866 = vadd.f32 0.0, %v4865
  %4867 = vdwg.mxu0
  %v4870 = vunpack.c.l.b16 %v4712
  %v4871 = vunpack.c.l.b16 %v4713
  %v4872 = vpack.c.b16 %v4871, %v4870
  %v4883 = vunpack.c.l.b16 %v4736
  %v4884 = vunpack.c.l.b16 %v4737
  %v4885 = vunpack.c.l.b16 %v4738
  %v4886 = vunpack.c.l.b16 %v4739
  %v4887 = vunpack.c.l.b16 %v4740
  %v4888 = vunpack.c.l.b16 %v4741
  %v4889 = vunpack.c.l.b16 %v4742
  %v4890 = vunpack.c.l.b16 %v4743
  %v4891 = vunpack.c.l.b16 %v4744
  %v4892 = vunpack.c.l.b16 %v4745
  %v4893 = vpack.c.b16 %v4884, %v4883
  %v4894 = vpack.c.b16 %v4886, %v4885
  %v4895 = vpack.c.b16 %v4888, %v4887
  %v4896 = vpack.c.b16 %v4890, %v4889
  %v4897 = vpack.c.b16 %v4892, %v4891
  %v4899 = vsel %vm2015, %v4872, 0
  %v4902 = vsel %vm2015, %v4893, 0
  %v4905 = vsel %vm2015, %v4894, 0
  %v4908 = vsel %vm2015, %v4895, 0
  %v4911 = vsel %vm2015, %v4896, 0
  %v4914 = vsel %vm2015, %v4897, 0
  %4916 = vmatpush.bf16.xpose.msra.mxu0 0
  %4917 = vmatpush.bf16.xpose.msra.mxu0 0
  %4918 = vmatpush.bf16.xpose.msra.mxu0 0
  %4919 = vmatpush.bf16.xpose.msra.mxu0 %v4914
  %4920 = vmatpush.bf16.xpose.msra.mxu0 %v4911
  %4921 = vmatpush.bf16.xpose.msra.mxu0 %v4908
  %4922 = vmatpush.bf16.xpose.msra.mxu0 %v4905
  %4923 = vmatpush.bf16.xpose.msra.mxu0 %v4902
  %4924 = vmatmul.bf16.gmra.mxu0 %v4899
  %v4925 = vpop.f32.mrf.mxu0
  %v4926 = vadd.f32 0.0, %v4925
  %v4927 = vpop.f32.mrf.mxu0
  %v4928 = vadd.f32 0.0, %v4927
  %4929 = vdwg.mxu0
  %v4932 = vunpack.c.l.b16 %v4714
  %v4933 = vunpack.c.l.b16 %v4715
  %v4934 = vpack.c.b16 %v4933, %v4932
  %v4945 = vunpack.c.l.b16 %v4746
  %v4946 = vunpack.c.l.b16 %v4747
  %v4947 = vunpack.c.l.b16 %v4748
  %v4948 = vunpack.c.l.b16 %v4749
  %v4949 = vunpack.c.l.b16 %v4750
  %v4950 = vunpack.c.l.b16 %v4751
  %v4951 = vunpack.c.l.b16 %v4752
  %v4952 = vunpack.c.l.b16 %v4753
  %v4953 = vunpack.c.l.b16 %v4754
  %v4954 = vunpack.c.l.b16 %v4755
  %v4955 = vpack.c.b16 %v4946, %v4945
  %v4956 = vpack.c.b16 %v4948, %v4947
  %v4957 = vpack.c.b16 %v4950, %v4949
  %v4958 = vpack.c.b16 %v4952, %v4951
  %v4959 = vpack.c.b16 %v4954, %v4953
  %v4961 = vsel %vm2015, %v4934, 0
  %v4964 = vsel %vm2015, %v4955, 0
  %v4967 = vsel %vm2015, %v4956, 0
  %v4970 = vsel %vm2015, %v4957, 0
  %v4973 = vsel %vm2015, %v4958, 0
  %v4976 = vsel %vm2015, %v4959, 0
  %4978 = vmatpush.bf16.xpose.msra.mxu0 0
  %4979 = vmatpush.bf16.xpose.msra.mxu0 0
  %4980 = vmatpush.bf16.xpose.msra.mxu0 0
  %4981 = vmatpush.bf16.xpose.msra.mxu0 %v4976
  %4982 = vmatpush.bf16.xpose.msra.mxu0 %v4973
  %4983 = vmatpush.bf16.xpose.msra.mxu0 %v4970
  %4984 = vmatpush.bf16.xpose.msra.mxu0 %v4967
  %4985 = vmatpush.bf16.xpose.msra.mxu0 %v4964
  %4986 = vmatmul.bf16.gmra.mxu0 %v4961
  %v4987 = vpop.f32.mrf.mxu0
  %v4988 = vadd.f32 0.0, %v4987
  %v4989 = vpop.f32.mrf.mxu0
  %v4990 = vadd.f32 0.0, %v4989
  %4991 = vdwg.mxu0
  %v4994 = vunpack.c.l.b16 %v4716
  %v4995 = vunpack.c.l.b16 %v4717
  %v4996 = vpack.c.b16 %v4995, %v4994
  %v5007 = vunpack.c.l.b16 %v4756
  %v5008 = vunpack.c.l.b16 %v4757
  %v5009 = vunpack.c.l.b16 %v4758
  %v5010 = vunpack.c.l.b16 %v4759
  %v5011 = vunpack.c.l.b16 %v4760
  %v5012 = vunpack.c.l.b16 %v4761
  %v5013 = vunpack.c.l.b16 %v4762
  %v5014 = vunpack.c.l.b16 %v4763
  %v5015 = vunpack.c.l.b16 %v4764
  %v5016 = vunpack.c.l.b16 %v4765
  %v5017 = vpack.c.b16 %v5008, %v5007
  %v5018 = vpack.c.b16 %v5010, %v5009
  %v5019 = vpack.c.b16 %v5012, %v5011
  %v5020 = vpack.c.b16 %v5014, %v5013
  %v5021 = vpack.c.b16 %v5016, %v5015
  %v5023 = vsel %vm2015, %v4996, 0
  %v5026 = vsel %vm2015, %v5017, 0
  %v5029 = vsel %vm2015, %v5018, 0
  %v5032 = vsel %vm2015, %v5019, 0
  %v5035 = vsel %vm2015, %v5020, 0
  %v5038 = vsel %vm2015, %v5021, 0
  %5040 = vmatpush.bf16.xpose.msra.mxu0 0
  %5041 = vmatpush.bf16.xpose.msra.mxu0 0
  %5042 = vmatpush.bf16.xpose.msra.mxu0 0
  %5043 = vmatpush.bf16.xpose.msra.mxu0 %v5038
  %5044 = vmatpush.bf16.xpose.msra.mxu0 %v5035
  %5045 = vmatpush.bf16.xpose.msra.mxu0 %v5032
  %5046 = vmatpush.bf16.xpose.msra.mxu0 %v5029
  %5047 = vmatpush.bf16.xpose.msra.mxu0 %v5026
  %5048 = vmatmul.bf16.gmra.mxu0 %v5023
  %v5049 = vpop.f32.mrf.mxu0
  %v5050 = vadd.f32 0.0, %v5049
  %v5051 = vpop.f32.mrf.mxu0
  %v5052 = vadd.f32 0.0, %v5051
  %5053 = vdwg.mxu0
  %v5056 = vunpack.c.l.b16 %v4718
  %v5057 = vunpack.c.l.b16 %v4719
  %v5058 = vpack.c.b16 %v5057, %v5056
  %v5069 = vunpack.c.l.b16 %v4766
  %v5070 = vunpack.c.l.b16 %v4767
  %v5071 = vunpack.c.l.b16 %v4768
  %v5072 = vunpack.c.l.b16 %v4769
  %v5073 = vunpack.c.l.b16 %v4770
  %v5074 = vunpack.c.l.b16 %v4771
  %v5075 = vunpack.c.l.b16 %v4772
  %v5076 = vunpack.c.l.b16 %v4773
  %v5077 = vunpack.c.l.b16 %v4774
  %v5078 = vunpack.c.l.b16 %v4775
  %v5079 = vpack.c.b16 %v5070, %v5069
  %v5080 = vpack.c.b16 %v5072, %v5071
  %v5081 = vpack.c.b16 %v5074, %v5073
  %v5082 = vpack.c.b16 %v5076, %v5075
  %v5083 = vpack.c.b16 %v5078, %v5077
  %v5085 = vsel %vm2015, %v5058, 0
  %v5088 = vsel %vm2015, %v5079, 0
  %v5091 = vsel %vm2015, %v5080, 0
  %v5094 = vsel %vm2015, %v5081, 0
  %v5097 = vsel %vm2015, %v5082, 0
  %v5100 = vsel %vm2015, %v5083, 0
  %5102 = vmatpush.bf16.xpose.msra.mxu0 0
  %5103 = vmatpush.bf16.xpose.msra.mxu0 0
  %5104 = vmatpush.bf16.xpose.msra.mxu0 0
  %5105 = vmatpush.bf16.xpose.msra.mxu0 %v5100
  %5106 = vmatpush.bf16.xpose.msra.mxu0 %v5097
  %5107 = vmatpush.bf16.xpose.msra.mxu0 %v5094
  %5108 = vmatpush.bf16.xpose.msra.mxu0 %v5091
  %5109 = vmatpush.bf16.xpose.msra.mxu0 %v5088
  %5110 = vmatmul.bf16.gmra.mxu0 %v5085
  %v5111 = vpop.f32.mrf.mxu0
  %v5112 = vadd.f32 0.0, %v5111
  %v5113 = vpop.f32.mrf.mxu0
  %v5114 = vadd.f32 0.0, %v5113
  %5115 = vdwg.mxu0
  %v5118 = vunpack.c.l.b16 %v4720
  %v5119 = vunpack.c.l.b16 %v4721
  %v5120 = vpack.c.b16 %v5119, %v5118
  %v5131 = vunpack.c.l.b16 %v4776
  %v5132 = vunpack.c.l.b16 %v4777
  %v5133 = vunpack.c.l.b16 %v4778
  %v5134 = vunpack.c.l.b16 %v4779
  %v5135 = vunpack.c.l.b16 %v4780
  %v5136 = vunpack.c.l.b16 %v4781
  %v5137 = vunpack.c.l.b16 %v4782
  %v5138 = vunpack.c.l.b16 %v4783
  %v5139 = vunpack.c.l.b16 %v4784
  %v5140 = vunpack.c.l.b16 %v4785
  %v5141 = vpack.c.b16 %v5132, %v5131
  %v5142 = vpack.c.b16 %v5134, %v5133
  %v5143 = vpack.c.b16 %v5136, %v5135
  %v5144 = vpack.c.b16 %v5138, %v5137
  %v5145 = vpack.c.b16 %v5140, %v5139
  %v5147 = vsel %vm2015, %v5120, 0
  %v5150 = vsel %vm2015, %v5141, 0
  %v5153 = vsel %vm2015, %v5142, 0
  %v5156 = vsel %vm2015, %v5143, 0
  %v5159 = vsel %vm2015, %v5144, 0
  %v5162 = vsel %vm2015, %v5145, 0
  %5164 = vmatpush.bf16.xpose.msra.mxu0 0
  %5165 = vmatpush.bf16.xpose.msra.mxu0 0
  %5166 = vmatpush.bf16.xpose.msra.mxu0 0
  %5167 = vmatpush.bf16.xpose.msra.mxu0 %v5162
  %5168 = vmatpush.bf16.xpose.msra.mxu0 %v5159
  %5169 = vmatpush.bf16.xpose.msra.mxu0 %v5156
  %5170 = vmatpush.bf16.xpose.msra.mxu0 %v5153
  %5171 = vmatpush.bf16.xpose.msra.mxu0 %v5150
  %5172 = vmatmul.bf16.gmra.mxu0 %v5147
  %v5173 = vpop.f32.mrf.mxu0
  %v5174 = vadd.f32 0.0, %v5173
  %v5175 = vpop.f32.mrf.mxu0
  %v5176 = vadd.f32 0.0, %v5175
  %5177 = vdwg.mxu0
  %v5180 = vunpack.c.l.b16 %v4722
  %v5181 = vunpack.c.l.b16 %v4723
  %v5182 = vpack.c.b16 %v5181, %v5180
  %v5193 = vunpack.c.l.b16 %v4786
  %v5194 = vunpack.c.l.b16 %v4787
  %v5195 = vunpack.c.l.b16 %v4788
  %v5196 = vunpack.c.l.b16 %v4789
  %v5197 = vunpack.c.l.b16 %v4790
  %v5198 = vunpack.c.l.b16 %v4791
  %v5199 = vunpack.c.l.b16 %v4792
  %v5200 = vunpack.c.l.b16 %v4793
  %v5201 = vunpack.c.l.b16 %v4794
  %v5202 = vunpack.c.l.b16 %v4795
  %v5203 = vpack.c.b16 %v5194, %v5193
  %v5204 = vpack.c.b16 %v5196, %v5195
  %v5205 = vpack.c.b16 %v5198, %v5197
  %v5206 = vpack.c.b16 %v5200, %v5199
  %v5207 = vpack.c.b16 %v5202, %v5201
  %v5209 = vsel %vm2015, %v5182, 0
  %v5212 = vsel %vm2015, %v5203, 0
  %v5215 = vsel %vm2015, %v5204, 0
  %v5218 = vsel %vm2015, %v5205, 0
  %v5221 = vsel %vm2015, %v5206, 0
  %v5224 = vsel %vm2015, %v5207, 0
  %5226 = vmatpush.bf16.xpose.msra.mxu0 0
  %5227 = vmatpush.bf16.xpose.msra.mxu0 0
  %5228 = vmatpush.bf16.xpose.msra.mxu0 0
  %5229 = vmatpush.bf16.xpose.msra.mxu0 %v5224
  %5230 = vmatpush.bf16.xpose.msra.mxu0 %v5221
  %5231 = vmatpush.bf16.xpose.msra.mxu0 %v5218
  %5232 = vmatpush.bf16.xpose.msra.mxu0 %v5215
  %5233 = vmatpush.bf16.xpose.msra.mxu0 %v5212
  %5234 = vmatmul.bf16.gmra.mxu0 %v5209
  %v5235 = vpop.f32.mrf.mxu0
  %v5236 = vadd.f32 0.0, %v5235
  %v5237 = vpop.f32.mrf.mxu0
  %v5238 = vadd.f32 0.0, %v5237
  %5239 = vdwg.mxu0
  %v5242 = vunpack.c.l.b16 %v4724
  %v5243 = vunpack.c.l.b16 %v4725
  %v5244 = vpack.c.b16 %v5243, %v5242
  %v5255 = vunpack.c.l.b16 %v4796
  %v5256 = vunpack.c.l.b16 %v4797
  %v5257 = vunpack.c.l.b16 %v4798
  %v5258 = vunpack.c.l.b16 %v4799
  %v5259 = vunpack.c.l.b16 %v4800
  %v5260 = vunpack.c.l.b16 %v4801
  %v5261 = vunpack.c.l.b16 %v4802
  %v5262 = vunpack.c.l.b16 %v4803
  %v5263 = vunpack.c.l.b16 %v4804
  %v5264 = vunpack.c.l.b16 %v4805
  %v5265 = vpack.c.b16 %v5256, %v5255
  %v5266 = vpack.c.b16 %v5258, %v5257
  %v5267 = vpack.c.b16 %v5260, %v5259
  %v5268 = vpack.c.b16 %v5262, %v5261
  %v5269 = vpack.c.b16 %v5264, %v5263
  %v5271 = vsel %vm2015, %v5244, 0
  %v5274 = vsel %vm2015, %v5265, 0
  %v5277 = vsel %vm2015, %v5266, 0
  %v5280 = vsel %vm2015, %v5267, 0
  %v5283 = vsel %vm2015, %v5268, 0
  %v5286 = vsel %vm2015, %v5269, 0
  %5288 = vmatpush.bf16.xpose.msra.mxu0 0
  %5289 = vmatpush.bf16.xpose.msra.mxu0 0
  %5290 = vmatpush.bf16.xpose.msra.mxu0 0
  %5291 = vmatpush.bf16.xpose.msra.mxu0 %v5286
  %5292 = vmatpush.bf16.xpose.msra.mxu0 %v5283
  %5293 = vmatpush.bf16.xpose.msra.mxu0 %v5280
  %5294 = vmatpush.bf16.xpose.msra.mxu0 %v5277
  %5295 = vmatpush.bf16.xpose.msra.mxu0 %v5274
  %5296 = vmatmul.bf16.gmra.mxu0 %v5271
  %v5297 = vpop.f32.mrf.mxu0
  %v5298 = vadd.f32 0.0, %v5297
  %v5299 = vpop.f32.mrf.mxu0
  %v5300 = vadd.f32 0.0, %v5299
  %5301 = vdwg.mxu0
  %v5302 = vmul.f32 %v4864, 0.35355338
  %v5303 = vmul.f32 %v4866, 0.35355338
  %v5304 = vmul.f32 %v4926, 0.35355338
  %v5305 = vmul.f32 %v4928, 0.35355338
  %v5306 = vmul.f32 %v4988, 0.35355338
  %v5307 = vmul.f32 %v4990, 0.35355338
  %v5308 = vmul.f32 %v5050, 0.35355338
  %v5309 = vmul.f32 %v5052, 0.35355338
  %v5310 = vmul.f32 %v5112, 0.35355338
  %v5311 = vmul.f32 %v5114, 0.35355338
  %v5312 = vmul.f32 %v5174, 0.35355338
  %v5313 = vmul.f32 %v5176, 0.35355338
  %v5314 = vmul.f32 %v5236, 0.35355338
  %v5315 = vmul.f32 %v5238, 0.35355338
  %v5316 = vmul.f32 %v5298, 0.35355338
  %v5317 = vmul.f32 %v5300, 0.35355338
  %vm5318 = vcmask 654336
  %v5319 = vsel %vm5318, %v5302, -inf
  %5320 = vmax.xlane.f32.xlu0 %v5319
  %v5321 = vpop.xlane.xlu0 %5320
  %v5322 = vsel %vm5318, %v5303, -inf
  %5323 = vmax.xlane.f32.xlu0 %v5322
  %v5324 = vpop.xlane.xlu0 %5323
  %v5325 = vsel %vm5318, %v5304, -inf
  %5326 = vmax.xlane.f32.xlu0 %v5325
  %v5327 = vpop.xlane.xlu0 %5326
  %v5328 = vsel %vm5318, %v5305, -inf
  %5329 = vmax.xlane.f32.xlu0 %v5328
  %v5330 = vpop.xlane.xlu0 %5329
  %v5331 = vsel %vm5318, %v5306, -inf
  %5332 = vmax.xlane.f32.xlu0 %v5331
  %v5333 = vpop.xlane.xlu0 %5332
  %v5334 = vsel %vm5318, %v5307, -inf
  %5335 = vmax.xlane.f32.xlu0 %v5334
  %v5336 = vpop.xlane.xlu0 %5335
  %v5337 = vsel %vm5318, %v5308, -inf
  %5338 = vmax.xlane.f32.xlu0 %v5337
  %v5339 = vpop.xlane.xlu0 %5338
  %v5340 = vsel %vm5318, %v5309, -inf
  %5341 = vmax.xlane.f32.xlu0 %v5340
  %v5342 = vpop.xlane.xlu0 %5341
  %v5343 = vsel %vm5318, %v5310, -inf
  %5344 = vmax.xlane.f32.xlu0 %v5343
  %v5345 = vpop.xlane.xlu0 %5344
  %v5346 = vsel %vm5318, %v5311, -inf
  %5347 = vmax.xlane.f32.xlu0 %v5346
  %v5348 = vpop.xlane.xlu0 %5347
  %v5349 = vsel %vm5318, %v5312, -inf
  %5350 = vmax.xlane.f32.xlu0 %v5349
  %v5351 = vpop.xlane.xlu0 %5350
  %v5352 = vsel %vm5318, %v5313, -inf
  %5353 = vmax.xlane.f32.xlu0 %v5352
  %v5354 = vpop.xlane.xlu0 %5353
  %v5355 = vsel %vm5318, %v5314, -inf
  %5356 = vmax.xlane.f32.xlu0 %v5355
  %v5357 = vpop.xlane.xlu0 %5356
  %v5358 = vsel %vm5318, %v5315, -inf
  %5359 = vmax.xlane.f32.xlu0 %v5358
  %v5360 = vpop.xlane.xlu0 %5359
  %v5361 = vsel %vm5318, %v5316, -inf
  %5362 = vmax.xlane.f32.xlu0 %v5361
  %v5363 = vpop.xlane.xlu0 %5362
  %v5364 = vsel %vm5318, %v5317, -inf
  %5365 = vmax.xlane.f32.xlu0 %v5364
  %v5366 = vpop.xlane.xlu0 %5365
  %v5367 = vsub.f32 %v5302, %v5321
  %v5368 = vsub.f32 %v5303, %v5324
  %v5369 = vsub.f32 %v5304, %v5327
  %v5370 = vsub.f32 %v5305, %v5330
  %v5371 = vsub.f32 %v5306, %v5333
  %v5372 = vsub.f32 %v5307, %v5336
  %v5373 = vsub.f32 %v5308, %v5339
  %v5374 = vsub.f32 %v5309, %v5342
  %v5375 = vsub.f32 %v5310, %v5345
  %v5376 = vsub.f32 %v5311, %v5348
  %v5377 = vsub.f32 %v5312, %v5351
  %v5378 = vsub.f32 %v5313, %v5354
  %v5379 = vsub.f32 %v5314, %v5357
  %v5380 = vsub.f32 %v5315, %v5360
  %v5381 = vsub.f32 %v5316, %v5363
  %v5382 = vsub.f32 %v5317, %v5366
  %v5383 = vmul.f32 %v5367, 1.442695
  %v5384 = vpow.pop %v5383
  %v5385 = vmul.f32 %v5368, 1.442695
  %v5386 = vpow.pop %v5385
  %v5387 = vmul.f32 %v5369, 1.442695
  %v5388 = vpow.pop %v5387
  %v5389 = vmul.f32 %v5370, 1.442695
  %v5390 = vpow.pop %v5389
  %v5391 = vmul.f32 %v5371, 1.442695
  %v5392 = vpow.pop %v5391
  %v5393 = vmul.f32 %v5372, 1.442695
  %v5394 = vpow.pop %v5393
  %v5395 = vmul.f32 %v5373, 1.442695
  %v5396 = vpow.pop %v5395
  %v5397 = vmul.f32 %v5374, 1.442695
  %v5398 = vpow.pop %v5397
  %v5399 = vmul.f32 %v5375, 1.442695
  %v5400 = vpow.pop %v5399
  %v5401 = vmul.f32 %v5376, 1.442695
  %v5402 = vpow.pop %v5401
  %v5403 = vmul.f32 %v5377, 1.442695
  %v5404 = vpow.pop %v5403
  %v5405 = vmul.f32 %v5378, 1.442695
  %v5406 = vpow.pop %v5405
  %v5407 = vmul.f32 %v5379, 1.442695
  %v5408 = vpow.pop %v5407
  %v5409 = vmul.f32 %v5380, 1.442695
  %v5410 = vpow.pop %v5409
  %v5411 = vmul.f32 %v5381, 1.442695
  %v5412 = vpow.pop %v5411
  %v5413 = vmul.f32 %v5382, 1.442695
  %v5414 = vpow.pop %v5413
  %v5415 = vsel %vm5318, %v5384, 0.0
  %5416 = vadd.xlane.f32.xlu0 %v5415
  %v5417 = vpop.xlane.xlu0 %5416
  %v5418 = vsel %vm5318, %v5386, 0.0
  %5419 = vadd.xlane.f32.xlu0 %v5418
  %v5420 = vpop.xlane.xlu0 %5419
  %v5421 = vsel %vm5318, %v5388, 0.0
  %5422 = vadd.xlane.f32.xlu0 %v5421
  %v5423 = vpop.xlane.xlu0 %5422
  %v5424 = vsel %vm5318, %v5390, 0.0
  %5425 = vadd.xlane.f32.xlu0 %v5424
  %v5426 = vpop.xlane.xlu0 %5425
  %v5427 = vsel %vm5318, %v5392, 0.0
  %5428 = vadd.xlane.f32.xlu0 %v5427
  %v5429 = vpop.xlane.xlu0 %5428
  %v5430 = vsel %vm5318, %v5394, 0.0
  %5431 = vadd.xlane.f32.xlu0 %v5430
  %v5432 = vpop.xlane.xlu0 %5431
  %v5433 = vsel %vm5318, %v5396, 0.0
  %5434 = vadd.xlane.f32.xlu0 %v5433
  %v5435 = vpop.xlane.xlu0 %5434
  %v5436 = vsel %vm5318, %v5398, 0.0
  %5437 = vadd.xlane.f32.xlu0 %v5436
  %v5438 = vpop.xlane.xlu0 %5437
  %v5439 = vsel %vm5318, %v5400, 0.0
  %5440 = vadd.xlane.f32.xlu0 %v5439
  %v5441 = vpop.xlane.xlu0 %5440
  %v5442 = vsel %vm5318, %v5402, 0.0
  %5443 = vadd.xlane.f32.xlu0 %v5442
  %v5444 = vpop.xlane.xlu0 %5443
  %v5445 = vsel %vm5318, %v5404, 0.0
  %5446 = vadd.xlane.f32.xlu0 %v5445
  %v5447 = vpop.xlane.xlu0 %5446
  %v5448 = vsel %vm5318, %v5406, 0.0
  %5449 = vadd.xlane.f32.xlu0 %v5448
  %v5450 = vpop.xlane.xlu0 %5449
  %v5451 = vsel %vm5318, %v5408, 0.0
  %5452 = vadd.xlane.f32.xlu0 %v5451
  %v5453 = vpop.xlane.xlu0 %5452
  %v5454 = vsel %vm5318, %v5410, 0.0
  %5455 = vadd.xlane.f32.xlu0 %v5454
  %v5456 = vpop.xlane.xlu0 %5455
  %v5457 = vsel %vm5318, %v5412, 0.0
  %5458 = vadd.xlane.f32.xlu0 %v5457
  %v5459 = vpop.xlane.xlu0 %5458
  %v5460 = vsel %vm5318, %v5414, 0.0
  %5461 = vadd.xlane.f32.xlu0 %v5460
  %v5462 = vpop.xlane.xlu0 %5461
  %v5463 = vrcp.pop %v5417
  %v5464 = vrcp.pop %v5420
  %v5465 = vrcp.pop %v5423
  %v5466 = vrcp.pop %v5426
  %v5467 = vrcp.pop %v5429
  %v5468 = vrcp.pop %v5432
  %v5469 = vrcp.pop %v5435
  %v5470 = vrcp.pop %v5438
  %v5471 = vrcp.pop %v5441
  %v5472 = vrcp.pop %v5444
  %v5473 = vrcp.pop %v5447
  %v5474 = vrcp.pop %v5450
  %v5475 = vrcp.pop %v5453
  %v5476 = vrcp.pop %v5456
  %v5477 = vrcp.pop %v5459
  %v5478 = vrcp.pop %v5462
  %v5479 = vmul.f32 %v5384, %v5463
  %v5480 = vmul.f32 %v5386, %v5464
  %v5481 = vmul.f32 %v5388, %v5465
  %v5482 = vmul.f32 %v5390, %v5466
  %v5483 = vmul.f32 %v5392, %v5467
  %v5484 = vmul.f32 %v5394, %v5468
  %v5485 = vmul.f32 %v5396, %v5469
  %v5486 = vmul.f32 %v5398, %v5470
  %v5487 = vmul.f32 %v5400, %v5471
  %v5488 = vmul.f32 %v5402, %v5472
  %v5489 = vmul.f32 %v5404, %v5473
  %v5490 = vmul.f32 %v5406, %v5474
  %v5491 = vmul.f32 %v5408, %v5475
  %v5492 = vmul.f32 %v5410, %v5476
  %v5493 = vmul.f32 %v5412, %v5477
  %v5494 = vmul.f32 %v5414, %v5478
  %v5495 = vpack.c.bf16 %v5479, %v5479
  %v5496 = vpack.c.bf16 %v5480, %v5480
  %v5497 = vpack.c.bf16 %v5481, %v5481
  %v5498 = vpack.c.bf16 %v5482, %v5482
  %v5499 = vpack.c.bf16 %v5483, %v5483
  %v5500 = vpack.c.bf16 %v5484, %v5484
  %v5501 = vpack.c.bf16 %v5485, %v5485
  %v5502 = vpack.c.bf16 %v5486, %v5486
  %v5503 = vpack.c.bf16 %v5487, %v5487
  %v5504 = vpack.c.bf16 %v5488, %v5488
  %v5505 = vpack.c.bf16 %v5489, %v5489
  %v5506 = vpack.c.bf16 %v5490, %v5490
  %v5507 = vpack.c.bf16 %v5491, %v5491
  %v5508 = vpack.c.bf16 %v5492, %v5492
  %v5509 = vpack.c.bf16 %v5493, %v5493
  %v5510 = vpack.c.bf16 %v5494, %v5494
  %v5511 = vpack.c.bf16 %v4412, %v4412
  %v5512 = vpack.c.bf16 %v4414, %v4414
  %v5513 = vpack.c.bf16 %v4417, %v4417
  %v5514 = vpack.c.bf16 %v4419, %v4419
  %v5515 = vpack.c.bf16 %v4422, %v4422
  %v5516 = vpack.c.bf16 %v4424, %v4424
  %v5517 = vpack.c.bf16 %v4427, %v4427
  %v5518 = vpack.c.bf16 %v4429, %v4429
  %v5519 = vpack.c.bf16 %v4432, %v4432
  %v5520 = vpack.c.bf16 %v4434, %v4434
  %v5521 = vpack.c.bf16 %v4458, %v4458
  %v5522 = vpack.c.bf16 %v4460, %v4460
  %v5523 = vpack.c.bf16 %v4463, %v4463
  %v5524 = vpack.c.bf16 %v4465, %v4465
  %v5525 = vpack.c.bf16 %v4468, %v4468
  %v5526 = vpack.c.bf16 %v4470, %v4470
  %v5527 = vpack.c.bf16 %v4473, %v4473
  %v5528 = vpack.c.bf16 %v4475, %v4475
  %v5529 = vpack.c.bf16 %v4478, %v4478
  %v5530 = vpack.c.bf16 %v4480, %v4480
  %v5531 = vpack.c.bf16 %v4504, %v4504
  %v5532 = vpack.c.bf16 %v4506, %v4506
  %v5533 = vpack.c.bf16 %v4509, %v4509
  %v5534 = vpack.c.bf16 %v4511, %v4511
  %v5535 = vpack.c.bf16 %v4514, %v4514
  %v5536 = vpack.c.bf16 %v4516, %v4516
  %v5537 = vpack.c.bf16 %v4519, %v4519
  %v5538 = vpack.c.bf16 %v4521, %v4521
  %v5539 = vpack.c.bf16 %v4524, %v4524
  %v5540 = vpack.c.bf16 %v4526, %v4526
  %v5541 = vpack.c.bf16 %v4550, %v4550
  %v5542 = vpack.c.bf16 %v4552, %v4552
  %v5543 = vpack.c.bf16 %v4555, %v4555
  %v5544 = vpack.c.bf16 %v4557, %v4557
  %v5545 = vpack.c.bf16 %v4560, %v4560
  %v5546 = vpack.c.bf16 %v4562, %v4562
  %v5547 = vpack.c.bf16 %v4565, %v4565
  %v5548 = vpack.c.bf16 %v4567, %v4567
  %v5549 = vpack.c.bf16 %v4570, %v4570
  %v5550 = vpack.c.bf16 %v4572, %v4572
  %v5551 = vpack.c.bf16 %v4584, %v4584
  %v5552 = vpack.c.bf16 %v4586, %v4586
  %v5553 = vpack.c.bf16 %v4589, %v4589
  %v5554 = vpack.c.bf16 %v4591, %v4591
  %v5555 = vpack.c.bf16 %v4594, %v4594
  %v5556 = vpack.c.bf16 %v4596, %v4596
  %v5557 = vpack.c.bf16 %v4599, %v4599
  %v5558 = vpack.c.bf16 %v4601, %v4601
  %v5559 = vpack.c.bf16 %v4604, %v4604
  %v5560 = vpack.c.bf16 %v4606, %v4606
  %v5561 = vpack.c.bf16 %v4618, %v4618
  %v5562 = vpack.c.bf16 %v4620, %v4620
  %v5563 = vpack.c.bf16 %v4623, %v4623
  %v5564 = vpack.c.bf16 %v4625, %v4625
  %v5565 = vpack.c.bf16 %v4628, %v4628
  %v5566 = vpack.c.bf16 %v4630, %v4630
  %v5567 = vpack.c.bf16 %v4633, %v4633
  %v5568 = vpack.c.bf16 %v4635, %v4635
  %v5569 = vpack.c.bf16 %v4638, %v4638
  %v5570 = vpack.c.bf16 %v4640, %v4640
  %v5571 = vpack.c.bf16 %v4652, %v4652
  %v5572 = vpack.c.bf16 %v4654, %v4654
  %v5573 = vpack.c.bf16 %v4657, %v4657
  %v5574 = vpack.c.bf16 %v4659, %v4659
  %v5575 = vpack.c.bf16 %v4662, %v4662
  %v5576 = vpack.c.bf16 %v4664, %v4664
  %v5577 = vpack.c.bf16 %v4667, %v4667
  %v5578 = vpack.c.bf16 %v4669, %v4669
  %v5579 = vpack.c.bf16 %v4672, %v4672
  %v5580 = vpack.c.bf16 %v4674, %v4674
  %v5581 = vpack.c.bf16 %v4686, %v4686
  %v5582 = vpack.c.bf16 %v4688, %v4688
  %v5583 = vpack.c.bf16 %v4691, %v4691
  %v5584 = vpack.c.bf16 %v4693, %v4693
  %v5585 = vpack.c.bf16 %v4696, %v4696
  %v5586 = vpack.c.bf16 %v4698, %v4698
  %v5587 = vpack.c.bf16 %v4701, %v4701
  %v5588 = vpack.c.bf16 %v4703, %v4703
  %v5589 = vpack.c.bf16 %v4706, %v4706
  %v5590 = vpack.c.bf16 %v4708, %v4708
  %v5593 = vunpack.c.l.b16 %v5495
  %v5594 = vunpack.c.l.b16 %v5496
  %v5595 = vpack.c.b16 %v5594, %v5593
  %v5606 = vunpack.c.l.b16 %v5511
  %v5607 = vunpack.c.l.b16 %v5512
  %v5608 = vunpack.c.l.b16 %v5513
  %v5609 = vunpack.c.l.b16 %v5514
  %v5610 = vunpack.c.l.b16 %v5515
  %v5611 = vunpack.c.l.b16 %v5516
  %v5612 = vunpack.c.l.b16 %v5517
  %v5613 = vunpack.c.l.b16 %v5518
  %v5614 = vunpack.c.l.b16 %v5519
  %v5615 = vunpack.c.l.b16 %v5520
  %v5616 = vpack.c.b16 %v5607, %v5606
  %v5617 = vpack.c.b16 %v5609, %v5608
  %v5618 = vpack.c.b16 %v5611, %v5610
  %v5619 = vpack.c.b16 %v5613, %v5612
  %v5620 = vpack.c.b16 %v5615, %v5614
  %v5627 = vsel %vm5318, %v5595, 0
  %5629 = vmatpush.bf16.msra.mxu0 0
  %5630 = vmatpush.bf16.msra.mxu0 0
  %5631 = vmatpush.bf16.msra.mxu0 0
  %5632 = vmatpush.bf16.msra.mxu0 %v5620
  %5633 = vmatpush.bf16.msra.mxu0 %v5619
  %5634 = vmatpush.bf16.msra.mxu0 %v5618
  %5635 = vmatpush.bf16.msra.mxu0 %v5617
  %5636 = vmatpush.bf16.msra.mxu0 %v5616
  %5637 = vmatmul.bf16.gmra.mxu0 %v5627
  %v5638 = vpop.f32.mrf.mxu0
  %v5639 = vadd.f32 0.0, %v5638
  %v5640 = vpop.f32.mrf.mxu0
  %v5641 = vadd.f32 0.0, %v5640
  %5642 = vdwg.mxu0
  %v5645 = vunpack.c.l.b16 %v5497
  %v5646 = vunpack.c.l.b16 %v5498
  %v5647 = vpack.c.b16 %v5646, %v5645
  %v5658 = vunpack.c.l.b16 %v5521
  %v5659 = vunpack.c.l.b16 %v5522
  %v5660 = vunpack.c.l.b16 %v5523
  %v5661 = vunpack.c.l.b16 %v5524
  %v5662 = vunpack.c.l.b16 %v5525
  %v5663 = vunpack.c.l.b16 %v5526
  %v5664 = vunpack.c.l.b16 %v5527
  %v5665 = vunpack.c.l.b16 %v5528
  %v5666 = vunpack.c.l.b16 %v5529
  %v5667 = vunpack.c.l.b16 %v5530
  %v5668 = vpack.c.b16 %v5659, %v5658
  %v5669 = vpack.c.b16 %v5661, %v5660
  %v5670 = vpack.c.b16 %v5663, %v5662
  %v5671 = vpack.c.b16 %v5665, %v5664
  %v5672 = vpack.c.b16 %v5667, %v5666
  %v5679 = vsel %vm5318, %v5647, 0
  %5681 = vmatpush.bf16.msra.mxu0 0
  %5682 = vmatpush.bf16.msra.mxu0 0
  %5683 = vmatpush.bf16.msra.mxu0 0
  %5684 = vmatpush.bf16.msra.mxu0 %v5672
  %5685 = vmatpush.bf16.msra.mxu0 %v5671
  %5686 = vmatpush.bf16.msra.mxu0 %v5670
  %5687 = vmatpush.bf16.msra.mxu0 %v5669
  %5688 = vmatpush.bf16.msra.mxu0 %v5668
  %5689 = vmatmul.bf16.gmra.mxu0 %v5679
  %v5690 = vpop.f32.mrf.mxu0
  %v5691 = vadd.f32 0.0, %v5690
  %v5692 = vpop.f32.mrf.mxu0
  %v5693 = vadd.f32 0.0, %v5692
  %5694 = vdwg.mxu0
  %v5697 = vunpack.c.l.b16 %v5499
  %v5698 = vunpack.c.l.b16 %v5500
  %v5699 = vpack.c.b16 %v5698, %v5697
  %v5710 = vunpack.c.l.b16 %v5531
  %v5711 = vunpack.c.l.b16 %v5532
  %v5712 = vunpack.c.l.b16 %v5533
  %v5713 = vunpack.c.l.b16 %v5534
  %v5714 = vunpack.c.l.b16 %v5535
  %v5715 = vunpack.c.l.b16 %v5536
  %v5716 = vunpack.c.l.b16 %v5537
  %v5717 = vunpack.c.l.b16 %v5538
  %v5718 = vunpack.c.l.b16 %v5539
  %v5719 = vunpack.c.l.b16 %v5540
  %v5720 = vpack.c.b16 %v5711, %v5710
  %v5721 = vpack.c.b16 %v5713, %v5712
  %v5722 = vpack.c.b16 %v5715, %v5714
  %v5723 = vpack.c.b16 %v5717, %v5716
  %v5724 = vpack.c.b16 %v5719, %v5718
  %v5731 = vsel %vm5318, %v5699, 0
  %5733 = vmatpush.bf16.msra.mxu0 0
  %5734 = vmatpush.bf16.msra.mxu0 0
  %5735 = vmatpush.bf16.msra.mxu0 0
  %5736 = vmatpush.bf16.msra.mxu0 %v5724
  %5737 = vmatpush.bf16.msra.mxu0 %v5723
  %5738 = vmatpush.bf16.msra.mxu0 %v5722
  %5739 = vmatpush.bf16.msra.mxu0 %v5721
  %5740 = vmatpush.bf16.msra.mxu0 %v5720
  %5741 = vmatmul.bf16.gmra.mxu0 %v5731
  %v5742 = vpop.f32.mrf.mxu0
  %v5743 = vadd.f32 0.0, %v5742
  %v5744 = vpop.f32.mrf.mxu0
  %v5745 = vadd.f32 0.0, %v5744
  %5746 = vdwg.mxu0
  %v5749 = vunpack.c.l.b16 %v5501
  %v5750 = vunpack.c.l.b16 %v5502
  %v5751 = vpack.c.b16 %v5750, %v5749
  %v5762 = vunpack.c.l.b16 %v5541
  %v5763 = vunpack.c.l.b16 %v5542
  %v5764 = vunpack.c.l.b16 %v5543
  %v5765 = vunpack.c.l.b16 %v5544
  %v5766 = vunpack.c.l.b16 %v5545
  %v5767 = vunpack.c.l.b16 %v5546
  %v5768 = vunpack.c.l.b16 %v5547
  %v5769 = vunpack.c.l.b16 %v5548
  %v5770 = vunpack.c.l.b16 %v5549
  %v5771 = vunpack.c.l.b16 %v5550
  %v5772 = vpack.c.b16 %v5763, %v5762
  %v5773 = vpack.c.b16 %v5765, %v5764
  %v5774 = vpack.c.b16 %v5767, %v5766
  %v5775 = vpack.c.b16 %v5769, %v5768
  %v5776 = vpack.c.b16 %v5771, %v5770
  %v5783 = vsel %vm5318, %v5751, 0
  %5785 = vmatpush.bf16.msra.mxu0 0
  %5786 = vmatpush.bf16.msra.mxu0 0
  %5787 = vmatpush.bf16.msra.mxu0 0
  %5788 = vmatpush.bf16.msra.mxu0 %v5776
  %5789 = vmatpush.bf16.msra.mxu0 %v5775
  %5790 = vmatpush.bf16.msra.mxu0 %v5774
  %5791 = vmatpush.bf16.msra.mxu0 %v5773
  %5792 = vmatpush.bf16.msra.mxu0 %v5772
  %5793 = vmatmul.bf16.gmra.mxu0 %v5783
  %v5794 = vpop.f32.mrf.mxu0
  %v5795 = vadd.f32 0.0, %v5794
  %v5796 = vpop.f32.mrf.mxu0
  %v5797 = vadd.f32 0.0, %v5796
  %5798 = vdwg.mxu0
  %v5801 = vunpack.c.l.b16 %v5503
  %v5802 = vunpack.c.l.b16 %v5504
  %v5803 = vpack.c.b16 %v5802, %v5801
  %v5814 = vunpack.c.l.b16 %v5551
  %v5815 = vunpack.c.l.b16 %v5552
  %v5816 = vunpack.c.l.b16 %v5553
  %v5817 = vunpack.c.l.b16 %v5554
  %v5818 = vunpack.c.l.b16 %v5555
  %v5819 = vunpack.c.l.b16 %v5556
  %v5820 = vunpack.c.l.b16 %v5557
  %v5821 = vunpack.c.l.b16 %v5558
  %v5822 = vunpack.c.l.b16 %v5559
  %v5823 = vunpack.c.l.b16 %v5560
  %v5824 = vpack.c.b16 %v5815, %v5814
  %v5825 = vpack.c.b16 %v5817, %v5816
  %v5826 = vpack.c.b16 %v5819, %v5818
  %v5827 = vpack.c.b16 %v5821, %v5820
  %v5828 = vpack.c.b16 %v5823, %v5822
  %v5835 = vsel %vm5318, %v5803, 0
  %5837 = vmatpush.bf16.msra.mxu0 0
  %5838 = vmatpush.bf16.msra.mxu0 0
  %5839 = vmatpush.bf16.msra.mxu0 0
  %5840 = vmatpush.bf16.msra.mxu0 %v5828
  %5841 = vmatpush.bf16.msra.mxu0 %v5827
  %5842 = vmatpush.bf16.msra.mxu0 %v5826
  %5843 = vmatpush.bf16.msra.mxu0 %v5825
  %5844 = vmatpush.bf16.msra.mxu0 %v5824
  %5845 = vmatmul.bf16.gmra.mxu0 %v5835
  %v5846 = vpop.f32.mrf.mxu0
  %v5847 = vadd.f32 0.0, %v5846
  %v5848 = vpop.f32.mrf.mxu0
  %v5849 = vadd.f32 0.0, %v5848
  %5850 = vdwg.mxu0
  %v5853 = vunpack.c.l.b16 %v5505
  %v5854 = vunpack.c.l.b16 %v5506
  %v5855 = vpack.c.b16 %v5854, %v5853
  %v5866 = vunpack.c.l.b16 %v5561
  %v5867 = vunpack.c.l.b16 %v5562
  %v5868 = vunpack.c.l.b16 %v5563
  %v5869 = vunpack.c.l.b16 %v5564
  %v5870 = vunpack.c.l.b16 %v5565
  %v5871 = vunpack.c.l.b16 %v5566
  %v5872 = vunpack.c.l.b16 %v5567
  %v5873 = vunpack.c.l.b16 %v5568
  %v5874 = vunpack.c.l.b16 %v5569
  %v5875 = vunpack.c.l.b16 %v5570
  %v5876 = vpack.c.b16 %v5867, %v5866
  %v5877 = vpack.c.b16 %v5869, %v5868
  %v5878 = vpack.c.b16 %v5871, %v5870
  %v5879 = vpack.c.b16 %v5873, %v5872
  %v5880 = vpack.c.b16 %v5875, %v5874
  %v5887 = vsel %vm5318, %v5855, 0
  %5889 = vmatpush.bf16.msra.mxu0 0
  %5890 = vmatpush.bf16.msra.mxu0 0
  %5891 = vmatpush.bf16.msra.mxu0 0
  %5892 = vmatpush.bf16.msra.mxu0 %v5880
  %5893 = vmatpush.bf16.msra.mxu0 %v5879
  %5894 = vmatpush.bf16.msra.mxu0 %v5878
  %5895 = vmatpush.bf16.msra.mxu0 %v5877
  %5896 = vmatpush.bf16.msra.mxu0 %v5876
  %5897 = vmatmul.bf16.gmra.mxu0 %v5887
  %v5898 = vpop.f32.mrf.mxu0
  %v5899 = vadd.f32 0.0, %v5898
  %v5900 = vpop.f32.mrf.mxu0
  %v5901 = vadd.f32 0.0, %v5900
  %5902 = vdwg.mxu0
  %v5905 = vunpack.c.l.b16 %v5507
  %v5906 = vunpack.c.l.b16 %v5508
  %v5907 = vpack.c.b16 %v5906, %v5905
  %v5918 = vunpack.c.l.b16 %v5571
  %v5919 = vunpack.c.l.b16 %v5572
  %v5920 = vunpack.c.l.b16 %v5573
  %v5921 = vunpack.c.l.b16 %v5574
  %v5922 = vunpack.c.l.b16 %v5575
  %v5923 = vunpack.c.l.b16 %v5576
  %v5924 = vunpack.c.l.b16 %v5577
  %v5925 = vunpack.c.l.b16 %v5578
  %v5926 = vunpack.c.l.b16 %v5579
  %v5927 = vunpack.c.l.b16 %v5580
  %v5928 = vpack.c.b16 %v5919, %v5918
  %v5929 = vpack.c.b16 %v5921, %v5920
  %v5930 = vpack.c.b16 %v5923, %v5922
  %v5931 = vpack.c.b16 %v5925, %v5924
  %v5932 = vpack.c.b16 %v5927, %v5926
  %v5939 = vsel %vm5318, %v5907, 0
  %5941 = vmatpush.bf16.msra.mxu0 0
  %5942 = vmatpush.bf16.msra.mxu0 0
  %5943 = vmatpush.bf16.msra.mxu0 0
  %5944 = vmatpush.bf16.msra.mxu0 %v5932
  %5945 = vmatpush.bf16.msra.mxu0 %v5931
  %5946 = vmatpush.bf16.msra.mxu0 %v5930
  %5947 = vmatpush.bf16.msra.mxu0 %v5929
  %5948 = vmatpush.bf16.msra.mxu0 %v5928
  %5949 = vmatmul.bf16.gmra.mxu0 %v5939
  %v5950 = vpop.f32.mrf.mxu0
  %v5951 = vadd.f32 0.0, %v5950
  %v5952 = vpop.f32.mrf.mxu0
  %v5953 = vadd.f32 0.0, %v5952
  %5954 = vdwg.mxu0
  %v5957 = vunpack.c.l.b16 %v5509
  %v5958 = vunpack.c.l.b16 %v5510
  %v5959 = vpack.c.b16 %v5958, %v5957
  %v5970 = vunpack.c.l.b16 %v5581
  %v5971 = vunpack.c.l.b16 %v5582
  %v5972 = vunpack.c.l.b16 %v5583
  %v5973 = vunpack.c.l.b16 %v5584
  %v5974 = vunpack.c.l.b16 %v5585
  %v5975 = vunpack.c.l.b16 %v5586
  %v5976 = vunpack.c.l.b16 %v5587
  %v5977 = vunpack.c.l.b16 %v5588
  %v5978 = vunpack.c.l.b16 %v5589
  %v5979 = vunpack.c.l.b16 %v5590
  %v5980 = vpack.c.b16 %v5971, %v5970
  %v5981 = vpack.c.b16 %v5973, %v5972
  %v5982 = vpack.c.b16 %v5975, %v5974
  %v5983 = vpack.c.b16 %v5977, %v5976
  %v5984 = vpack.c.b16 %v5979, %v5978
  %v5991 = vsel %vm5318, %v5959, 0
  %5993 = vmatpush.bf16.msra.mxu0 0
  %5994 = vmatpush.bf16.msra.mxu0 0
  %5995 = vmatpush.bf16.msra.mxu0 0
  %5996 = vmatpush.bf16.msra.mxu0 %v5984
  %5997 = vmatpush.bf16.msra.mxu0 %v5983
  %5998 = vmatpush.bf16.msra.mxu0 %v5982
  %5999 = vmatpush.bf16.msra.mxu0 %v5981
  %6000 = vmatpush.bf16.msra.mxu0 %v5980
  %6001 = vmatmul.bf16.gmra.mxu0 %v5991
  %v6002 = vpop.f32.mrf.mxu0
  %v6003 = vadd.f32 0.0, %v6002
  %v6004 = vpop.f32.mrf.mxu0
  %v6005 = vadd.f32 0.0, %v6004
  %6006 = vdwg.mxu0
  %v6007 = vpack.c.bf16 %v5639, %v5639
  %v6008 = vpack.c.bf16 %v5641, %v5641
  %v6009 = vpack.c.bf16 %v5691, %v5691
  %v6010 = vpack.c.bf16 %v5693, %v5693
  %v6011 = vpack.c.bf16 %v5743, %v5743
  %v6012 = vpack.c.bf16 %v5745, %v5745
  %v6013 = vpack.c.bf16 %v5795, %v5795
  %v6014 = vpack.c.bf16 %v5797, %v5797
  %v6015 = vpack.c.bf16 %v5847, %v5847
  %v6016 = vpack.c.bf16 %v5849, %v5849
  %v6017 = vpack.c.bf16 %v5899, %v5899
  %v6018 = vpack.c.bf16 %v5901, %v5901
  %v6019 = vpack.c.bf16 %v5951, %v5951
  %v6020 = vpack.c.bf16 %v5953, %v5953
  %v6021 = vpack.c.bf16 %v6003, %v6003
  %v6022 = vpack.c.bf16 %v6005, %v6005
  %v6025 = vunpack.c.l.b16 %v6007
  %v6026 = vunpack.c.l.b16 %v6008
  %v6027 = vpack.c.b16 %v6026, %v6025
  %v6029 = vsel %vm2015, %v6027, 0
  %v6032 = vsel %vm3056, %v256, 0
  %6034 = vmatpush.bf16.msra.mxu0 0
  %6035 = vmatpush.bf16.msra.mxu0 0
  %6036 = vmatpush.bf16.msra.mxu0 0
  %6037 = vmatpush.bf16.msra.mxu0 0
  %6038 = vmatpush.bf16.msra.mxu0 0
  %6039 = vmatpush.bf16.msra.mxu0 0
  %6040 = vmatpush.bf16.msra.mxu0 0
  %6041 = vmatpush.bf16.msra.mxu0 %v6032
  %6042 = vmatmul.bf16.gmra.mxu0 %v6029
  %v6043 = vpop.f32.mrf.mxu0
  %v6044 = vadd.f32 0.0, %v6043
  %v6045 = vpop.f32.mrf.mxu0
  %v6046 = vadd.f32 0.0, %v6045
  %6047 = vdwg.mxu0
  %v6050 = vunpack.c.l.b16 %v6009
  %v6051 = vunpack.c.l.b16 %v6010
  %v6052 = vpack.c.b16 %v6051, %v6050
  %v6054 = vsel %vm2015, %v6052, 0
  %v6057 = vsel %vm3056, %v257, 0
  %6059 = vmatpush.bf16.msra.mxu0 0
  %6060 = vmatpush.bf16.msra.mxu0 0
  %6061 = vmatpush.bf16.msra.mxu0 0
  %6062 = vmatpush.bf16.msra.mxu0 0
  %6063 = vmatpush.bf16.msra.mxu0 0
  %6064 = vmatpush.bf16.msra.mxu0 0
  %6065 = vmatpush.bf16.msra.mxu0 0
  %6066 = vmatpush.bf16.msra.mxu0 %v6057
  %6067 = vmatmul.bf16.gmra.mxu0 %v6054
  %v6068 = vpop.f32.mrf.mxu0
  %v6069 = vadd.f32 0.0, %v6068
  %v6070 = vpop.f32.mrf.mxu0
  %v6071 = vadd.f32 0.0, %v6070
  %6072 = vdwg.mxu0
  %v6075 = vunpack.c.l.b16 %v6011
  %v6076 = vunpack.c.l.b16 %v6012
  %v6077 = vpack.c.b16 %v6076, %v6075
  %v6079 = vsel %vm2015, %v6077, 0
  %v6082 = vsel %vm3056, %v258, 0
  %6084 = vmatpush.bf16.msra.mxu0 0
  %6085 = vmatpush.bf16.msra.mxu0 0
  %6086 = vmatpush.bf16.msra.mxu0 0
  %6087 = vmatpush.bf16.msra.mxu0 0
  %6088 = vmatpush.bf16.msra.mxu0 0
  %6089 = vmatpush.bf16.msra.mxu0 0
  %6090 = vmatpush.bf16.msra.mxu0 0
  %6091 = vmatpush.bf16.msra.mxu0 %v6082
  %6092 = vmatmul.bf16.gmra.mxu0 %v6079
  %v6093 = vpop.f32.mrf.mxu0
  %v6094 = vadd.f32 0.0, %v6093
  %v6095 = vpop.f32.mrf.mxu0
  %v6096 = vadd.f32 0.0, %v6095
  %6097 = vdwg.mxu0
  %v6100 = vunpack.c.l.b16 %v6013
  %v6101 = vunpack.c.l.b16 %v6014
  %v6102 = vpack.c.b16 %v6101, %v6100
  %v6104 = vsel %vm2015, %v6102, 0
  %v6107 = vsel %vm3056, %v259, 0
  %6109 = vmatpush.bf16.msra.mxu0 0
  %6110 = vmatpush.bf16.msra.mxu0 0
  %6111 = vmatpush.bf16.msra.mxu0 0
  %6112 = vmatpush.bf16.msra.mxu0 0
  %6113 = vmatpush.bf16.msra.mxu0 0
  %6114 = vmatpush.bf16.msra.mxu0 0
  %6115 = vmatpush.bf16.msra.mxu0 0
  %6116 = vmatpush.bf16.msra.mxu0 %v6107
  %6117 = vmatmul.bf16.gmra.mxu0 %v6104
  %v6118 = vpop.f32.mrf.mxu0
  %v6119 = vadd.f32 0.0, %v6118
  %v6120 = vpop.f32.mrf.mxu0
  %v6121 = vadd.f32 0.0, %v6120
  %6122 = vdwg.mxu0
  %v6125 = vunpack.c.l.b16 %v6015
  %v6126 = vunpack.c.l.b16 %v6016
  %v6127 = vpack.c.b16 %v6126, %v6125
  %v6129 = vsel %vm2015, %v6127, 0
  %6131 = vmatpush.bf16.msra.mxu0 0
  %6132 = vmatpush.bf16.msra.mxu0 0
  %6133 = vmatpush.bf16.msra.mxu0 0
  %6134 = vmatpush.bf16.msra.mxu0 0
  %6135 = vmatpush.bf16.msra.mxu0 0
  %6136 = vmatpush.bf16.msra.mxu0 0
  %6137 = vmatpush.bf16.msra.mxu0 0
  %6138 = vmatpush.bf16.msra.mxu0 %v6032
  %6139 = vmatmul.bf16.gmra.mxu0 %v6129
  %v6140 = vpop.f32.mrf.mxu0
  %v6141 = vadd.f32 0.0, %v6140
  %v6142 = vpop.f32.mrf.mxu0
  %v6143 = vadd.f32 0.0, %v6142
  %6144 = vdwg.mxu0
  %v6147 = vunpack.c.l.b16 %v6017
  %v6148 = vunpack.c.l.b16 %v6018
  %v6149 = vpack.c.b16 %v6148, %v6147
  %v6151 = vsel %vm2015, %v6149, 0
  %6153 = vmatpush.bf16.msra.mxu0 0
  %6154 = vmatpush.bf16.msra.mxu0 0
  %6155 = vmatpush.bf16.msra.mxu0 0
  %6156 = vmatpush.bf16.msra.mxu0 0
  %6157 = vmatpush.bf16.msra.mxu0 0
  %6158 = vmatpush.bf16.msra.mxu0 0
  %6159 = vmatpush.bf16.msra.mxu0 0
  %6160 = vmatpush.bf16.msra.mxu0 %v6057
  %6161 = vmatmul.bf16.gmra.mxu0 %v6151
  %v6162 = vpop.f32.mrf.mxu0
  %v6163 = vadd.f32 0.0, %v6162
  %v6164 = vpop.f32.mrf.mxu0
  %v6165 = vadd.f32 0.0, %v6164
  %6166 = vdwg.mxu0
  %v6169 = vunpack.c.l.b16 %v6019
  %v6170 = vunpack.c.l.b16 %v6020
  %v6171 = vpack.c.b16 %v6170, %v6169
  %v6173 = vsel %vm2015, %v6171, 0
  %6175 = vmatpush.bf16.msra.mxu0 0
  %6176 = vmatpush.bf16.msra.mxu0 0
  %6177 = vmatpush.bf16.msra.mxu0 0
  %6178 = vmatpush.bf16.msra.mxu0 0
  %6179 = vmatpush.bf16.msra.mxu0 0
  %6180 = vmatpush.bf16.msra.mxu0 0
  %6181 = vmatpush.bf16.msra.mxu0 0
  %6182 = vmatpush.bf16.msra.mxu0 %v6082
  %6183 = vmatmul.bf16.gmra.mxu0 %v6173
  %v6184 = vpop.f32.mrf.mxu0
  %v6185 = vadd.f32 0.0, %v6184
  %v6186 = vpop.f32.mrf.mxu0
  %v6187 = vadd.f32 0.0, %v6186
  %6188 = vdwg.mxu0
  %v6191 = vunpack.c.l.b16 %v6021
  %v6192 = vunpack.c.l.b16 %v6022
  %v6193 = vpack.c.b16 %v6192, %v6191
  %v6195 = vsel %vm2015, %v6193, 0
  %6197 = vmatpush.bf16.msra.mxu0 0
  %6198 = vmatpush.bf16.msra.mxu0 0
  %6199 = vmatpush.bf16.msra.mxu0 0
  %6200 = vmatpush.bf16.msra.mxu0 0
  %6201 = vmatpush.bf16.msra.mxu0 0
  %6202 = vmatpush.bf16.msra.mxu0 0
  %6203 = vmatpush.bf16.msra.mxu0 0
  %6204 = vmatpush.bf16.msra.mxu0 %v6107
  %6205 = vmatmul.bf16.gmra.mxu0 %v6195
  %v6206 = vpop.f32.mrf.mxu0
  %v6207 = vadd.f32 0.0, %v6206
  %v6208 = vpop.f32.mrf.mxu0
  %v6209 = vadd.f32 0.0, %v6208
  %6210 = vdwg.mxu0
  %v6211 = vadd.f32 %v6044, %v6069
  %v6212 = vadd.f32 %v6046, %v6071
  %v6213 = vadd.f32 %v6141, %v6163
  %v6214 = vadd.f32 %v6143, %v6165
  %v6215 = vadd.f32 %v6211, %v6094
  %v6216 = vadd.f32 %v6212, %v6096
  %v6217 = vadd.f32 %v6213, %v6185
  %v6218 = vadd.f32 %v6214, %v6187
  %v6219 = vadd.f32 %v6215, %v6119
  %v6220 = vadd.f32 %v6216, %v6121
  %v6221 = vadd.f32 %v6217, %v6207
  %v6222 = vadd.f32 %v6218, %v6209
  %v6224 = vperm.slane %v260, 0
  %v6226 = vadd.f32 %v6219, %v6224
  %v6227 = vadd.f32 %v6220, %v6224
  %v6228 = vadd.f32 %v6221, %v6224
  %v6229 = vadd.f32 %v6222, %v6224
  %v6230 = vadd.f32 %v3652, %v6226
  %v6231 = vadd.f32 %v3653, %v6227
  %v6232 = vadd.f32 %v3654, %v6228
  %v6233 = vadd.f32 %v3655, %v6229
  %v6234 = vsel %vm374, %v6230, 0.0
  %6235 = vadd.xlane.f32.xlu0 %v6234
  %v6236 = vpop.xlane.xlu0 %6235
  %v6237 = vsel %vm374, %v6231, 0.0
  %6238 = vadd.xlane.f32.xlu0 %v6237
  %v6239 = vpop.xlane.xlu0 %6238
  %v6240 = vsel %vm374, %v6232, 0.0
  %6241 = vadd.xlane.f32.xlu0 %v6240
  %v6242 = vpop.xlane.xlu0 %6241
  %v6243 = vsel %vm374, %v6233, 0.0
  %6244 = vadd.xlane.f32.xlu0 %v6243
  %v6245 = vpop.xlane.xlu0 %6244
  %v6246 = vmul.f32 %v6236, %v429
  %v6247 = vmul.f32 %v6239, %v429
  %v6248 = vmul.f32 %v6242, %v429
  %v6249 = vmul.f32 %v6245, %v429
  %v6250 = vsub.f32 %v6230, %v6246
  %v6251 = vsub.f32 %v6231, %v6247
  %v6252 = vsub.f32 %v6232, %v6248
  %v6253 = vsub.f32 %v6233, %v6249
  %v6254 = vmul.f32 %v6250, %v6250
  %v6255 = vmul.f32 %v6251, %v6251
  %v6256 = vmul.f32 %v6252, %v6252
  %v6257 = vmul.f32 %v6253, %v6253
  %v6258 = vsel %vm374, %v6254, 0.0
  %6259 = vadd.xlane.f32.xlu0 %v6258
  %v6260 = vpop.xlane.xlu0 %6259
  %v6261 = vsel %vm374, %v6255, 0.0
  %6262 = vadd.xlane.f32.xlu0 %v6261
  %v6263 = vpop.xlane.xlu0 %6262
  %v6264 = vsel %vm374, %v6256, 0.0
  %6265 = vadd.xlane.f32.xlu0 %v6264
  %v6266 = vpop.xlane.xlu0 %6265
  %v6267 = vsel %vm374, %v6257, 0.0
  %6268 = vadd.xlane.f32.xlu0 %v6267
  %v6269 = vpop.xlane.xlu0 %6268
  %v6270 = vmul.f32 %v6260, %v429
  %v6271 = vmul.f32 %v6263, %v429
  %v6272 = vmul.f32 %v6266, %v429
  %v6273 = vmul.f32 %v6269, %v429
  %v6274 = vadd.f32 %v6270, 1e-05
  %v6275 = vadd.f32 %v6271, 1e-05
  %v6276 = vadd.f32 %v6272, 1e-05
  %v6277 = vadd.f32 %v6273, 1e-05
  %v6278 = vrsqrt.pop %v6274
  %v6279 = vmul.f32 %v6278, %v6274
  %v6280 = vmul.f32 %v6279, %v6278
  %v6281 = vmul.f32 0.5, %v6280
  %v6282 = vsub.f32 1.5, %v6281
  %v6283 = vmul.f32 %v6278, %v6282
  %vm6284 = vweird.f32 %v6274
  %vm6285 = vweird.f32 %v6278
  %vm6286 = vmor %vm6284, %vm6285
  %v6287 = vsel %vm6286, %v6278, %v6283
  %v6288 = vrsqrt.pop %v6275
  %v6289 = vmul.f32 %v6288, %v6275
  %v6290 = vmul.f32 %v6289, %v6288
  %v6291 = vmul.f32 0.5, %v6290
  %v6292 = vsub.f32 1.5, %v6291
  %v6293 = vmul.f32 %v6288, %v6292
  %vm6294 = vweird.f32 %v6275
  %vm6295 = vweird.f32 %v6288
  %vm6296 = vmor %vm6294, %vm6295
  %v6297 = vsel %vm6296, %v6288, %v6293
  %v6298 = vrsqrt.pop %v6276
  %v6299 = vmul.f32 %v6298, %v6276
  %v6300 = vmul.f32 %v6299, %v6298
  %v6301 = vmul.f32 0.5, %v6300
  %v6302 = vsub.f32 1.5, %v6301
  %v6303 = vmul.f32 %v6298, %v6302
  %vm6304 = vweird.f32 %v6276
  %vm6305 = vweird.f32 %v6298
  %vm6306 = vmor %vm6304, %vm6305
  %v6307 = vsel %vm6306, %v6298, %v6303
  %v6308 = vrsqrt.pop %v6277
  %v6309 = vmul.f32 %v6308, %v6277
  %v6310 = vmul.f32 %v6309, %v6308
  %v6311 = vmul.f32 0.5, %v6310
  %v6312 = vsub.f32 1.5, %v6311
  %v6313 = vmul.f32 %v6308, %v6312
  %vm6314 = vweird.f32 %v6277
  %vm6315 = vweird.f32 %v6308
  %vm6316 = vmor %vm6314, %vm6315
  %v6317 = vsel %vm6316, %v6308, %v6313
  %v6318 = vmul.f32 %v6250, %v6287
  %v6319 = vmul.f32 %v6251, %v6297
  %v6320 = vmul.f32 %v6252, %v6307
  %v6321 = vmul.f32 %v6253, %v6317
  %v6323 = vperm.slane %v261, 0
  %v6325 = vmul.f32 %v6318, %v6323
  %v6326 = vmul.f32 %v6319, %v6323
  %v6327 = vmul.f32 %v6320, %v6323
  %v6328 = vmul.f32 %v6321, %v6323
  %v6330 = vperm.slane %v262, 0
  %v6332 = vadd.f32 %v6325, %v6330
  %v6333 = vadd.f32 %v6326, %v6330
  %v6334 = vadd.f32 %v6327, %v6330
  %v6335 = vadd.f32 %v6328, %v6330
  %v6336 = vpack.c.bf16 %v6333, %v6332
  %v6337 = vpack.c.bf16 %v6335, %v6334
  %v6339 = vperm.slane %v267, 0
  %v6345 = vunpack.c.l.b16 %v263
  %v6346 = vunpack.c.l.b16 %v264
  %v6347 = vunpack.c.l.b16 %v265
  %v6348 = vunpack.c.l.b16 %v266
  %v6349 = vpack.c.b16 %v6346, %v6345
  %v6350 = vpack.c.b16 %v6348, %v6347
  %v6354 = vsel %vm374, %v6336, 0
  %v6357 = vsel %vm374, %v6337, 0
  %6359 = vmatpush.bf16.msra.mxu0 0
  %6360 = vmatpush.bf16.msra.mxu0 0
  %6361 = vmatpush.bf16.msra.mxu0 0
  %6362 = vmatpush.bf16.msra.mxu0 0
  %6363 = vmatpush.bf16.msra.mxu0 0
  %6364 = vmatpush.bf16.msra.mxu0 0
  %6365 = vmatpush.bf16.msra.mxu0 %v6350
  %6366 = vmatpush.bf16.msra.mxu0 %v6349
  %6367 = vmatmul.bf16.gmra.mxu0 %v6354
  %v6368 = vpop.f32.mrf.mxu0
  %v6369 = vadd.f32 %v6339, %v6368
  %v6370 = vpop.f32.mrf.mxu0
  %v6371 = vadd.f32 %v6339, %v6370
  %6372 = vmatmul.bf16.gmra.mxu0 %v6357
  %v6373 = vpop.f32.mrf.mxu0
  %v6374 = vadd.f32 %v6339, %v6373
  %v6375 = vpop.f32.mrf.mxu0
  %v6376 = vadd.f32 %v6339, %v6375
  %6377 = vdwg.mxu0
  %v6378 = vmul.f32 %v6369, 0.5
  %v6379 = vmul.f32 %v6371, 0.5
  %v6380 = vmul.f32 %v6374, 0.5
  %v6381 = vmul.f32 %v6376, 0.5
  %v6382 = vmul.f32 %v6369, 0.70710677
  %v6383 = vmul.f32 %v6371, 0.70710677
  %v6384 = vmul.f32 %v6374, 0.70710677
  %v6385 = vmul.f32 %v6376, 0.70710677
  %v6386 = vmul.f32 %v6382, %v6382
  %v6387 = vmin.f32 16.0, %v6386
  %v6388 = vmul.f32 %v6387, 2.1237322e-06
  %v6389 = vadd.f32 %v6388, 0.00028619796
  %v6390 = vmul.f32 %v6387, %v6389
  %v6391 = vadd.f32 %v6390, 0.0036580483
  %v6392 = vmul.f32 %v6387, %v6391
  %v6393 = vadd.f32 %v6392, 0.05243302
  %v6394 = vmul.f32 %v6387, %v6393
  %v6395 = vadd.f32 %v6394, 0.18741608
  %v6396 = vmul.f32 %v6387, %v6395
  %v6397 = vadd.f32 %v6396, 1.1283791
  %v6398 = vmul.f32 %v6382, %v6397
  %v6399 = vmul.f32 %v6387, 3.8918573e-05
  %v6400 = vadd.f32 %v6399, 0.001143296
  %v6401 = vmul.f32 %v6387, %v6400
  %v6402 = vadd.f32 %v6401, 0.014752088
  %v6403 = vmul.f32 %v6387, %v6402
  %v6404 = vadd.f32 %v6403, 0.112945676
  %v6405 = vmul.f32 %v6387, %v6404
  %v6406 = vadd.f32 %v6405, 0.4994258
  %v6407 = vmul.f32 %v6387, %v6406
  %v6408 = vadd.f32 %v6407, 1.0
  %v6409 = vrcp.pop %v6408
  %v6410 = vmul.f32 %v6408, %v6409
  %v6411 = vsub.f32 1.0, %v6410
  %v6412 = vmul.f32 %v6409, %v6411
  %v6413 = vadd.f32 %v6409, %v6412
  %vm6414 = vweird.f32 %v6408
  %vm6415 = vweird.f32 %v6409
  %vm6416 = vmor %vm6414, %vm6415
  %v6417 = vsel %vm6416, %v6409, %v6413
  %v6418 = vand.u32 2147483647, %v6408
  %vm6419 = vcmp.eq.f32.partialorder %v6418, 8.507059e+37
  %v6420 = vand.u32 %v6408, 2147483648
  %v6421 = vor.u32 1.1754944e-38, %v6420
  %v6422 = vsel %vm6419, %v6421, %v6417
  %v6423 = vmul.f32 %v6398, %v6422
  %v6424 = vmin.f32 %v6423, 1.0
  %v6425 = vmax.f32 %v6424, -1.0
  %v6426 = vmul.f32 %v6383, %v6383
  %v6427 = vmin.f32 16.0, %v6426
  %v6428 = vmul.f32 %v6427, 2.1237322e-06
  %v6429 = vadd.f32 %v6428, 0.00028619796
  %v6430 = vmul.f32 %v6427, %v6429
  %v6431 = vadd.f32 %v6430, 0.0036580483
  %v6432 = vmul.f32 %v6427, %v6431
  %v6433 = vadd.f32 %v6432, 0.05243302
  %v6434 = vmul.f32 %v6427, %v6433
  %v6435 = vadd.f32 %v6434, 0.18741608
  %v6436 = vmul.f32 %v6427, %v6435
  %v6437 = vadd.f32 %v6436, 1.1283791
  %v6438 = vmul.f32 %v6383, %v6437
  %v6439 = vmul.f32 %v6427, 3.8918573e-05
  %v6440 = vadd.f32 %v6439, 0.001143296
  %v6441 = vmul.f32 %v6427, %v6440
  %v6442 = vadd.f32 %v6441, 0.014752088
  %v6443 = vmul.f32 %v6427, %v6442
  %v6444 = vadd.f32 %v6443, 0.112945676
  %v6445 = vmul.f32 %v6427, %v6444
  %v6446 = vadd.f32 %v6445, 0.4994258
  %v6447 = vmul.f32 %v6427, %v6446
  %v6448 = vadd.f32 %v6447, 1.0
  %v6449 = vrcp.pop %v6448
  %v6450 = vmul.f32 %v6448, %v6449
  %v6451 = vsub.f32 1.0, %v6450
  %v6452 = vmul.f32 %v6449, %v6451
  %v6453 = vadd.f32 %v6449, %v6452
  %vm6454 = vweird.f32 %v6448
  %vm6455 = vweird.f32 %v6449
  %vm6456 = vmor %vm6454, %vm6455
  %v6457 = vsel %vm6456, %v6449, %v6453
  %v6458 = vand.u32 2147483647, %v6448
  %vm6459 = vcmp.eq.f32.partialorder %v6458, 8.507059e+37
  %v6460 = vand.u32 %v6448, 2147483648
  %v6461 = vor.u32 1.1754944e-38, %v6460
  %v6462 = vsel %vm6459, %v6461, %v6457
  %v6463 = vmul.f32 %v6438, %v6462
  %v6464 = vmin.f32 %v6463, 1.0
  %v6465 = vmax.f32 %v6464, -1.0
  %v6466 = vmul.f32 %v6384, %v6384
  %v6467 = vmin.f32 16.0, %v6466
  %v6468 = vmul.f32 %v6467, 2.1237322e-06
  %v6469 = vadd.f32 %v6468, 0.00028619796
  %v6470 = vmul.f32 %v6467, %v6469
  %v6471 = vadd.f32 %v6470, 0.0036580483
  %v6472 = vmul.f32 %v6467, %v6471
  %v6473 = vadd.f32 %v6472, 0.05243302
  %v6474 = vmul.f32 %v6467, %v6473
  %v6475 = vadd.f32 %v6474, 0.18741608
  %v6476 = vmul.f32 %v6467, %v6475
  %v6477 = vadd.f32 %v6476, 1.1283791
  %v6478 = vmul.f32 %v6384, %v6477
  %v6479 = vmul.f32 %v6467, 3.8918573e-05
  %v6480 = vadd.f32 %v6479, 0.001143296
  %v6481 = vmul.f32 %v6467, %v6480
  %v6482 = vadd.f32 %v6481, 0.014752088
  %v6483 = vmul.f32 %v6467, %v6482
  %v6484 = vadd.f32 %v6483, 0.112945676
  %v6485 = vmul.f32 %v6467, %v6484
  %v6486 = vadd.f32 %v6485, 0.4994258
  %v6487 = vmul.f32 %v6467, %v6486
  %v6488 = vadd.f32 %v6487, 1.0
  %v6489 = vrcp.pop %v6488
  %v6490 = vmul.f32 %v6488, %v6489
  %v6491 = vsub.f32 1.0, %v6490
  %v6492 = vmul.f32 %v6489, %v6491
  %v6493 = vadd.f32 %v6489, %v6492
  %vm6494 = vweird.f32 %v6488
  %vm6495 = vweird.f32 %v6489
  %vm6496 = vmor %vm6494, %vm6495
  %v6497 = vsel %vm6496, %v6489, %v6493
  %v6498 = vand.u32 2147483647, %v6488
  %vm6499 = vcmp.eq.f32.partialorder %v6498, 8.507059e+37
  %v6500 = vand.u32 %v6488, 2147483648
  %v6501 = vor.u32 1.1754944e-38, %v6500
  %v6502 = vsel %vm6499, %v6501, %v6497
  %v6503 = vmul.f32 %v6478, %v6502
  %v6504 = vmin.f32 %v6503, 1.0
  %v6505 = vmax.f32 %v6504, -1.0
  %v6506 = vmul.f32 %v6385, %v6385
  %v6507 = vmin.f32 16.0, %v6506
  %v6508 = vmul.f32 %v6507, 2.1237322e-06
  %v6509 = vadd.f32 %v6508, 0.00028619796
  %v6510 = vmul.f32 %v6507, %v6509
  %v6511 = vadd.f32 %v6510, 0.0036580483
  %v6512 = vmul.f32 %v6507, %v6511
  %v6513 = vadd.f32 %v6512, 0.05243302
  %v6514 = vmul.f32 %v6507, %v6513
  %v6515 = vadd.f32 %v6514, 0.18741608
  %v6516 = vmul.f32 %v6507, %v6515
  %v6517 = vadd.f32 %v6516, 1.1283791
  %v6518 = vmul.f32 %v6385, %v6517
  %v6519 = vmul.f32 %v6507, 3.8918573e-05
  %v6520 = vadd.f32 %v6519, 0.001143296
  %v6521 = vmul.f32 %v6507, %v6520
  %v6522 = vadd.f32 %v6521, 0.014752088
  %v6523 = vmul.f32 %v6507, %v6522
  %v6524 = vadd.f32 %v6523, 0.112945676
  %v6525 = vmul.f32 %v6507, %v6524
  %v6526 = vadd.f32 %v6525, 0.4994258
  %v6527 = vmul.f32 %v6507, %v6526
  %v6528 = vadd.f32 %v6527, 1.0
  %v6529 = vrcp.pop %v6528
  %v6530 = vmul.f32 %v6528, %v6529
  %v6531 = vsub.f32 1.0, %v6530
  %v6532 = vmul.f32 %v6529, %v6531
  %v6533 = vadd.f32 %v6529, %v6532
  %vm6534 = vweird.f32 %v6528
  %vm6535 = vweird.f32 %v6529
  %vm6536 = vmor %vm6534, %vm6535
  %v6537 = vsel %vm6536, %v6529, %v6533
  %v6538 = vand.u32 2147483647, %v6528
  %vm6539 = vcmp.eq.f32.partialorder %v6538, 8.507059e+37
  %v6540 = vand.u32 %v6528, 2147483648
  %v6541 = vor.u32 1.1754944e-38, %v6540
  %v6542 = vsel %vm6539, %v6541, %v6537
  %v6543 = vmul.f32 %v6518, %v6542
  %v6544 = vmin.f32 %v6543, 1.0
  %v6545 = vmax.f32 %v6544, -1.0
  %v6546 = vadd.f32 %v6425, 1.0
  %v6547 = vadd.f32 %v6465, 1.0
  %v6548 = vadd.f32 %v6505, 1.0
  %v6549 = vadd.f32 %v6545, 1.0
  %v6550 = vmul.f32 %v6378, %v6546
  %v6551 = vmul.f32 %v6379, %v6547
  %v6552 = vmul.f32 %v6380, %v6548
  %v6553 = vmul.f32 %v6381, %v6549
  %v6554 = vpack.c.bf16 %v6551, %v6550
  %v6555 = vpack.c.bf16 %v6553, %v6552
  %v6557 = vperm.slane %v284, 0
  %v6575 = vunpack.c.l.b16 %v268
  %v6576 = vunpack.c.l.b16 %v269
  %v6577 = vunpack.c.l.b16 %v270
  %v6578 = vunpack.c.l.b16 %v271
  %v6579 = vunpack.c.l.b16 %v272
  %v6580 = vunpack.c.l.b16 %v273
  %v6581 = vunpack.c.l.b16 %v274
  %v6582 = vunpack.c.l.b16 %v275
  %v6583 = vunpack.c.l.b16 %v276
  %v6584 = vunpack.c.l.b16 %v277
  %v6585 = vunpack.c.l.b16 %v278
  %v6586 = vunpack.c.l.b16 %v279
  %v6587 = vunpack.c.l.b16 %v280
  %v6588 = vunpack.c.l.b16 %v281
  %v6589 = vunpack.c.l.b16 %v282
  %v6590 = vunpack.c.l.b16 %v283
  %v6591 = vpack.c.b16 %v6576, %v6575
  %v6592 = vpack.c.b16 %v6578, %v6577
  %v6593 = vpack.c.b16 %v6580, %v6579
  %v6594 = vpack.c.b16 %v6582, %v6581
  %v6595 = vpack.c.b16 %v6584, %v6583
  %v6596 = vpack.c.b16 %v6586, %v6585
  %v6597 = vpack.c.b16 %v6588, %v6587
  %v6598 = vpack.c.b16 %v6590, %v6589
  %6607 = vmatpush.bf16.msra.mxu0 %v6598
  %6608 = vmatpush.bf16.msra.mxu0 %v6597
  %6609 = vmatpush.bf16.msra.mxu0 %v6596
  %6610 = vmatpush.bf16.msra.mxu0 %v6595
  %6611 = vmatpush.bf16.msra.mxu0 %v6594
  %6612 = vmatpush.bf16.msra.mxu0 %v6593
  %6613 = vmatpush.bf16.msra.mxu0 %v6592
  %6614 = vmatpush.bf16.msra.mxu0 %v6591
  %6615 = vmatmul.bf16.gmra.mxu0 %v6554
  %v6616 = vpop.f32.mrf.mxu0
  %v6617 = vadd.f32 %v6557, %v6616
  %v6618 = vpop.f32.mrf.mxu0
  %v6619 = vadd.f32 %v6557, %v6618
  %6620 = vmatmul.bf16.gmra.mxu0 %v6555
  %v6621 = vpop.f32.mrf.mxu0
  %v6622 = vadd.f32 %v6557, %v6621
  %v6623 = vpop.f32.mrf.mxu0
  %v6624 = vadd.f32 %v6557, %v6623
  %6625 = vdwg.mxu0
  %v6626 = vadd.f32 %v6230, %v6617
  %v6627 = vadd.f32 %v6231, %v6619
  %v6628 = vadd.f32 %v6232, %v6622
  %v6629 = vadd.f32 %v6233, %v6624
  %vm6634 = vcmask 1040384
  %v6635 = vrot.slane %v6626, 7
  %v6636 = vrot.slane %v6627, 7
  %v6637 = vsel %vm6634, %v6635, %v6636
  %v6638 = vrot.slane %v6628, 7
  %v6639 = vrot.slane %v6629, 7
  %v6640 = vsel %vm6634, %v6638, %v6639
  %v6647 = vsel %vm6634, %v285, %v6635
  %v6648 = vsel %vm6634, %v294, %v6638
  %6649 = vst.msk [vmem:[%s61] sm:$0xff] %vm374, %v6647
  %6650 = vst.msk [vmem:[%s61 + $0x8] sm:$0xff] %vm374, %v6637
  %vm6651 = vcmask 253952
  %6652 = vst.msk [vmem:[%s61 + $0x10] sm:$0x1] %vm6651, %v6636
  %6653 = vst.msk [vmem:[%s61 + $0x18] sm:$0xff] %vm374, %v6648
  %6654 = vst.msk [vmem:[%s61 + $0x20] sm:$0xff] %vm374, %v6640
  %6655 = vst.msk [vmem:[%s61 + $0x28] sm:$0x1] %vm6651, %v6639
  // Predicated region
  $region122: #{compressor_forward.1} parent=0 // pred_check
    _
  $region123: #{compressor_forward.1} parent=0 // pred_check_branch
    %6657 = sbr.rel (0) target = $region125
  $region124: #{compressor_forward.1} parent=0 // pred_region
    _
  $region125: #{compressor_forward.1} parent=0 // pred_fallthru
    _
  // Predicated region
  $region126: #{compressor_forward.1} parent=0 // pred_check
    _
  $region127: #{compressor_forward.1} parent=0 // pred_check_branch
    %6659 = sbr.rel (0) target = $region129
  $region128: #{compressor_forward.1} parent=0 // pred_region
    _
  $region129: #{compressor_forward.1} parent=0 // pred_fallthru
    _

</llo_original>
